<compile_context>
chip_gen: v7x
topology: tpu7x:2x2x1
jax: 0.10.0
libtpu: 0.0.40
codegen_flags: <defaults>
</compile_context>

<pallas_src>
import functools

import jax
import jax.numpy as jnp
import numpy as np
from jax import lax
from jax.experimental import pallas as pl
from jax.experimental.pallas import tpu as pltpu

EPS = 1e-5


def _round_up(v, m):
    return ((v + m - 1) // m) * m


# ----------------------------------------------------------------------------
# Pallas kernel: fused DoubleConv (conv3x3 -> BN(eval, folded) -> ReLU) x 2
# ----------------------------------------------------------------------------
def _double_conv_kernel(x_ref, w1_ref, b1_ref, w2_ref, b2_ref, mask_ref,
                        o_ref, mid_ref, *, WPP, CIN, CMP, S_MID, S_FIN):
    # x_ref:    (CIN, S_IN)   bf16, channels-first, flat (row, col) of one image
    #                         zero-padded by 2 rows/cols (+ zero lane tail).
    # w1_ref:   (CMP, 9*CIN)  bf16, BN scale folded in, K = (dy*3+dx)*CIN + cin
    # w2_ref:   (CO, 9*CMP)   bf16, BN scale folded in, K = (dy*3+dx)*CMP + cm
    # b*_ref:   (C, 1)        f32 folded BN bias (lane-broadcast)
    # mask_ref: (1, S_MID)    bf16, 1 on interior image positions, 0 on the
    #                         halo ring and tail (acts as conv2's zero pad)
    # o_ref:    (CO, S_FIN)   f32 conv2 output on the same flat grid
    # mid_ref:  (CMP, S_MID)  bf16 VMEM scratch for the BN+ReLU'd intermediate

    # ---- conv1: 9 accumulated per-tap MXU matmuls (no materialized im2col).
    acc1 = None
    for t in range(9):
        dy, dx = divmod(t, 3)
        off = dy * WPP + dx
        d = jnp.dot(w1_ref[:, t * CIN:(t + 1) * CIN],
                    x_ref[:, off:off + S_MID],
                    preferred_element_type=jnp.float32)
        acc1 = d if acc1 is None else acc1 + d
    # Folded BN bias + ReLU; mask zeroes the halo ring / tail so it plays the
    # role of conv2's zero padding.  One aligned, lane-dense bf16 store.
    m = mask_ref[...].astype(jnp.float32)
    mid_ref[...] = (jnp.maximum(acc1 + b1_ref[...], 0.0) * m).astype(jnp.bfloat16)

    # ---- conv2: same per-tap accumulation on the bf16 intermediate.
    acc2 = None
    for t in range(9):
        dy, dx = divmod(t, 3)
        off = dy * WPP + dx
        d = jnp.dot(w2_ref[:, t * CMP:(t + 1) * CMP],
                    mid_ref[:, off:off + S_FIN],
                    preferred_element_type=jnp.float32)
        acc2 = d if acc2 is None else acc2 + d
    # Output kept f32 to match the PyTorch module's dtype (downstream layers
    # consuming bf16 could halve this store).
    o_ref[...] = jnp.maximum(acc2 + b2_ref[...], 0.0)


def _double_conv_pallas(xf, w1m, b1, w2m, b2, mask, *, wpp, s_mid, s_fin):
    N, CIN, S_IN = xf.shape
    CMP, K1 = w1m.shape
    CO, K2 = w2m.shape

    kernel = functools.partial(_double_conv_kernel, WPP=wpp, CIN=CIN, CMP=CMP,
                               S_MID=s_mid, S_FIN=s_fin)

    return pl.pallas_call(
        kernel,
        out_shape=jax.ShapeDtypeStruct((N, CO, s_fin), jnp.float32),
        # One grid step per image; weights/biases/mask keep a constant block
        # index so they are fetched once, while the per-image input / output
        # slabs are double-buffered by the BlockSpec pipeline.
        grid=(N,),
        in_specs=[
            pl.BlockSpec((None, CIN, S_IN), lambda n: (n, 0, 0)),
            pl.BlockSpec((CMP, K1), lambda n: (0, 0)),
            pl.BlockSpec((CMP, 1), lambda n: (0, 0)),
            pl.BlockSpec((CO, K2), lambda n: (0, 0)),
            pl.BlockSpec((CO, 1), lambda n: (0, 0)),
            pl.BlockSpec((1, s_mid), lambda n: (0, 0)),
        ],
        out_specs=pl.BlockSpec((None, CO, s_fin), lambda n: (n, 0, 0)),
        scratch_shapes=[pltpu.VMEM((CMP, s_mid), jnp.bfloat16)],
        compiler_params=pltpu.CompilerParams(
            dimension_semantics=("parallel",),        # shard batch over v7x TCs
            vmem_limit_bytes=48 * 1024 * 1024),
    )(xf, w1m, b1, w2m, b2, mask)


# ----------------------------------------------------------------------------
# Glue (plain JAX): bilinear x2 upsample (align_corners=True), pad, concat.
# ----------------------------------------------------------------------------
def _bilinear_matrix(n_in, n_out):
    """(n_out, n_in) interpolation matrix, PyTorch align_corners=True."""
    i = np.arange(n_out, dtype=np.float64)
    if n_out == 1 or n_in == 1:
        src = np.zeros_like(i)
    else:
        src = i * (n_in - 1) / (n_out - 1)
    lo = np.clip(np.floor(src).astype(np.int64), 0, max(n_in - 2, 0))
    frac = src - lo
    M = np.zeros((n_out, n_in), np.float32)
    M[np.arange(n_out), lo] += (1.0 - frac)
    M[np.arange(n_out), np.minimum(lo + 1, n_in - 1)] += frac
    return jnp.asarray(M)


def _upsample_pad_concat(x1, x2):
    # x1, x2: NCHW. Upsample x1 by 2 (bilinear, align_corners=True),
    # pad to x2's spatial size, concat [x2, x1] on channels.
    N, C1, H1, W1 = x1.shape
    Mh = _bilinear_matrix(H1, 2 * H1)
    Mw = _bilinear_matrix(W1, 2 * W1)
    x1u = jnp.einsum('oh,nchw->ncow', Mh, x1)
    x1u = jnp.einsum('pw,ncow->ncop', Mw, x1u)

    diffY = x2.shape[2] - x1u.shape[2]
    diffX = x2.shape[3] - x1u.shape[3]
    x1u = jnp.pad(x1u, ((0, 0), (0, 0),
                        (diffY // 2, diffY - diffY // 2),
                        (diffX // 2, diffX - diffX // 2)))
    return jnp.concatenate([x2, x1u], axis=1)


def up_forward_pallas(x1, x2, params):
    """Up.forward. x1, x2 in NCHW (like PyTorch); returns NCHW float32."""
    x = _upsample_pad_concat(x1, x2)                    # (N, CIN, H, W) f32
    N, CIN, H, W = x.shape
    Hpp, Wpp = H + 4, W + 4                             # pad-by-2 working grid
    S_img = Hpp * Wpp
    halo = 2 * Wpp + 2                                  # max 3x3 tap offset

    # Per-image flat-axis widths (multiples of 128 -> lane-dense blocks); each
    # stage keeps a `halo` tap-offset margin over the next one.
    s_fin = _round_up(S_img, 128)
    s_mid = _round_up(s_fin + halo, 128)
    s_in = _round_up(s_mid + halo, 128)

    # Channels-first, per-image flattened (row, col) spatial on the lane axis,
    # pre-cast to bf16 (the MXU consumes bf16 anyway).
    xp = jnp.pad(x, ((0, 0), (0, 0), (2, 2), (2, 2)))   # (N, CIN, Hpp, Wpp)
    xf = xp.reshape(N, CIN, S_img)
    xf = jnp.pad(xf, ((0, 0), (0, 0), (0, s_in - S_img))).astype(jnp.bfloat16)

    # Interior mask: 1 at rows/cols [1..H]x[1..W] of the Hpp x Wpp block,
    # 0 on the halo ring and the lane tail (bf16 to keep HBM traffic small).
    r = np.arange(Hpp)
    c = np.arange(Wpp)
    m2d = ((r[:, None] >= 1) & (r[:, None] <= H) &
           (c[None, :] >= 1) & (c[None, :] <= W)).astype(np.float32)
    mask_np = np.zeros((1, s_mid), np.float32)
    mask_np[0, :S_img] = m2d.reshape(-1)
    mask = jnp.asarray(mask_np, dtype=jnp.bfloat16)

    w1, w2 = params['w1'], params['w2']                 # OIHW f32
    CM, CO = w1.shape[0], w2.shape[0]
    CMP = _round_up(CM, 16)                             # bf16 sublane packing

    # Fold eval-mode BN scale into the conv weights (padded rows/cols -> 0);
    # only the bias add remains in the kernel.
    inv1 = params['g1'] / jnp.sqrt(params['v1'] + EPS)
    inv2 = params['g2'] / jnp.sqrt(params['v2'] + EPS)
    w1s = w1 * inv1[:, None, None, None]
    w2s = w2 * inv2[:, None, None, None]

    # conv1 weights -> (CMP, 9*CIN), K index = (dy*3+dx)*CIN + cin (bf16).
    w1p = jnp.pad(w1s, ((0, CMP - CM), (0, 0), (0, 0), (0, 0)))
    w1m = jnp.transpose(w1p, (0, 2, 3, 1)).reshape(CMP, 9 * CIN).astype(jnp.bfloat16)
    # conv2 weights -> (CO, 9*CMP), K index = (dy*3+dx)*CMP + cm (bf16).
    w2p = jnp.pad(w2s, ((0, 0), (0, CMP - CM), (0, 0), (0, 0)))
    w2m = jnp.transpose(w2p, (0, 2, 3, 1)).reshape(CO, 9 * CMP).astype(jnp.bfloat16)

    # Folded BN biases (f32, added after the f32 MXU accumulation).
    b1 = jnp.pad(params['b1'] - params['m1'] * inv1, (0, CMP - CM)).reshape(CMP, 1)
    b2 = (params['b2'] - params['m2'] * inv2).reshape(CO, 1)

    yf = _double_conv_pallas(xf, w1m, b1, w2m, b2, mask,
                             wpp=Wpp, s_mid=s_mid, s_fin=s_fin)  # (N, CO, s_fin)

    # conv2 output lives at the top-left H x W corner of each Hpp x Wpp block.
    y = yf[:, :, :S_img].reshape(N, CO, Hpp, Wpp)[:, :, :H, :W]
    return y                                            # (N, CO, H, W)


# ----------------------------------------------------------------------------
# Pure-JAX reference (for correctness check)
# ----------------------------------------------------------------------------
def _conv3x3_ref(x, w):
    return lax.conv_general_dilated(
        x, w, window_strides=(1, 1), padding='SAME',
        dimension_numbers=('NCHW', 'OIHW', 'NCHW'),
        precision=lax.Precision.HIGHEST)


def _bn_relu_ref(x, g, b, m, v):
    y = g[None, :, None, None] * (x - m[None, :, None, None]) \
        / jnp.sqrt(v[None, :, None, None] + EPS) + b[None, :, None, None]
    return jnp.maximum(y, 0.0)


def up_forward_ref(x1, x2, p):
    x = _upsample_pad_concat(x1, x2)
    y = _bn_relu_ref(_conv3x3_ref(x, p['w1']), p['g1'], p['b1'], p['m1'], p['v1'])
    y = _bn_relu_ref(_conv3x3_ref(y, p['w2']), p['g2'], p['b2'], p['m2'], p['v2'])
    return y


# ----------------------------------------------------------------------------
if __name__ == "__main__":
    # Up(in_channels=8, out_channels=4, bilinear=True)
    #   x1: (N, 4, 8, 8)  -> upsampled to (N, 4, 16, 16)
    #   x2: (N, 4, 16, 16)
    #   concat -> 8 channels = in_channels; mid = in_channels // 2 = 4
    IN_CH, OUT_CH = 8, 4
    MID_CH = IN_CH // 2
    N, H, W = 2, 16, 16

    key = jax.random.PRNGKey(0)
    ks = jax.random.split(key, 12)
    x1 = jax.random.normal(ks[0], (N, IN_CH // 2, H // 2, W // 2), jnp.float32)
    x2 = jax.random.normal(ks[1], (N, IN_CH // 2, H, W), jnp.float32)

    params = {
        'w1': 0.1 * jax.random.normal(ks[2], (MID_CH, IN_CH, 3, 3), jnp.float32),
        'g1': 1.0 + 0.1 * jax.random.normal(ks[3], (MID_CH,), jnp.float32),
        'b1': 0.1 * jax.random.normal(ks[4], (MID_CH,), jnp.float32),
        'm1': 0.1 * jax.random.normal(ks[5], (MID_CH,), jnp.float32),
        'v1': 1.0 + 0.5 * jax.random.uniform(ks[6], (MID_CH,), jnp.float32),
        'w2': 0.1 * jax.random.normal(ks[7], (OUT_CH, MID_CH, 3, 3), jnp.float32),
        'g2': 1.0 + 0.1 * jax.random.normal(ks[8], (OUT_CH,), jnp.float32),
        'b2': 0.1 * jax.random.normal(ks[9], (OUT_CH,), jnp.float32),
        'm2': 0.1 * jax.random.normal(ks[10], (OUT_CH,), jnp.float32),
        'v2': 1.0 + 0.5 * jax.random.uniform(ks[11], (OUT_CH,), jnp.float32),
    }

    out = jax.block_until_ready(up_forward_pallas(x1, x2, params))
    ref = jax.block_until_ready(up_forward_ref(x1, x2, params))

    assert out.shape == (N, OUT_CH, H, W), out.shape
    # bf16 MXU operands / bf16 intermediate (f32 accumulation) vs the f32
    # HIGHEST-precision reference: allow ~1e-2-scale deviation on O(1) outputs.
    max_err = float(jnp.max(jnp.abs(out - ref)))
    assert max_err < 3e-2, f"mismatch vs reference: max_err={max_err}"
    print("KERNEL_OK")
</pallas_src>

<mosaic_0001>
module attributes {stable_mosaic.version = 11 : i64} {
  func.func @_double_conv_kernel(%arg0: i32, %arg1: memref<1x8x768xbf16, #tpu.memory_space<vmem>>, %arg2: memref<16x72xbf16, #tpu.memory_space<vmem>>, %arg3: memref<16x1xf32, #tpu.memory_space<vmem>>, %arg4: memref<4x144xbf16, #tpu.memory_space<vmem>>, %arg5: memref<4x1xf32, #tpu.memory_space<vmem>>, %arg6: memref<1x640xbf16, #tpu.memory_space<vmem>>, %arg7: memref<1x4x512xf32, #tpu.memory_space<vmem>>, %arg8: memref<16x640xbf16, #tpu.memory_space<vmem>>) attributes {dimension_semantics = [#tpu.dimension_semantics<parallel>], iteration_bounds = array<i64: 2>, scalar_prefetch = 0 : i64, scratch_operands = 1 : i64, tpu.core_type = #tpu.core_type<tc>, window_params = [{transform_indices = @transform_0, window_bounds = array<i64: 1, 8, 768>}, {pipeline_mode = #tpu.pipeline_mode<synchronous>, transform_indices = @transform_1, window_bounds = array<i64: 16, 72>}, {pipeline_mode = #tpu.pipeline_mode<synchronous>, transform_indices = @transform_2, window_bounds = array<i64: 16, 1>}, {pipeline_mode = #tpu.pipeline_mode<synchronous>, transform_indices = @transform_3, window_bounds = array<i64: 4, 144>}, {pipeline_mode = #tpu.pipeline_mode<synchronous>, transform_indices = @transform_4, window_bounds = array<i64: 4, 1>}, {pipeline_mode = #tpu.pipeline_mode<synchronous>, transform_indices = @transform_5, window_bounds = array<i64: 1, 640>}, {transform_indices = @transform_6, window_bounds = array<i64: 1, 4, 512>}]} {
    %c0 = arith.constant 0 : index
    %c0_0 = arith.constant 0 : index
    %0 = vector.load %arg2[%c0, %c0_0] : memref<16x72xbf16, #tpu.memory_space<vmem>>, vector<16x8xbf16>
    %c0_1 = arith.constant 0 : index
    %c0_2 = arith.constant 0 : index
    %c0_3 = arith.constant 0 : index
    %1 = vector.load %arg1[%c0_1, %c0_2, %c0_3] : memref<1x8x768xbf16, #tpu.memory_space<vmem>>, vector<1x8x640xbf16>
    %2 = vector.shape_cast %1 : vector<1x8x640xbf16> to vector<8x640xbf16>
    %cst = arith.constant dense<0.000000e+00> : vector<16x640xf32>
    %3 = tpu.matmul %0, %2, %cst {dimension_numbers = #tpu.dot_dimension_numbers<[1], [0], [0], [1], [0, 0, 1, 1], [], []>} : vector<16x8xbf16>, vector<8x640xbf16>, vector<16x640xf32> -> vector<16x640xf32>
    %c0_4 = arith.constant 0 : index
    %c8 = arith.constant 8 : index
    %4 = vector.load %arg2[%c0_4, %c8] : memref<16x72xbf16, #tpu.memory_space<vmem>>, vector<16x8xbf16>
    %c0_5 = arith.constant 0 : index
    %c0_6 = arith.constant 0 : index
    %c1 = arith.constant 1 : index
    %5 = vector.load %arg1[%c0_5, %c0_6, %c1] : memref<1x8x768xbf16, #tpu.memory_space<vmem>>, vector<1x8x640xbf16>
    %6 = vector.shape_cast %5 : vector<1x8x640xbf16> to vector<8x640xbf16>
    %cst_7 = arith.constant dense<0.000000e+00> : vector<16x640xf32>
    %7 = tpu.matmul %4, %6, %cst_7 {dimension_numbers = #tpu.dot_dimension_numbers<[1], [0], [0], [1], [0, 0, 1, 1], [], []>} : vector<16x8xbf16>, vector<8x640xbf16>, vector<16x640xf32> -> vector<16x640xf32>
    %8 = arith.addf %3, %7 : vector<16x640xf32>
    %c0_8 = arith.constant 0 : index
    %c16 = arith.constant 16 : index
    %9 = vector.load %arg2[%c0_8, %c16] : memref<16x72xbf16, #tpu.memory_space<vmem>>, vector<16x8xbf16>
    %c0_9 = arith.constant 0 : index
    %c0_10 = arith.constant 0 : index
    %c2 = arith.constant 2 : index
    %10 = vector.load %arg1[%c0_9, %c0_10, %c2] : memref<1x8x768xbf16, #tpu.memory_space<vmem>>, vector<1x8x640xbf16>
    %11 = vector.shape_cast %10 : vector<1x8x640xbf16> to vector<8x640xbf16>
    %cst_11 = arith.constant dense<0.000000e+00> : vector<16x640xf32>
    %12 = tpu.matmul %9, %11, %cst_11 {dimension_numbers = #tpu.dot_dimension_numbers<[1], [0], [0], [1], [0, 0, 1, 1], [], []>} : vector<16x8xbf16>, vector<8x640xbf16>, vector<16x640xf32> -> vector<16x640xf32>
    %13 = arith.addf %8, %12 : vector<16x640xf32>
    %c0_12 = arith.constant 0 : index
    %c24 = arith.constant 24 : index
    %14 = vector.load %arg2[%c0_12, %c24] : memref<16x72xbf16, #tpu.memory_space<vmem>>, vector<16x8xbf16>
    %c0_13 = arith.constant 0 : index
    %c0_14 = arith.constant 0 : index
    %c20 = arith.constant 20 : index
    %15 = vector.load %arg1[%c0_13, %c0_14, %c20] : memref<1x8x768xbf16, #tpu.memory_space<vmem>>, vector<1x8x640xbf16>
    %16 = vector.shape_cast %15 : vector<1x8x640xbf16> to vector<8x640xbf16>
    %cst_15 = arith.constant dense<0.000000e+00> : vector<16x640xf32>
    %17 = tpu.matmul %14, %16, %cst_15 {dimension_numbers = #tpu.dot_dimension_numbers<[1], [0], [0], [1], [0, 0, 1, 1], [], []>} : vector<16x8xbf16>, vector<8x640xbf16>, vector<16x640xf32> -> vector<16x640xf32>
    %18 = arith.addf %13, %17 : vector<16x640xf32>
    %c0_16 = arith.constant 0 : index
    %c32 = arith.constant 32 : index
    %19 = vector.load %arg2[%c0_16, %c32] : memref<16x72xbf16, #tpu.memory_space<vmem>>, vector<16x8xbf16>
    %c0_17 = arith.constant 0 : index
    %c0_18 = arith.constant 0 : index
    %c21 = arith.constant 21 : index
    %20 = vector.load %arg1[%c0_17, %c0_18, %c21] : memref<1x8x768xbf16, #tpu.memory_space<vmem>>, vector<1x8x640xbf16>
    %21 = vector.shape_cast %20 : vector<1x8x640xbf16> to vector<8x640xbf16>
    %cst_19 = arith.constant dense<0.000000e+00> : vector<16x640xf32>
    %22 = tpu.matmul %19, %21, %cst_19 {dimension_numbers = #tpu.dot_dimension_numbers<[1], [0], [0], [1], [0, 0, 1, 1], [], []>} : vector<16x8xbf16>, vector<8x640xbf16>, vector<16x640xf32> -> vector<16x640xf32>
    %23 = arith.addf %18, %22 : vector<16x640xf32>
    %c0_20 = arith.constant 0 : index
    %c40 = arith.constant 40 : index
    %24 = vector.load %arg2[%c0_20, %c40] : memref<16x72xbf16, #tpu.memory_space<vmem>>, vector<16x8xbf16>
    %c0_21 = arith.constant 0 : index
    %c0_22 = arith.constant 0 : index
    %c22 = arith.constant 22 : index
    %25 = vector.load %arg1[%c0_21, %c0_22, %c22] : memref<1x8x768xbf16, #tpu.memory_space<vmem>>, vector<1x8x640xbf16>
    %26 = vector.shape_cast %25 : vector<1x8x640xbf16> to vector<8x640xbf16>
    %cst_23 = arith.constant dense<0.000000e+00> : vector<16x640xf32>
    %27 = tpu.matmul %24, %26, %cst_23 {dimension_numbers = #tpu.dot_dimension_numbers<[1], [0], [0], [1], [0, 0, 1, 1], [], []>} : vector<16x8xbf16>, vector<8x640xbf16>, vector<16x640xf32> -> vector<16x640xf32>
    %28 = arith.addf %23, %27 : vector<16x640xf32>
    %c0_24 = arith.constant 0 : index
    %c48 = arith.constant 48 : index
    %29 = vector.load %arg2[%c0_24, %c48] : memref<16x72xbf16, #tpu.memory_space<vmem>>, vector<16x8xbf16>
    %c0_25 = arith.constant 0 : index
    %c0_26 = arith.constant 0 : index
    %c40_27 = arith.constant 40 : index
    %30 = vector.load %arg1[%c0_25, %c0_26, %c40_27] : memref<1x8x768xbf16, #tpu.memory_space<vmem>>, vector<1x8x640xbf16>
    %31 = vector.shape_cast %30 : vector<1x8x640xbf16> to vector<8x640xbf16>
    %cst_28 = arith.constant dense<0.000000e+00> : vector<16x640xf32>
    %32 = tpu.matmul %29, %31, %cst_28 {dimension_numbers = #tpu.dot_dimension_numbers<[1], [0], [0], [1], [0, 0, 1, 1], [], []>} : vector<16x8xbf16>, vector<8x640xbf16>, vector<16x640xf32> -> vector<16x640xf32>
    %33 = arith.addf %28, %32 : vector<16x640xf32>
    %c0_29 = arith.constant 0 : index
    %c56 = arith.constant 56 : index
    %34 = vector.load %arg2[%c0_29, %c56] : memref<16x72xbf16, #tpu.memory_space<vmem>>, vector<16x8xbf16>
    %c0_30 = arith.constant 0 : index
    %c0_31 = arith.constant 0 : index
    %c41 = arith.constant 41 : index
    %35 = vector.load %arg1[%c0_30, %c0_31, %c41] : memref<1x8x768xbf16, #tpu.memory_space<vmem>>, vector<1x8x640xbf16>
    %36 = vector.shape_cast %35 : vector<1x8x640xbf16> to vector<8x640xbf16>
    %cst_32 = arith.constant dense<0.000000e+00> : vector<16x640xf32>
    %37 = tpu.matmul %34, %36, %cst_32 {dimension_numbers = #tpu.dot_dimension_numbers<[1], [0], [0], [1], [0, 0, 1, 1], [], []>} : vector<16x8xbf16>, vector<8x640xbf16>, vector<16x640xf32> -> vector<16x640xf32>
    %38 = arith.addf %33, %37 : vector<16x640xf32>
    %c0_33 = arith.constant 0 : index
    %c64 = arith.constant 64 : index
    %39 = vector.load %arg2[%c0_33, %c64] : memref<16x72xbf16, #tpu.memory_space<vmem>>, vector<16x8xbf16>
    %c0_34 = arith.constant 0 : index
    %c0_35 = arith.constant 0 : index
    %c42 = arith.constant 42 : index
    %40 = vector.load %arg1[%c0_34, %c0_35, %c42] : memref<1x8x768xbf16, #tpu.memory_space<vmem>>, vector<1x8x640xbf16>
    %41 = vector.shape_cast %40 : vector<1x8x640xbf16> to vector<8x640xbf16>
    %cst_36 = arith.constant dense<0.000000e+00> : vector<16x640xf32>
    %42 = tpu.matmul %39, %41, %cst_36 {dimension_numbers = #tpu.dot_dimension_numbers<[1], [0], [0], [1], [0, 0, 1, 1], [], []>} : vector<16x8xbf16>, vector<8x640xbf16>, vector<16x640xf32> -> vector<16x640xf32>
    %43 = arith.addf %38, %42 : vector<16x640xf32>
    %c0_37 = arith.constant 0 : index
    %c0_38 = arith.constant 0 : index
    %44 = vector.load %arg6[%c0_37, %c0_38] : memref<1x640xbf16, #tpu.memory_space<vmem>>, vector<1x640xbf16>
    %45 = arith.extf %44 : vector<1x640xbf16> to vector<1x640xf32>
    %c0_39 = arith.constant 0 : index
    %c0_40 = arith.constant 0 : index
    %46 = vector.load %arg3[%c0_39, %c0_40] : memref<16x1xf32, #tpu.memory_space<vmem>>, vector<16x1xf32>
    %47 = vector.broadcast %46 : vector<16x1xf32> to vector<16x640xf32>
    %48 = arith.addf %43, %47 : vector<16x640xf32>
    %cst_41 = arith.constant 0.000000e+00 : f32
    %49 = vector.broadcast %cst_41 : f32 to vector<16x640xf32>
    %50 = arith.maximumf %48, %49 : vector<16x640xf32>
    %51 = vector.broadcast %45 : vector<1x640xf32> to vector<16x640xf32>
    %52 = arith.mulf %50, %51 : vector<16x640xf32>
    %53 = arith.truncf %52 : vector<16x640xf32> to vector<16x640xbf16>
    %c0_42 = arith.constant 0 : index
    %c0_43 = arith.constant 0 : index
    %54 = vector.load %arg8[%c0_42, %c0_43] : memref<16x640xbf16, #tpu.memory_space<vmem>>, vector<16x640xbf16>
    tpu.vector_store %arg8[%c0_42, %c0_43], %53 {strides = array<i32>} : memref<16x640xbf16, #tpu.memory_space<vmem>>, vector<16x640xbf16>,
    %c0_44 = arith.constant 0 : index
    %c0_45 = arith.constant 0 : index
    %55 = vector.load %arg4[%c0_44, %c0_45] : memref<4x144xbf16, #tpu.memory_space<vmem>>, vector<4x16xbf16>
    %c0_46 = arith.constant 0 : index
    %c0_47 = arith.constant 0 : index
    %56 = vector.load %arg8[%c0_46, %c0_47] : memref<16x640xbf16, #tpu.memory_space<vmem>>, vector<16x512xbf16>
    %cst_48 = arith.constant dense<0.000000e+00> : vector<4x512xf32>
    %57 = tpu.matmul %55, %56, %cst_48 {dimension_numbers = #tpu.dot_dimension_numbers<[1], [0], [0], [1], [0, 0, 1, 1], [], []>} : vector<4x16xbf16>, vector<16x512xbf16>, vector<4x512xf32> -> vector<4x512xf32>
    %c0_49 = arith.constant 0 : index
    %c16_50 = arith.constant 16 : index
    %58 = vector.load %arg4[%c0_49, %c16_50] : memref<4x144xbf16, #tpu.memory_space<vmem>>, vector<4x16xbf16>
    %c0_51 = arith.constant 0 : index
    %c1_52 = arith.constant 1 : index
    %59 = vector.load %arg8[%c0_51, %c1_52] : memref<16x640xbf16, #tpu.memory_space<vmem>>, vector<16x512xbf16>
    %cst_53 = arith.constant dense<0.000000e+00> : vector<4x512xf32>
    %60 = tpu.matmul %58, %59, %cst_53 {dimension_numbers = #tpu.dot_dimension_numbers<[1], [0], [0], [1], [0, 0, 1, 1], [], []>} : vector<4x16xbf16>, vector<16x512xbf16>, vector<4x512xf32> -> vector<4x512xf32>
    %61 = arith.addf %57, %60 : vector<4x512xf32>
    %c0_54 = arith.constant 0 : index
    %c32_55 = arith.constant 32 : index
    %62 = vector.load %arg4[%c0_54, %c32_55] : memref<4x144xbf16, #tpu.memory_space<vmem>>, vector<4x16xbf16>
    %c0_56 = arith.constant 0 : index
    %c2_57 = arith.constant 2 : index
    %63 = vector.load %arg8[%c0_56, %c2_57] : memref<16x640xbf16, #tpu.memory_space<vmem>>, vector<16x512xbf16>
    %cst_58 = arith.constant dense<0.000000e+00> : vector<4x512xf32>
    %64 = tpu.matmul %62, %63, %cst_58 {dimension_numbers = #tpu.dot_dimension_numbers<[1], [0], [0], [1], [0, 0, 1, 1], [], []>} : vector<4x16xbf16>, vector<16x512xbf16>, vector<4x512xf32> -> vector<4x512xf32>
    %65 = arith.addf %61, %64 : vector<4x512xf32>
    %c0_59 = arith.constant 0 : index
    %c48_60 = arith.constant 48 : index
    %66 = vector.load %arg4[%c0_59, %c48_60] : memref<4x144xbf16, #tpu.memory_space<vmem>>, vector<4x16xbf16>
    %c0_61 = arith.constant 0 : index
    %c20_62 = arith.constant 20 : index
    %67 = vector.load %arg8[%c0_61, %c20_62] : memref<16x640xbf16, #tpu.memory_space<vmem>>, vector<16x512xbf16>
    %cst_63 = arith.constant dense<0.000000e+00> : vector<4x512xf32>
    %68 = tpu.matmul %66, %67, %cst_63 {dimension_numbers = #tpu.dot_dimension_numbers<[1], [0], [0], [1], [0, 0, 1, 1], [], []>} : vector<4x16xbf16>, vector<16x512xbf16>, vector<4x512xf32> -> vector<4x512xf32>
    %69 = arith.addf %65, %68 : vector<4x512xf32>
    %c0_64 = arith.constant 0 : index
    %c64_65 = arith.constant 64 : index
    %70 = vector.load %arg4[%c0_64, %c64_65] : memref<4x144xbf16, #tpu.memory_space<vmem>>, vector<4x16xbf16>
    %c0_66 = arith.constant 0 : index
    %c21_67 = arith.constant 21 : index
    %71 = vector.load %arg8[%c0_66, %c21_67] : memref<16x640xbf16, #tpu.memory_space<vmem>>, vector<16x512xbf16>
    %cst_68 = arith.constant dense<0.000000e+00> : vector<4x512xf32>
    %72 = tpu.matmul %70, %71, %cst_68 {dimension_numbers = #tpu.dot_dimension_numbers<[1], [0], [0], [1], [0, 0, 1, 1], [], []>} : vector<4x16xbf16>, vector<16x512xbf16>, vector<4x512xf32> -> vector<4x512xf32>
    %73 = arith.addf %69, %72 : vector<4x512xf32>
    %c0_69 = arith.constant 0 : index
    %c80 = arith.constant 80 : index
    %74 = vector.load %arg4[%c0_69, %c80] : memref<4x144xbf16, #tpu.memory_space<vmem>>, vector<4x16xbf16>
    %c0_70 = arith.constant 0 : index
    %c22_71 = arith.constant 22 : index
    %75 = vector.load %arg8[%c0_70, %c22_71] : memref<16x640xbf16, #tpu.memory_space<vmem>>, vector<16x512xbf16>
    %cst_72 = arith.constant dense<0.000000e+00> : vector<4x512xf32>
    %76 = tpu.matmul %74, %75, %cst_72 {dimension_numbers = #tpu.dot_dimension_numbers<[1], [0], [0], [1], [0, 0, 1, 1], [], []>} : vector<4x16xbf16>, vector<16x512xbf16>, vector<4x512xf32> -> vector<4x512xf32>
    %77 = arith.addf %73, %76 : vector<4x512xf32>
    %c0_73 = arith.constant 0 : index
    %c96 = arith.constant 96 : index
    %78 = vector.load %arg4[%c0_73, %c96] : memref<4x144xbf16, #tpu.memory_space<vmem>>, vector<4x16xbf16>
    %c0_74 = arith.constant 0 : index
    %c40_75 = arith.constant 40 : index
    %79 = vector.load %arg8[%c0_74, %c40_75] : memref<16x640xbf16, #tpu.memory_space<vmem>>, vector<16x512xbf16>
    %cst_76 = arith.constant dense<0.000000e+00> : vector<4x512xf32>
    %80 = tpu.matmul %78, %79, %cst_76 {dimension_numbers = #tpu.dot_dimension_numbers<[1], [0], [0], [1], [0, 0, 1, 1], [], []>} : vector<4x16xbf16>, vector<16x512xbf16>, vector<4x512xf32> -> vector<4x512xf32>
    %81 = arith.addf %77, %80 : vector<4x512xf32>
    %c0_77 = arith.constant 0 : index
    %c112 = arith.constant 112 : index
    %82 = vector.load %arg4[%c0_77, %c112] : memref<4x144xbf16, #tpu.memory_space<vmem>>, vector<4x16xbf16>
    %c0_78 = arith.constant 0 : index
    %c41_79 = arith.constant 41 : index
    %83 = vector.load %arg8[%c0_78, %c41_79] : memref<16x640xbf16, #tpu.memory_space<vmem>>, vector<16x512xbf16>
    %cst_80 = arith.constant dense<0.000000e+00> : vector<4x512xf32>
    %84 = tpu.matmul %82, %83, %cst_80 {dimension_numbers = #tpu.dot_dimension_numbers<[1], [0], [0], [1], [0, 0, 1, 1], [], []>} : vector<4x16xbf16>, vector<16x512xbf16>, vector<4x512xf32> -> vector<4x512xf32>
    %85 = arith.addf %81, %84 : vector<4x512xf32>
    %c0_81 = arith.constant 0 : index
    %c128 = arith.constant 128 : index
    %86 = vector.load %arg4[%c0_81, %c128] : memref<4x144xbf16, #tpu.memory_space<vmem>>, vector<4x16xbf16>
    %c0_82 = arith.constant 0 : index
    %c42_83 = arith.constant 42 : index
    %87 = vector.load %arg8[%c0_82, %c42_83] : memref<16x640xbf16, #tpu.memory_space<vmem>>, vector<16x512xbf16>
    %cst_84 = arith.constant dense<0.000000e+00> : vector<4x512xf32>
    %88 = tpu.matmul %86, %87, %cst_84 {dimension_numbers = #tpu.dot_dimension_numbers<[1], [0], [0], [1], [0, 0, 1, 1], [], []>} : vector<4x16xbf16>, vector<16x512xbf16>, vector<4x512xf32> -> vector<4x512xf32>
    %89 = arith.addf %85, %88 : vector<4x512xf32>
    %c0_85 = arith.constant 0 : index
    %c0_86 = arith.constant 0 : index
    %90 = vector.load %arg5[%c0_85, %c0_86] : memref<4x1xf32, #tpu.memory_space<vmem>>, vector<4x1xf32>
    %91 = vector.broadcast %90 : vector<4x1xf32> to vector<4x512xf32>
    %92 = arith.addf %89, %91 : vector<4x512xf32>
    %cst_87 = arith.constant 0.000000e+00 : f32
    %93 = vector.broadcast %cst_87 : f32 to vector<4x512xf32>
    %94 = arith.maximumf %92, %93 : vector<4x512xf32>
    %c0_88 = arith.constant 0 : index
    %c0_89 = arith.constant 0 : index
    %c0_90 = arith.constant 0 : index
    %95 = vector.load %arg7[%c0_88, %c0_89, %c0_90] : memref<1x4x512xf32, #tpu.memory_space<vmem>>, vector<1x4x512xf32>
    %96 = vector.shape_cast %95 : vector<1x4x512xf32> to vector<4x512xf32>
    %97 = vector.shape_cast %94 : vector<4x512xf32> to vector<1x4x512xf32>
    tpu.vector_store %arg7[%c0_88, %c0_89, %c0_90], %97 {strides = array<i32>} : memref<1x4x512xf32, #tpu.memory_space<vmem>>, vector<1x4x512xf32>,
    return
  }
  func.func @transform_0(%arg0: i32) -> (i32, i32, i32) {
    %c0_i32 = arith.constant 0 : i32
    %c0_i32_0 = arith.constant 0 : i32
    %c0_i32_1 = arith.constant 0 : i32
    return %arg0, %c0_i32, %c0_i32_0 : i32, i32, i32
  }
  func.func @transform_1(%arg0: i32) -> (i32, i32) {
    %c0_i32 = arith.constant 0 : i32
    %c0_i32_0 = arith.constant 0 : i32
    %c0_i32_1 = arith.constant 0 : i32
    return %c0_i32, %c0_i32_0 : i32, i32
  }
  func.func @transform_2(%arg0: i32) -> (i32, i32) {
    %c0_i32 = arith.constant 0 : i32
    %c0_i32_0 = arith.constant 0 : i32
    %c0_i32_1 = arith.constant 0 : i32
    return %c0_i32, %c0_i32_0 : i32, i32
  }
  func.func @transform_3(%arg0: i32) -> (i32, i32) {
    %c0_i32 = arith.constant 0 : i32
    %c0_i32_0 = arith.constant 0 : i32
    %c0_i32_1 = arith.constant 0 : i32
    return %c0_i32, %c0_i32_0 : i32, i32
  }
  func.func @transform_4(%arg0: i32) -> (i32, i32) {
    %c0_i32 = arith.constant 0 : i32
    %c0_i32_0 = arith.constant 0 : i32
    %c0_i32_1 = arith.constant 0 : i32
    return %c0_i32, %c0_i32_0 : i32, i32
  }
  func.func @transform_5(%arg0: i32) -> (i32, i32) {
    %c0_i32 = arith.constant 0 : i32
    %c0_i32_0 = arith.constant 0 : i32
    %c0_i32_1 = arith.constant 0 : i32
    return %c0_i32, %c0_i32_0 : i32, i32
  }
  func.func @transform_6(%arg0: i32) -> (i32, i32, i32) {
    %c0_i32 = arith.constant 0 : i32
    %c0_i32_0 = arith.constant 0 : i32
    %c0_i32_1 = arith.constant 0 : i32
    return %arg0, %c0_i32, %c0_i32_0 : i32, i32, i32
  }
}

</mosaic_0001>

<llo_original>
// kernel: tpu_custom_call.1
$region0: #{tpu_custom_call.1}
  #allocation0 [shape = 'u32[]', space=smem, size = 0x4, offset = 0x4, fixed_abs, tag = 'smem constant byte address 0x4 - core index']
  #allocation1 [shape = 'u32[144,128]{1,0:T(1,128)}', space=vmem, size = 0x12000, scoped, tag = 'internal scratch']
  #allocation2 [shape = 'bf16[16,640]{1,0:T(16,128)(2,1)}', space=vmem, size = 0x5000, scoped, tag = 'scratch operand']
  %s0 = inlined_call_operand.hbm [shape: bf16[2,8,768], index: 0, kind: input, shape index: {}]
  %s1 = inlined_call_operand.vmem [shape: bf16[16,72], index: 1, kind: input, shape index: {}]
  %s2 = inlined_call_operand.vmem [shape: f32[16,1], index: 2, kind: input, shape index: {}]
  %s3 = inlined_call_operand.vmem [shape: bf16[4,144], index: 3, kind: input, shape index: {}]
  %s4 = inlined_call_operand.vmem [shape: f32[4,1], index: 4, kind: input, shape index: {}]
  %s5 = inlined_call_operand.vmem [shape: bf16[1,640], index: 5, kind: input, shape index: {}]
  %s6 = inlined_call_operand.hbm [shape: f32[2,4,512], index: 6, kind: output, shape index: {}]
  %s7 = sld [smem:[#allocation0]]
  $region61: #{tpu_custom_call.1} parent=0
    _
  %s9 = ssub.s32 1, %s7
  %s10 = scalar_select 0, %s9, %s7
  $region1: #{tpu_custom_call.1} parent=0
    #allocation3 [shape = 'u8[24576]{0}', space=vmem, size = 0x6000, scoped, tag = 'input window, operand 0']
    #allocation4 [shape = 's32[2]{0}', space=sflag, size = 0x8, scoped, tag = 'scoped memory for tpu_custom_call.1']
    #allocation5 [shape = 's32[2]{0}', space=sflag, size = 0x8, scoped, tag = 'scoped memory for tpu_custom_call.1']
    #allocation6 [shape = 'u8[16384]{0}', space=vmem, size = 0x4000, scoped, tag = 'output window, operand 0']
    %11 = vsyncpa [#allocation4], 0
    %s12 = scalar_lea.sflag [#allocation4], 1
    %13 = vsyncpa %s12, 0
    %14 = vsyncpa [#allocation5], 0
    %s15 = scalar_lea.sflag [#allocation5], 1
    %16 = vsyncpa %s15, 0
    loop: start=0, step=1, limit=4
    $region2: #{tpu_custom_call.1} parent=1 // loop_pre_header
      _
    $region3: #{tpu_custom_call.1} parent=1 // loop_header
      %s18 = sphi 0, %s22
      %p19 = scmp.ge.s32.totalorder %s18, 4
      %s28 = sphi 0, %s30
      %s31 = sphi 0, %s28
      %s32 = sphi 0, %s31
      %s48 = sphi 0, %s32
      %s52 = sphi 0, %s52
      %s54 = sphi 0, %s52
      %s55 = sphi 0, %s54
      %s69 = sphi 0, %s55
      %s73 = sphi 0, %s73
      %s75 = sphi 0, %s73
      %s76 = sphi 0, %s75
      %s90 = sphi 0, %s76
      %s94 = sphi 0, %s94
      %s96 = sphi 0, %s94
      %s97 = sphi 0, %s96
      %s111 = sphi 0, %s97
      %s115 = sphi 0, %s115
      %s117 = sphi 0, %s115
      %s118 = sphi 0, %s117
      %s132 = sphi 0, %s118
      %s136 = sphi 0, %s136
      %s138 = sphi 0, %s136
      %s139 = sphi 0, %s138
      %s153 = sphi 0, %s139
      %s159 = sphi 0, %s161
      %s162 = sphi 0, %s159
      %s163 = sphi 0, %s162
      %s179 = sphi 0, %s163
    $region4: #{tpu_custom_call.1} parent=1 // loop_header_branch
      %21 = sbr.rel (%p19) target = $region8
    $region5: #{tpu_custom_call.1} parent=1 // loop_body
      %s23 = ssub.s32 %s18, 1
      %s24 = ssub.s32 %s18, 2
      %s25 = sadd.s32 %s18, 1
      %s26 = ssub.s32 %s18, %s25
      %p27 = scmp.eq.s32.totalorder %s26, 0
      %s29 = sadd.s32 %s28, 1
      %s30 = scalar_select %p27, %s28, %s29
      %p33 = pneg %p27
      %p34 = scmp.eq.s32.totalorder %s18, 1
      %p35 = por %p33, %p34
      %p36 = scmp.ne.s32.totalorder %s28, %s31
      %p37 = scmp.eq.s32.totalorder %s18, 0
      %p38 = por %p36, %p37
      %p39 = scmp.ne.s32.totalorder %s28, %s31
      %p40 = scmp.eq.s32.totalorder %s23, 1
      %p41 = por %p39, %p40
      %p42 = scmp.ne.s32.totalorder %s31, %s32
      %p43 = scmp.eq.s32.totalorder %s23, 0
      %p44 = por %p42, %p43
      %p45 = scmp.ne.s32.totalorder %s31, %s32
      %p46 = scmp.eq.s32.totalorder %s24, 1
      %p47 = por %p45, %p46
      %p49 = scmp.ne.s32.totalorder %s32, %s48
      %p50 = scmp.eq.s32.totalorder %s24, 0
      %p51 = por %p49, %p50
      %s53 = sadd.s32 %s52, 1
      %p56 = scmp.eq.s32.totalorder %s18, 1
      %p57 = scmp.ne.s32.totalorder %s52, %s54
      %p58 = scmp.eq.s32.totalorder %s18, 0
      %p59 = por %p57, %p58
      %p60 = scmp.ne.s32.totalorder %s52, %s54
      %p61 = scmp.eq.s32.totalorder %s23, 1
      %p62 = por %p60, %p61
      %p63 = scmp.ne.s32.totalorder %s54, %s55
      %p64 = scmp.eq.s32.totalorder %s23, 0
      %p65 = por %p63, %p64
      %p66 = scmp.ne.s32.totalorder %s54, %s55
      %p67 = scmp.eq.s32.totalorder %s24, 1
      %p68 = por %p66, %p67
      %p70 = scmp.ne.s32.totalorder %s55, %s69
      %p71 = scmp.eq.s32.totalorder %s24, 0
      %p72 = por %p70, %p71
      %s74 = sadd.s32 %s73, 1
      %p77 = scmp.eq.s32.totalorder %s18, 1
      %p78 = scmp.ne.s32.totalorder %s73, %s75
      %p79 = scmp.eq.s32.totalorder %s18, 0
      %p80 = por %p78, %p79
      %p81 = scmp.ne.s32.totalorder %s73, %s75
      %p82 = scmp.eq.s32.totalorder %s23, 1
      %p83 = por %p81, %p82
      %p84 = scmp.ne.s32.totalorder %s75, %s76
      %p85 = scmp.eq.s32.totalorder %s23, 0
      %p86 = por %p84, %p85
      %p87 = scmp.ne.s32.totalorder %s75, %s76
      %p88 = scmp.eq.s32.totalorder %s24, 1
      %p89 = por %p87, %p88
      %p91 = scmp.ne.s32.totalorder %s76, %s90
      %p92 = scmp.eq.s32.totalorder %s24, 0
      %p93 = por %p91, %p92
      %s95 = sadd.s32 %s94, 1
      %p98 = scmp.eq.s32.totalorder %s18, 1
      %p99 = scmp.ne.s32.totalorder %s94, %s96
      %p100 = scmp.eq.s32.totalorder %s18, 0
      %p101 = por %p99, %p100
      %p102 = scmp.ne.s32.totalorder %s94, %s96
      %p103 = scmp.eq.s32.totalorder %s23, 1
      %p104 = por %p102, %p103
      %p105 = scmp.ne.s32.totalorder %s96, %s97
      %p106 = scmp.eq.s32.totalorder %s23, 0
      %p107 = por %p105, %p106
      %p108 = scmp.ne.s32.totalorder %s96, %s97
      %p109 = scmp.eq.s32.totalorder %s24, 1
      %p110 = por %p108, %p109
      %p112 = scmp.ne.s32.totalorder %s97, %s111
      %p113 = scmp.eq.s32.totalorder %s24, 0
      %p114 = por %p112, %p113
      %s116 = sadd.s32 %s115, 1
      %p119 = scmp.eq.s32.totalorder %s18, 1
      %p120 = scmp.ne.s32.totalorder %s115, %s117
      %p121 = scmp.eq.s32.totalorder %s18, 0
      %p122 = por %p120, %p121
      %p123 = scmp.ne.s32.totalorder %s115, %s117
      %p124 = scmp.eq.s32.totalorder %s23, 1
      %p125 = por %p123, %p124
      %p126 = scmp.ne.s32.totalorder %s117, %s118
      %p127 = scmp.eq.s32.totalorder %s23, 0
      %p128 = por %p126, %p127
      %p129 = scmp.ne.s32.totalorder %s117, %s118
      %p130 = scmp.eq.s32.totalorder %s24, 1
      %p131 = por %p129, %p130
      %p133 = scmp.ne.s32.totalorder %s118, %s132
      %p134 = scmp.eq.s32.totalorder %s24, 0
      %p135 = por %p133, %p134
      %s137 = sadd.s32 %s136, 1
      %p140 = scmp.eq.s32.totalorder %s18, 1
      %p141 = scmp.ne.s32.totalorder %s136, %s138
      %p142 = scmp.eq.s32.totalorder %s18, 0
      %p143 = por %p141, %p142
      %p144 = scmp.ne.s32.totalorder %s136, %s138
      %p145 = scmp.eq.s32.totalorder %s23, 1
      %p146 = por %p144, %p145
      %p147 = scmp.ne.s32.totalorder %s138, %s139
      %p148 = scmp.eq.s32.totalorder %s23, 0
      %p149 = por %p147, %p148
      %p150 = scmp.ne.s32.totalorder %s138, %s139
      %p151 = scmp.eq.s32.totalorder %s24, 1
      %p152 = por %p150, %p151
      %p154 = scmp.ne.s32.totalorder %s139, %s153
      %p155 = scmp.eq.s32.totalorder %s24, 0
      %p156 = por %p154, %p155
      %s157 = ssub.s32 %s18, %s25
      %p158 = scmp.eq.s32.totalorder %s157, 0
      %s160 = sadd.s32 %s159, 1
      %s161 = scalar_select %p158, %s159, %s160
      %p164 = pneg %p158
      %p165 = scmp.eq.s32.totalorder %s18, 1
      %p166 = por %p164, %p165
      %p167 = scmp.ne.s32.totalorder %s159, %s162
      %p168 = scmp.eq.s32.totalorder %s18, 0
      %p169 = por %p167, %p168
      %p170 = scmp.ne.s32.totalorder %s159, %s162
      %p171 = scmp.eq.s32.totalorder %s23, 1
      %p172 = por %p170, %p171
      %p173 = scmp.ne.s32.totalorder %s162, %s163
      %p174 = scmp.eq.s32.totalorder %s23, 0
      %p175 = por %p173, %p174
      %p176 = scmp.ne.s32.totalorder %s162, %s163
      %p177 = scmp.eq.s32.totalorder %s24, 1
      %p178 = por %p176, %p177
      %p180 = scmp.ne.s32.totalorder %s163, %s179
      %p181 = scmp.eq.s32.totalorder %s24, 0
      %p182 = por %p180, %p181
      %p183 = scmp.le.s32.totalorder 1, %s18
      %p184 = scmp.lt.s32.totalorder %s18, 3
      %p185 = pnand %p183, %p184
      %p186 = pneg %p185
      // Predicated region
      $region9: #{tpu_custom_call.1} parent=5 // pred_check
        _
      $region10: #{tpu_custom_call.1} parent=5 // pred_check_branch
        %188 = sbr.rel (%p185) target = $region12
      $region11: #{tpu_custom_call.1} parent=5 // pred_region
        %s189 = ssub.s32 %s18, 1
        // Predicated region
        $region13: #{tpu_custom_call.1} parent=11 // pred_check
          %p190 = pneg %p65
        $region14: #{tpu_custom_call.1} parent=11 // pred_check_branch
          %192 = sbr.rel (%p190) target = $region16
        $region15: #{tpu_custom_call.1} parent=11 // pred_region
          _
        $region16: #{tpu_custom_call.1} parent=11 // pred_fallthru
          _
        // Predicated region
        $region17: #{tpu_custom_call.1} parent=11 // pred_check
          %p193 = pneg %p86
        $region18: #{tpu_custom_call.1} parent=11 // pred_check_branch
          %195 = sbr.rel (%p193) target = $region20
        $region19: #{tpu_custom_call.1} parent=11 // pred_region
          _
        $region20: #{tpu_custom_call.1} parent=11 // pred_fallthru
          _
        // Predicated region
        $region21: #{tpu_custom_call.1} parent=11 // pred_check
          %p196 = pneg %p107
        $region22: #{tpu_custom_call.1} parent=11 // pred_check_branch
          %198 = sbr.rel (%p196) target = $region24
        $region23: #{tpu_custom_call.1} parent=11 // pred_region
          _
        $region24: #{tpu_custom_call.1} parent=11 // pred_fallthru
          _
        // Predicated region
        $region25: #{tpu_custom_call.1} parent=11 // pred_check
          %p199 = pneg %p128
        $region26: #{tpu_custom_call.1} parent=11 // pred_check_branch
          %201 = sbr.rel (%p199) target = $region28
        $region27: #{tpu_custom_call.1} parent=11 // pred_region
          _
        $region28: #{tpu_custom_call.1} parent=11 // pred_fallthru
          _
        // Predicated region
        $region29: #{tpu_custom_call.1} parent=11 // pred_check
          %p202 = pneg %p149
        $region30: #{tpu_custom_call.1} parent=11 // pred_check_branch
          %204 = sbr.rel (%p202) target = $region32
        $region31: #{tpu_custom_call.1} parent=11 // pred_region
          _
        $region32: #{tpu_custom_call.1} parent=11 // pred_fallthru
          _
      $region12: #{tpu_custom_call.1} parent=5 // pred_fallthru
        _
      %p205 = scmp.lt.s32.totalorder %s18, 2
      // Predicated region
      $region33: #{tpu_custom_call.1} parent=5 // pred_check
        %p206 = pneg %p205
      $region34: #{tpu_custom_call.1} parent=5 // pred_check_branch
        %208 = sbr.rel (%p206) target = $region36
      $region35: #{tpu_custom_call.1} parent=5 // pred_region
        // Predicated region
        $region37: #{tpu_custom_call.1} parent=35 // pred_check
          %p209 = pneg %p38
        $region38: #{tpu_custom_call.1} parent=35 // pred_check_branch
          %211 = sbr.rel (%p209) target = $region40
        $region39: #{tpu_custom_call.1} parent=35 // pred_region
          %s212 = sand.u32 %s28, 1
          %s213 = scalar_lea.sflag [#allocation4], %s212
          %s214 = sand.u32 %s28, 1
          %s215 = smul.addr %s214, 24
          %s216 = scalar_lea.vmem [#allocation3], %s215
          %s218 = ssub.s32 384, 384
          %219 = vsyncadd %s213, %s218
          %s220 = smul.addr %s18, 6
          %s221 = smul.addr %s220, 64
          %s222 = scalar_lea.hbm %s0, %s221
          %s224 = sshll.u32 %s216, 4
          %s225 = int_to_ptr.vmem [resolvable:$true] %s224
          %227 = dma.hbm_to_vmem [thread:$0]  %s222, 384, %s225, %s213
        $region40: #{tpu_custom_call.1} parent=35 // pred_fallthru
          _
      $region36: #{tpu_custom_call.1} parent=5 // pred_fallthru
        _
      %p228 = scmp.le.s32.totalorder 1, %s18
      %p229 = scmp.lt.s32.totalorder %s18, 3
      %p230 = pnand %p228, %p229
      %p231 = pneg %p230
      // Predicated region
      $region41: #{tpu_custom_call.1} parent=5 // pred_check
        _
      $region42: #{tpu_custom_call.1} parent=5 // pred_check_branch
        %233 = sbr.rel (%p230) target = $region44
      $region43: #{tpu_custom_call.1} parent=5 // pred_region
        %s234 = ssub.s32 %s18, 1
        %s235 = sand.u32 %s31, 1
        %s236 = scalar_lea.sflag [#allocation4], %s235
        %s237 = sand.u32 %s31, 1
        %s238 = smul.addr %s237, 24
        %s239 = scalar_lea.vmem [#allocation3], %s238
        // Predicated region
        $region45: #{tpu_custom_call.1} parent=43 // pred_check
          %p240 = pneg %p44
        $region46: #{tpu_custom_call.1} parent=43 // pred_check_branch
          %242 = sbr.rel (%p240) target = $region48
        $region47: #{tpu_custom_call.1} parent=43 // pred_region
          %243 = dma.done %s236, 384
        $region48: #{tpu_custom_call.1} parent=43 // pred_fallthru
          _
        %s244 = sand.u32 %s31, 1
        %s245 = scalar_lea.sflag [#allocation4], %s244
        %s246 = sand.u32 %s31, 1
        %s247 = smul.addr %s246, 24
        %s248 = scalar_lea.vmem [#allocation3], %s247
        %p249 = pneg %p44
        %p250 = pneg %p41
        %p251 = pneg %p65
        %p252 = pneg %p62
        %p253 = pneg %p86
        %p254 = pneg %p83
        %p255 = pneg %p107
        %p256 = pneg %p104
        %p257 = pneg %p128
        %p258 = pneg %p125
        %p259 = pneg %p149
        %p260 = pneg %p146
        %p261 = pneg %p175
        %p262 = pneg %p172
        %s263 = sand.u32 %s162, 1
        %s264 = scalar_lea.sflag [#allocation5], %s263
        %s265 = sand.u32 %s162, 1
        %s266 = smul.addr %s265, 16
        %s267 = scalar_lea.vmem [#allocation6], %s266
        %v269 = vld [vmem:[%s1] sm:$0xf]
        %v270 = vld [vmem:[%s1 + $0x4] sm:$0xf]
        %v271 = vld [vmem:[%s239] sm:$0xff]
        %v272 = vld [vmem:[%s239 + $0x8] sm:$0xff]
        %v273 = vld [vmem:[%s239 + $0x10] sm:$0xf]
        %v274 = vld [vmem:[%s239] sm:$0xff]
        %v275 = vld [vmem:[%s239 + $0x8] sm:$0xff]
        %v276 = vld [vmem:[%s239 + $0x10] sm:$0xff]
        %v279 = vunpack.c.l.b16 %v269
        %v280 = vunpack.c.l.b16 %v270
        %v281 = vpack.c.b16 %v280, %v279
        %282 = vrot.lane.b32.xlu0 %v281, 120
        %v283 = vpop.permute.xlu0 %282
        %v287 = vunpack.c.l.b16 %v274
        %v288 = vunpack.c.h.b16 %v274
        %v289 = vunpack.c.l.b16 %v275
        %v290 = vunpack.c.h.b16 %v275
        %v291 = vunpack.c.l.b16 %v276
        %v292 = vunpack.c.h.b16 %v276
        %v293 = vpack.c.b16 %v287, %v287
        %v294 = vpack.c.b16 %v288, %v288
        %v295 = vpack.c.b16 %v289, %v289
        %v296 = vpack.c.b16 %v290, %v290
        %v297 = vpack.c.b16 %v291, %v291
        %v298 = vpack.c.b16 %v292, %v292
        %299 = vrot.lane.b32.xlu0 %v293, 127
        %v300 = vpop.permute.xlu0 %299
        %301 = vrot.lane.b32.xlu0 %v294, 127
        %v302 = vpop.permute.xlu0 %301
        %303 = vrot.lane.b32.xlu0 %v295, 127
        %v304 = vpop.permute.xlu0 %303
        %305 = vrot.lane.b32.xlu0 %v296, 127
        %v306 = vpop.permute.xlu0 %305
        %307 = vrot.lane.b32.xlu0 %v297, 127
        %v308 = vpop.permute.xlu0 %307
        %309 = vrot.lane.b32.xlu0 %v298, 127
        %v310 = vpop.permute.xlu0 %309
        %vm311 = vcmask 1039360
        %v312 = vsel %vm311, %v300, %v302
        %v313 = vsel %vm311, %v302, %v304
        %v314 = vsel %vm311, %v304, %v306
        %v315 = vsel %vm311, %v306, %v308
        %v316 = vsel %vm311, %v308, %v310
        %vm317 = vcmask 64512
        %v319 = vsel %vm317, %v283, 0
        %vm321 = vcmask 1043456
        %v323 = vsel %vm321, %v312, 0
        %v326 = vsel %vm321, %v313, 0
        %v329 = vsel %vm321, %v314, 0
        %v332 = vsel %vm321, %v315, 0
        %v335 = vsel %vm321, %v316, 0
        %337 = vmatprep.subr.bf16.mxu0 %v326
        %338 = vmatpush1.bf16.msra.mxu0 %v323
        %339 = vmatprep.subr.bf16.mxu0 0
        %340 = vmatpush1.bf16.msra.mxu0 0
        %341 = vmatprep.subr.bf16.mxu0 0
        %342 = vmatpush1.bf16.msra.mxu0 0
        %343 = vmatprep.subr.bf16.mxu0 0
        %344 = vmatpush1.bf16.msra.mxu0 0
        %345 = vmatprep.subr.bf16.mxu0 0
        %346 = vmatpush1.bf16.msra.mxu0 0
        %347 = vmatprep.subr.bf16.mxu0 0
        %348 = vmatpush1.bf16.msra.mxu0 0
        %349 = vmatprep.subr.bf16.mxu0 0
        %350 = vmatpush1.bf16.msra.mxu0 0
        %351 = vmatprep.subr.bf16.mxu0 0
        %352 = vmatpush1.bf16.msra.mxu0 0
        %353 = vmatprep.subr.bf16.mxu0 0
        %354 = vmatpush1.bf16.msra.mxu0 0
        %355 = vmatprep.subr.bf16.mxu0 0
        %356 = vmatpush1.bf16.msra.mxu0 0
        %357 = vmatprep.subr.bf16.mxu0 0
        %358 = vmatpush1.bf16.msra.mxu0 0
        %359 = vmatprep.subr.bf16.mxu0 0
        %360 = vmatpush1.bf16.msra.mxu0 0
        %361 = vmatprep.subr.bf16.mxu0 0
        %362 = vmatpush1.bf16.msra.mxu0 0
        %363 = vmatprep.subr.bf16.mxu0 0
        %364 = vmatpush1.bf16.msra.mxu0 0
        %365 = vmatprep.subr.bf16.mxu0 0
        %366 = vmatpush1.bf16.msra.mxu0 0
        %367 = vmatprep.subr.bf16.mxu0 0
        %368 = vmatpush1.bf16.msra.mxu0 0
        %369 = vmatprep.mubr.bf16.mxu0 0
        %370 = vmatmul.mubr.bf16.gmra.mrb[0].mxu0 %v319
        %v371 = vpop.f32.mrb[0].mxu0
        %v372 = vadd.f32 0.0, %v371
        %v373 = vpop.f32.mrb[0].mxu0
        %v374 = vadd.f32 0.0, %v373
        %v375 = vpop.f32.mrb[0].mxu0
        %v376 = vadd.f32 0.0, %v375
        %v377 = vpop.f32.mrb[0].mxu0
        %v378 = vadd.f32 0.0, %v377
        %379 = vdwg.mxu0
        %380 = vmatprep.subr.bf16.mxu0 %v332
        %381 = vmatpush1.bf16.msra.mxu0 %v329
        %382 = vmatprep.subr.bf16.mxu0 0
        %383 = vmatpush1.bf16.msra.mxu0 0
        %384 = vmatprep.subr.bf16.mxu0 0
        %385 = vmatpush1.bf16.msra.mxu0 0
        %386 = vmatprep.subr.bf16.mxu0 0
        %387 = vmatpush1.bf16.msra.mxu0 0
        %388 = vmatprep.subr.bf16.mxu0 0
        %389 = vmatpush1.bf16.msra.mxu0 0
        %390 = vmatprep.subr.bf16.mxu0 0
        %391 = vmatpush1.bf16.msra.mxu0 0
        %392 = vmatprep.subr.bf16.mxu0 0
        %393 = vmatpush1.bf16.msra.mxu0 0
        %394 = vmatprep.subr.bf16.mxu0 0
        %395 = vmatpush1.bf16.msra.mxu0 0
        %396 = vmatprep.subr.bf16.mxu0 0
        %397 = vmatpush1.bf16.msra.mxu0 0
        %398 = vmatprep.subr.bf16.mxu0 0
        %399 = vmatpush1.bf16.msra.mxu0 0
        %400 = vmatprep.subr.bf16.mxu0 0
        %401 = vmatpush1.bf16.msra.mxu0 0
        %402 = vmatprep.subr.bf16.mxu0 0
        %403 = vmatpush1.bf16.msra.mxu0 0
        %404 = vmatprep.subr.bf16.mxu0 0
        %405 = vmatpush1.bf16.msra.mxu0 0
        %406 = vmatprep.subr.bf16.mxu0 0
        %407 = vmatpush1.bf16.msra.mxu0 0
        %408 = vmatprep.subr.bf16.mxu0 0
        %409 = vmatpush1.bf16.msra.mxu0 0
        %410 = vmatprep.subr.bf16.mxu0 0
        %411 = vmatpush1.bf16.msra.mxu0 0
        %412 = vmatprep.mubr.bf16.mxu0 0
        %413 = vmatmul.mubr.bf16.gmra.mrb[0].mxu0 %v319
        %v414 = vpop.f32.mrb[0].mxu0
        %v415 = vadd.f32 0.0, %v414
        %v416 = vpop.f32.mrb[0].mxu0
        %v417 = vadd.f32 0.0, %v416
        %v418 = vpop.f32.mrb[0].mxu0
        %v419 = vadd.f32 0.0, %v418
        %v420 = vpop.f32.mrb[0].mxu0
        %v421 = vadd.f32 0.0, %v420
        %422 = vdwg.mxu0
        %423 = vmatprep.subr.bf16.mxu0 0
        %424 = vmatpush1.bf16.msra.mxu0 %v335
        %425 = vmatprep.subr.bf16.mxu0 0
        %426 = vmatpush1.bf16.msra.mxu0 0
        %427 = vmatprep.subr.bf16.mxu0 0
        %428 = vmatpush1.bf16.msra.mxu0 0
        %429 = vmatprep.subr.bf16.mxu0 0
        %430 = vmatpush1.bf16.msra.mxu0 0
        %431 = vmatprep.subr.bf16.mxu0 0
        %432 = vmatpush1.bf16.msra.mxu0 0
        %433 = vmatprep.subr.bf16.mxu0 0
        %434 = vmatpush1.bf16.msra.mxu0 0
        %435 = vmatprep.subr.bf16.mxu0 0
        %436 = vmatpush1.bf16.msra.mxu0 0
        %437 = vmatprep.subr.bf16.mxu0 0
        %438 = vmatpush1.bf16.msra.mxu0 0
        %439 = vmatprep.subr.bf16.mxu0 0
        %440 = vmatpush1.bf16.msra.mxu0 0
        %441 = vmatprep.subr.bf16.mxu0 0
        %442 = vmatpush1.bf16.msra.mxu0 0
        %443 = vmatprep.subr.bf16.mxu0 0
        %444 = vmatpush1.bf16.msra.mxu0 0
        %445 = vmatprep.subr.bf16.mxu0 0
        %446 = vmatpush1.bf16.msra.mxu0 0
        %447 = vmatprep.subr.bf16.mxu0 0
        %448 = vmatpush1.bf16.msra.mxu0 0
        %449 = vmatprep.subr.bf16.mxu0 0
        %450 = vmatpush1.bf16.msra.mxu0 0
        %451 = vmatprep.subr.bf16.mxu0 0
        %452 = vmatpush1.bf16.msra.mxu0 0
        %453 = vmatprep.subr.bf16.mxu0 0
        %454 = vmatpush1.bf16.msra.mxu0 0
        %455 = vmatprep.mubr.bf16.mxu0 0
        %456 = vmatmul.mubr.bf16.gmra.mrb[0].mxu0 %v319
        %v457 = vpop.f32.mrb[0].mxu0
        %v458 = vadd.f32 0.0, %v457
        %v459 = vpop.f32.mrb[0].mxu0
        %v460 = vpop.f32.mrb[0].mxu0
        %v461 = vadd.f32 0.0, %v460
        %v462 = vpop.f32.mrb[0].mxu0
        %463 = vdwg.mxu0
        %v467 = vunpack.c.l.b16 %v271
        %v468 = vunpack.c.h.b16 %v271
        %v469 = vunpack.c.l.b16 %v272
        %v470 = vunpack.c.h.b16 %v272
        %v471 = vunpack.c.l.b16 %v273
        %v472 = vpack.c.b16 %v467, %v467
        %v473 = vpack.c.b16 %v468, %v468
        %v474 = vpack.c.b16 %v469, %v469
        %v475 = vpack.c.b16 %v470, %v470
        %v476 = vpack.c.b16 %v471, %v471
        %v478 = vsel %vm317, %v281, 0
        %v481 = vsel %vm321, %v472, 0
        %v484 = vsel %vm321, %v473, 0
        %v487 = vsel %vm321, %v474, 0
        %v490 = vsel %vm321, %v475, 0
        %v493 = vsel %vm321, %v476, 0
        %495 = vmatprep.subr.bf16.mxu0 %v484
        %496 = vmatpush1.bf16.msra.mxu0 %v481
        %497 = vmatprep.subr.bf16.mxu0 0
        %498 = vmatpush1.bf16.msra.mxu0 0
        %499 = vmatprep.subr.bf16.mxu0 0
        %500 = vmatpush1.bf16.msra.mxu0 0
        %501 = vmatprep.subr.bf16.mxu0 0
        %502 = vmatpush1.bf16.msra.mxu0 0
        %503 = vmatprep.subr.bf16.mxu0 0
        %504 = vmatpush1.bf16.msra.mxu0 0
        %505 = vmatprep.subr.bf16.mxu0 0
        %506 = vmatpush1.bf16.msra.mxu0 0
        %507 = vmatprep.subr.bf16.mxu0 0
        %508 = vmatpush1.bf16.msra.mxu0 0
        %509 = vmatprep.subr.bf16.mxu0 0
        %510 = vmatpush1.bf16.msra.mxu0 0
        %511 = vmatprep.subr.bf16.mxu0 0
        %512 = vmatpush1.bf16.msra.mxu0 0
        %513 = vmatprep.subr.bf16.mxu0 0
        %514 = vmatpush1.bf16.msra.mxu0 0
        %515 = vmatprep.subr.bf16.mxu0 0
        %516 = vmatpush1.bf16.msra.mxu0 0
        %517 = vmatprep.subr.bf16.mxu0 0
        %518 = vmatpush1.bf16.msra.mxu0 0
        %519 = vmatprep.subr.bf16.mxu0 0
        %520 = vmatpush1.bf16.msra.mxu0 0
        %521 = vmatprep.subr.bf16.mxu0 0
        %522 = vmatpush1.bf16.msra.mxu0 0
        %523 = vmatprep.subr.bf16.mxu0 0
        %524 = vmatpush1.bf16.msra.mxu0 0
        %525 = vmatprep.subr.bf16.mxu0 0
        %526 = vmatpush1.bf16.msra.mxu0 0
        %527 = vmatprep.mubr.bf16.mxu0 0
        %528 = vmatmul.mubr.bf16.gmra.mrb[0].mxu0 %v478
        %v529 = vpop.f32.mrb[0].mxu0
        %v530 = vadd.f32 %v372, %v529
        %v531 = vpop.f32.mrb[0].mxu0
        %v532 = vadd.f32 %v374, %v531
        %v533 = vpop.f32.mrb[0].mxu0
        %v534 = vadd.f32 %v376, %v533
        %v535 = vpop.f32.mrb[0].mxu0
        %v536 = vadd.f32 %v378, %v535
        %537 = vdwg.mxu0
        %538 = vmatprep.subr.bf16.mxu0 %v490
        %539 = vmatpush1.bf16.msra.mxu0 %v487
        %540 = vmatprep.subr.bf16.mxu0 0
        %541 = vmatpush1.bf16.msra.mxu0 0
        %542 = vmatprep.subr.bf16.mxu0 0
        %543 = vmatpush1.bf16.msra.mxu0 0
        %544 = vmatprep.subr.bf16.mxu0 0
        %545 = vmatpush1.bf16.msra.mxu0 0
        %546 = vmatprep.subr.bf16.mxu0 0
        %547 = vmatpush1.bf16.msra.mxu0 0
        %548 = vmatprep.subr.bf16.mxu0 0
        %549 = vmatpush1.bf16.msra.mxu0 0
        %550 = vmatprep.subr.bf16.mxu0 0
        %551 = vmatpush1.bf16.msra.mxu0 0
        %552 = vmatprep.subr.bf16.mxu0 0
        %553 = vmatpush1.bf16.msra.mxu0 0
        %554 = vmatprep.subr.bf16.mxu0 0
        %555 = vmatpush1.bf16.msra.mxu0 0
        %556 = vmatprep.subr.bf16.mxu0 0
        %557 = vmatpush1.bf16.msra.mxu0 0
        %558 = vmatprep.subr.bf16.mxu0 0
        %559 = vmatpush1.bf16.msra.mxu0 0
        %560 = vmatprep.subr.bf16.mxu0 0
        %561 = vmatpush1.bf16.msra.mxu0 0
        %562 = vmatprep.subr.bf16.mxu0 0
        %563 = vmatpush1.bf16.msra.mxu0 0
        %564 = vmatprep.subr.bf16.mxu0 0
        %565 = vmatpush1.bf16.msra.mxu0 0
        %566 = vmatprep.subr.bf16.mxu0 0
        %567 = vmatpush1.bf16.msra.mxu0 0
        %568 = vmatprep.subr.bf16.mxu0 0
        %569 = vmatpush1.bf16.msra.mxu0 0
        %570 = vmatprep.mubr.bf16.mxu0 0
        %571 = vmatmul.mubr.bf16.gmra.mrb[0].mxu0 %v478
        %v572 = vpop.f32.mrb[0].mxu0
        %v573 = vadd.f32 %v415, %v572
        %v574 = vpop.f32.mrb[0].mxu0
        %v575 = vadd.f32 %v417, %v574
        %v576 = vpop.f32.mrb[0].mxu0
        %v577 = vadd.f32 %v419, %v576
        %v578 = vpop.f32.mrb[0].mxu0
        %v579 = vadd.f32 %v421, %v578
        %580 = vdwg.mxu0
        %581 = vmatprep.subr.bf16.mxu0 0
        %582 = vmatpush1.bf16.msra.mxu0 %v493
        %583 = vmatprep.subr.bf16.mxu0 0
        %584 = vmatpush1.bf16.msra.mxu0 0
        %585 = vmatprep.subr.bf16.mxu0 0
        %586 = vmatpush1.bf16.msra.mxu0 0
        %587 = vmatprep.subr.bf16.mxu0 0
        %588 = vmatpush1.bf16.msra.mxu0 0
        %589 = vmatprep.subr.bf16.mxu0 0
        %590 = vmatpush1.bf16.msra.mxu0 0
        %591 = vmatprep.subr.bf16.mxu0 0
        %592 = vmatpush1.bf16.msra.mxu0 0
        %593 = vmatprep.subr.bf16.mxu0 0
        %594 = vmatpush1.bf16.msra.mxu0 0
        %595 = vmatprep.subr.bf16.mxu0 0
        %596 = vmatpush1.bf16.msra.mxu0 0
        %597 = vmatprep.subr.bf16.mxu0 0
        %598 = vmatpush1.bf16.msra.mxu0 0
        %599 = vmatprep.subr.bf16.mxu0 0
        %600 = vmatpush1.bf16.msra.mxu0 0
        %601 = vmatprep.subr.bf16.mxu0 0
        %602 = vmatpush1.bf16.msra.mxu0 0
        %603 = vmatprep.subr.bf16.mxu0 0
        %604 = vmatpush1.bf16.msra.mxu0 0
        %605 = vmatprep.subr.bf16.mxu0 0
        %606 = vmatpush1.bf16.msra.mxu0 0
        %607 = vmatprep.subr.bf16.mxu0 0
        %608 = vmatpush1.bf16.msra.mxu0 0
        %609 = vmatprep.subr.bf16.mxu0 0
        %610 = vmatpush1.bf16.msra.mxu0 0
        %611 = vmatprep.subr.bf16.mxu0 0
        %612 = vmatpush1.bf16.msra.mxu0 0
        %613 = vmatprep.mubr.bf16.mxu0 0
        %614 = vmatmul.mubr.bf16.gmra.mrb[0].mxu0 %v478
        %v615 = vpop.f32.mrb[0].mxu0
        %v616 = vadd.f32 %v458, %v615
        %v617 = vpop.f32.mrb[0].mxu0
        %v618 = vpop.f32.mrb[0].mxu0
        %v619 = vadd.f32 %v461, %v618
        %v620 = vpop.f32.mrb[0].mxu0
        %621 = vdwg.mxu0
        %622 = vrot.lane.b32.xlu0 %v281, 112
        %v623 = vpop.permute.xlu0 %622
        %624 = vrot.lane.b32.xlu0 %v293, 126
        %v625 = vpop.permute.xlu0 %624
        %626 = vrot.lane.b32.xlu0 %v294, 126
        %v627 = vpop.permute.xlu0 %626
        %628 = vrot.lane.b32.xlu0 %v295, 126
        %v629 = vpop.permute.xlu0 %628
        %630 = vrot.lane.b32.xlu0 %v296, 126
        %v631 = vpop.permute.xlu0 %630
        %632 = vrot.lane.b32.xlu0 %v297, 126
        %v633 = vpop.permute.xlu0 %632
        %634 = vrot.lane.b32.xlu0 %v298, 126
        %v635 = vpop.permute.xlu0 %634
        %vm636 = vcmask 1031168
        %v637 = vsel %vm636, %v625, %v627
        %v638 = vsel %vm636, %v627, %v629
        %v639 = vsel %vm636, %v629, %v631
        %v640 = vsel %vm636, %v631, %v633
        %v641 = vsel %vm636, %v633, %v635
        %v643 = vsel %vm317, %v623, 0
        %v646 = vsel %vm321, %v637, 0
        %v649 = vsel %vm321, %v638, 0
        %v652 = vsel %vm321, %v639, 0
        %v655 = vsel %vm321, %v640, 0
        %v658 = vsel %vm321, %v641, 0
        %660 = vmatprep.subr.bf16.mxu0 %v649
        %661 = vmatpush1.bf16.msra.mxu0 %v646
        %662 = vmatprep.subr.bf16.mxu0 0
        %663 = vmatpush1.bf16.msra.mxu0 0
        %664 = vmatprep.subr.bf16.mxu0 0
        %665 = vmatpush1.bf16.msra.mxu0 0
        %666 = vmatprep.subr.bf16.mxu0 0
        %667 = vmatpush1.bf16.msra.mxu0 0
        %668 = vmatprep.subr.bf16.mxu0 0
        %669 = vmatpush1.bf16.msra.mxu0 0
        %670 = vmatprep.subr.bf16.mxu0 0
        %671 = vmatpush1.bf16.msra.mxu0 0
        %672 = vmatprep.subr.bf16.mxu0 0
        %673 = vmatpush1.bf16.msra.mxu0 0
        %674 = vmatprep.subr.bf16.mxu0 0
        %675 = vmatpush1.bf16.msra.mxu0 0
        %676 = vmatprep.subr.bf16.mxu0 0
        %677 = vmatpush1.bf16.msra.mxu0 0
        %678 = vmatprep.subr.bf16.mxu0 0
        %679 = vmatpush1.bf16.msra.mxu0 0
        %680 = vmatprep.subr.bf16.mxu0 0
        %681 = vmatpush1.bf16.msra.mxu0 0
        %682 = vmatprep.subr.bf16.mxu0 0
        %683 = vmatpush1.bf16.msra.mxu0 0
        %684 = vmatprep.subr.bf16.mxu0 0
        %685 = vmatpush1.bf16.msra.mxu0 0
        %686 = vmatprep.subr.bf16.mxu0 0
        %687 = vmatpush1.bf16.msra.mxu0 0
        %688 = vmatprep.subr.bf16.mxu0 0
        %689 = vmatpush1.bf16.msra.mxu0 0
        %690 = vmatprep.subr.bf16.mxu0 0
        %691 = vmatpush1.bf16.msra.mxu0 0
        %692 = vmatprep.mubr.bf16.mxu0 0
        %693 = vmatmul.mubr.bf16.gmra.mrb[0].mxu0 %v643
        %v694 = vpop.f32.mrb[0].mxu0
        %v695 = vadd.f32 0.0, %v694
        %v696 = vpop.f32.mrb[0].mxu0
        %v697 = vadd.f32 0.0, %v696
        %v698 = vpop.f32.mrb[0].mxu0
        %v699 = vadd.f32 0.0, %v698
        %v700 = vpop.f32.mrb[0].mxu0
        %v701 = vadd.f32 0.0, %v700
        %702 = vdwg.mxu0
        %703 = vmatprep.subr.bf16.mxu0 %v655
        %704 = vmatpush1.bf16.msra.mxu0 %v652
        %705 = vmatprep.subr.bf16.mxu0 0
        %706 = vmatpush1.bf16.msra.mxu0 0
        %707 = vmatprep.subr.bf16.mxu0 0
        %708 = vmatpush1.bf16.msra.mxu0 0
        %709 = vmatprep.subr.bf16.mxu0 0
        %710 = vmatpush1.bf16.msra.mxu0 0
        %711 = vmatprep.subr.bf16.mxu0 0
        %712 = vmatpush1.bf16.msra.mxu0 0
        %713 = vmatprep.subr.bf16.mxu0 0
        %714 = vmatpush1.bf16.msra.mxu0 0
        %715 = vmatprep.subr.bf16.mxu0 0
        %716 = vmatpush1.bf16.msra.mxu0 0
        %717 = vmatprep.subr.bf16.mxu0 0
        %718 = vmatpush1.bf16.msra.mxu0 0
        %719 = vmatprep.subr.bf16.mxu0 0
        %720 = vmatpush1.bf16.msra.mxu0 0
        %721 = vmatprep.subr.bf16.mxu0 0
        %722 = vmatpush1.bf16.msra.mxu0 0
        %723 = vmatprep.subr.bf16.mxu0 0
        %724 = vmatpush1.bf16.msra.mxu0 0
        %725 = vmatprep.subr.bf16.mxu0 0
        %726 = vmatpush1.bf16.msra.mxu0 0
        %727 = vmatprep.subr.bf16.mxu0 0
        %728 = vmatpush1.bf16.msra.mxu0 0
        %729 = vmatprep.subr.bf16.mxu0 0
        %730 = vmatpush1.bf16.msra.mxu0 0
        %731 = vmatprep.subr.bf16.mxu0 0
        %732 = vmatpush1.bf16.msra.mxu0 0
        %733 = vmatprep.subr.bf16.mxu0 0
        %734 = vmatpush1.bf16.msra.mxu0 0
        %735 = vmatprep.mubr.bf16.mxu0 0
        %736 = vmatmul.mubr.bf16.gmra.mrb[0].mxu0 %v643
        %v737 = vpop.f32.mrb[0].mxu0
        %v738 = vadd.f32 0.0, %v737
        %v739 = vpop.f32.mrb[0].mxu0
        %v740 = vadd.f32 0.0, %v739
        %v741 = vpop.f32.mrb[0].mxu0
        %v742 = vadd.f32 0.0, %v741
        %v743 = vpop.f32.mrb[0].mxu0
        %v744 = vadd.f32 0.0, %v743
        %745 = vdwg.mxu0
        %746 = vmatprep.subr.bf16.mxu0 0
        %747 = vmatpush1.bf16.msra.mxu0 %v658
        %748 = vmatprep.subr.bf16.mxu0 0
        %749 = vmatpush1.bf16.msra.mxu0 0
        %750 = vmatprep.subr.bf16.mxu0 0
        %751 = vmatpush1.bf16.msra.mxu0 0
        %752 = vmatprep.subr.bf16.mxu0 0
        %753 = vmatpush1.bf16.msra.mxu0 0
        %754 = vmatprep.subr.bf16.mxu0 0
        %755 = vmatpush1.bf16.msra.mxu0 0
        %756 = vmatprep.subr.bf16.mxu0 0
        %757 = vmatpush1.bf16.msra.mxu0 0
        %758 = vmatprep.subr.bf16.mxu0 0
        %759 = vmatpush1.bf16.msra.mxu0 0
        %760 = vmatprep.subr.bf16.mxu0 0
        %761 = vmatpush1.bf16.msra.mxu0 0
        %762 = vmatprep.subr.bf16.mxu0 0
        %763 = vmatpush1.bf16.msra.mxu0 0
        %764 = vmatprep.subr.bf16.mxu0 0
        %765 = vmatpush1.bf16.msra.mxu0 0
        %766 = vmatprep.subr.bf16.mxu0 0
        %767 = vmatpush1.bf16.msra.mxu0 0
        %768 = vmatprep.subr.bf16.mxu0 0
        %769 = vmatpush1.bf16.msra.mxu0 0
        %770 = vmatprep.subr.bf16.mxu0 0
        %771 = vmatpush1.bf16.msra.mxu0 0
        %772 = vmatprep.subr.bf16.mxu0 0
        %773 = vmatpush1.bf16.msra.mxu0 0
        %774 = vmatprep.subr.bf16.mxu0 0
        %775 = vmatpush1.bf16.msra.mxu0 0
        %776 = vmatprep.subr.bf16.mxu0 0
        %777 = vmatpush1.bf16.msra.mxu0 0
        %778 = vmatprep.mubr.bf16.mxu0 0
        %779 = vmatmul.mubr.bf16.gmra.mrb[0].mxu0 %v643
        %v780 = vpop.f32.mrb[0].mxu0
        %v781 = vadd.f32 0.0, %v780
        %v782 = vpop.f32.mrb[0].mxu0
        %v783 = vpop.f32.mrb[0].mxu0
        %v784 = vadd.f32 0.0, %v783
        %v785 = vpop.f32.mrb[0].mxu0
        %786 = vdwg.mxu0
        %v787 = vadd.f32 %v530, %v695
        %v788 = vadd.f32 %v532, %v697
        %v789 = vadd.f32 %v573, %v738
        %v790 = vadd.f32 %v575, %v740
        %v791 = vadd.f32 %v616, %v781
        %v792 = vadd.f32 %v534, %v699
        %v793 = vadd.f32 %v536, %v701
        %v794 = vadd.f32 %v577, %v742
        %v795 = vadd.f32 %v579, %v744
        %v796 = vadd.f32 %v619, %v784
        %797 = vrot.lane.b32.xlu0 %v281, 104
        %v798 = vpop.permute.xlu0 %797
        %799 = vrot.lane.b32.xlu0 %v293, 108
        %v800 = vpop.permute.xlu0 %799
        %801 = vrot.lane.b32.xlu0 %v294, 108
        %v802 = vpop.permute.xlu0 %801
        %803 = vrot.lane.b32.xlu0 %v295, 108
        %v804 = vpop.permute.xlu0 %803
        %805 = vrot.lane.b32.xlu0 %v296, 108
        %v806 = vpop.permute.xlu0 %805
        %807 = vrot.lane.b32.xlu0 %v297, 108
        %v808 = vpop.permute.xlu0 %807
        %809 = vrot.lane.b32.xlu0 %v298, 108
        %v810 = vpop.permute.xlu0 %809
        %vm811 = vcmask 883712
        %v812 = vsel %vm811, %v800, %v802
        %v813 = vsel %vm811, %v802, %v804
        %v814 = vsel %vm811, %v804, %v806
        %v815 = vsel %vm811, %v806, %v808
        %v816 = vsel %vm811, %v808, %v810
        %v818 = vsel %vm317, %v798, 0
        %v821 = vsel %vm321, %v812, 0
        %v824 = vsel %vm321, %v813, 0
        %v827 = vsel %vm321, %v814, 0
        %v830 = vsel %vm321, %v815, 0
        %v833 = vsel %vm321, %v816, 0
        %835 = vmatprep.subr.bf16.mxu0 %v824
        %836 = vmatpush1.bf16.msra.mxu0 %v821
        %837 = vmatprep.subr.bf16.mxu0 0
        %838 = vmatpush1.bf16.msra.mxu0 0
        %839 = vmatprep.subr.bf16.mxu0 0
        %840 = vmatpush1.bf16.msra.mxu0 0
        %841 = vmatprep.subr.bf16.mxu0 0
        %842 = vmatpush1.bf16.msra.mxu0 0
        %843 = vmatprep.subr.bf16.mxu0 0
        %844 = vmatpush1.bf16.msra.mxu0 0
        %845 = vmatprep.subr.bf16.mxu0 0
        %846 = vmatpush1.bf16.msra.mxu0 0
        %847 = vmatprep.subr.bf16.mxu0 0
        %848 = vmatpush1.bf16.msra.mxu0 0
        %849 = vmatprep.subr.bf16.mxu0 0
        %850 = vmatpush1.bf16.msra.mxu0 0
        %851 = vmatprep.subr.bf16.mxu0 0
        %852 = vmatpush1.bf16.msra.mxu0 0
        %853 = vmatprep.subr.bf16.mxu0 0
        %854 = vmatpush1.bf16.msra.mxu0 0
        %855 = vmatprep.subr.bf16.mxu0 0
        %856 = vmatpush1.bf16.msra.mxu0 0
        %857 = vmatprep.subr.bf16.mxu0 0
        %858 = vmatpush1.bf16.msra.mxu0 0
        %859 = vmatprep.subr.bf16.mxu0 0
        %860 = vmatpush1.bf16.msra.mxu0 0
        %861 = vmatprep.subr.bf16.mxu0 0
        %862 = vmatpush1.bf16.msra.mxu0 0
        %863 = vmatprep.subr.bf16.mxu0 0
        %864 = vmatpush1.bf16.msra.mxu0 0
        %865 = vmatprep.subr.bf16.mxu0 0
        %866 = vmatpush1.bf16.msra.mxu0 0
        %867 = vmatprep.mubr.bf16.mxu0 0
        %868 = vmatmul.mubr.bf16.gmra.mrb[0].mxu0 %v818
        %v869 = vpop.f32.mrb[0].mxu0
        %v870 = vadd.f32 0.0, %v869
        %v871 = vpop.f32.mrb[0].mxu0
        %v872 = vadd.f32 0.0, %v871
        %v873 = vpop.f32.mrb[0].mxu0
        %v874 = vadd.f32 0.0, %v873
        %v875 = vpop.f32.mrb[0].mxu0
        %v876 = vadd.f32 0.0, %v875
        %877 = vdwg.mxu0
        %878 = vmatprep.subr.bf16.mxu0 %v830
        %879 = vmatpush1.bf16.msra.mxu0 %v827
        %880 = vmatprep.subr.bf16.mxu0 0
        %881 = vmatpush1.bf16.msra.mxu0 0
        %882 = vmatprep.subr.bf16.mxu0 0
        %883 = vmatpush1.bf16.msra.mxu0 0
        %884 = vmatprep.subr.bf16.mxu0 0
        %885 = vmatpush1.bf16.msra.mxu0 0
        %886 = vmatprep.subr.bf16.mxu0 0
        %887 = vmatpush1.bf16.msra.mxu0 0
        %888 = vmatprep.subr.bf16.mxu0 0
        %889 = vmatpush1.bf16.msra.mxu0 0
        %890 = vmatprep.subr.bf16.mxu0 0
        %891 = vmatpush1.bf16.msra.mxu0 0
        %892 = vmatprep.subr.bf16.mxu0 0
        %893 = vmatpush1.bf16.msra.mxu0 0
        %894 = vmatprep.subr.bf16.mxu0 0
        %895 = vmatpush1.bf16.msra.mxu0 0
        %896 = vmatprep.subr.bf16.mxu0 0
        %897 = vmatpush1.bf16.msra.mxu0 0
        %898 = vmatprep.subr.bf16.mxu0 0
        %899 = vmatpush1.bf16.msra.mxu0 0
        %900 = vmatprep.subr.bf16.mxu0 0
        %901 = vmatpush1.bf16.msra.mxu0 0
        %902 = vmatprep.subr.bf16.mxu0 0
        %903 = vmatpush1.bf16.msra.mxu0 0
        %904 = vmatprep.subr.bf16.mxu0 0
        %905 = vmatpush1.bf16.msra.mxu0 0
        %906 = vmatprep.subr.bf16.mxu0 0
        %907 = vmatpush1.bf16.msra.mxu0 0
        %908 = vmatprep.subr.bf16.mxu0 0
        %909 = vmatpush1.bf16.msra.mxu0 0
        %910 = vmatprep.mubr.bf16.mxu0 0
        %911 = vmatmul.mubr.bf16.gmra.mrb[0].mxu0 %v818
        %v912 = vpop.f32.mrb[0].mxu0
        %v913 = vadd.f32 0.0, %v912
        %v914 = vpop.f32.mrb[0].mxu0
        %v915 = vadd.f32 0.0, %v914
        %v916 = vpop.f32.mrb[0].mxu0
        %v917 = vadd.f32 0.0, %v916
        %v918 = vpop.f32.mrb[0].mxu0
        %v919 = vadd.f32 0.0, %v918
        %920 = vdwg.mxu0
        %921 = vmatprep.subr.bf16.mxu0 0
        %922 = vmatpush1.bf16.msra.mxu0 %v833
        %923 = vmatprep.subr.bf16.mxu0 0
        %924 = vmatpush1.bf16.msra.mxu0 0
        %925 = vmatprep.subr.bf16.mxu0 0
        %926 = vmatpush1.bf16.msra.mxu0 0
        %927 = vmatprep.subr.bf16.mxu0 0
        %928 = vmatpush1.bf16.msra.mxu0 0
        %929 = vmatprep.subr.bf16.mxu0 0
        %930 = vmatpush1.bf16.msra.mxu0 0
        %931 = vmatprep.subr.bf16.mxu0 0
        %932 = vmatpush1.bf16.msra.mxu0 0
        %933 = vmatprep.subr.bf16.mxu0 0
        %934 = vmatpush1.bf16.msra.mxu0 0
        %935 = vmatprep.subr.bf16.mxu0 0
        %936 = vmatpush1.bf16.msra.mxu0 0
        %937 = vmatprep.subr.bf16.mxu0 0
        %938 = vmatpush1.bf16.msra.mxu0 0
        %939 = vmatprep.subr.bf16.mxu0 0
        %940 = vmatpush1.bf16.msra.mxu0 0
        %941 = vmatprep.subr.bf16.mxu0 0
        %942 = vmatpush1.bf16.msra.mxu0 0
        %943 = vmatprep.subr.bf16.mxu0 0
        %944 = vmatpush1.bf16.msra.mxu0 0
        %945 = vmatprep.subr.bf16.mxu0 0
        %946 = vmatpush1.bf16.msra.mxu0 0
        %947 = vmatprep.subr.bf16.mxu0 0
        %948 = vmatpush1.bf16.msra.mxu0 0
        %949 = vmatprep.subr.bf16.mxu0 0
        %950 = vmatpush1.bf16.msra.mxu0 0
        %951 = vmatprep.subr.bf16.mxu0 0
        %952 = vmatpush1.bf16.msra.mxu0 0
        %953 = vmatprep.mubr.bf16.mxu0 0
        %954 = vmatmul.mubr.bf16.gmra.mrb[0].mxu0 %v818
        %v955 = vpop.f32.mrb[0].mxu0
        %v956 = vadd.f32 0.0, %v955
        %v957 = vpop.f32.mrb[0].mxu0
        %v958 = vpop.f32.mrb[0].mxu0
        %v959 = vadd.f32 0.0, %v958
        %v960 = vpop.f32.mrb[0].mxu0
        %961 = vdwg.mxu0
        %v962 = vadd.f32 %v787, %v870
        %v963 = vadd.f32 %v788, %v872
        %v964 = vadd.f32 %v789, %v913
        %v965 = vadd.f32 %v790, %v915
        %v966 = vadd.f32 %v791, %v956
        %v967 = vadd.f32 %v792, %v874
        %v968 = vadd.f32 %v793, %v876
        %v969 = vadd.f32 %v794, %v917
        %v970 = vadd.f32 %v795, %v919
        %v971 = vadd.f32 %v796, %v959
        %972 = vrot.lane.b32.xlu0 %v281, 96
        %v973 = vpop.permute.xlu0 %972
        %974 = vrot.lane.b32.xlu0 %v293, 107
        %v975 = vpop.permute.xlu0 %974
        %976 = vrot.lane.b32.xlu0 %v294, 107
        %v977 = vpop.permute.xlu0 %976
        %978 = vrot.lane.b32.xlu0 %v295, 107
        %v979 = vpop.permute.xlu0 %978
        %980 = vrot.lane.b32.xlu0 %v296, 107
        %v981 = vpop.permute.xlu0 %980
        %982 = vrot.lane.b32.xlu0 %v297, 107
        %v983 = vpop.permute.xlu0 %982
        %984 = vrot.lane.b32.xlu0 %v298, 107
        %v985 = vpop.permute.xlu0 %984
        %vm986 = vcmask 875520
        %v987 = vsel %vm986, %v975, %v977
        %v988 = vsel %vm986, %v977, %v979
        %v989 = vsel %vm986, %v979, %v981
        %v990 = vsel %vm986, %v981, %v983
        %v991 = vsel %vm986, %v983, %v985
        %v993 = vsel %vm317, %v973, 0
        %v996 = vsel %vm321, %v987, 0
        %v999 = vsel %vm321, %v988, 0
        %v1002 = vsel %vm321, %v989, 0
        %v1005 = vsel %vm321, %v990, 0
        %v1008 = vsel %vm321, %v991, 0
        %1010 = vmatprep.subr.bf16.mxu0 %v999
        %1011 = vmatpush1.bf16.msra.mxu0 %v996
        %1012 = vmatprep.subr.bf16.mxu0 0
        %1013 = vmatpush1.bf16.msra.mxu0 0
        %1014 = vmatprep.subr.bf16.mxu0 0
        %1015 = vmatpush1.bf16.msra.mxu0 0
        %1016 = vmatprep.subr.bf16.mxu0 0
        %1017 = vmatpush1.bf16.msra.mxu0 0
        %1018 = vmatprep.subr.bf16.mxu0 0
        %1019 = vmatpush1.bf16.msra.mxu0 0
        %1020 = vmatprep.subr.bf16.mxu0 0
        %1021 = vmatpush1.bf16.msra.mxu0 0
        %1022 = vmatprep.subr.bf16.mxu0 0
        %1023 = vmatpush1.bf16.msra.mxu0 0
        %1024 = vmatprep.subr.bf16.mxu0 0
        %1025 = vmatpush1.bf16.msra.mxu0 0
        %1026 = vmatprep.subr.bf16.mxu0 0
        %1027 = vmatpush1.bf16.msra.mxu0 0
        %1028 = vmatprep.subr.bf16.mxu0 0
        %1029 = vmatpush1.bf16.msra.mxu0 0
        %1030 = vmatprep.subr.bf16.mxu0 0
        %1031 = vmatpush1.bf16.msra.mxu0 0
        %1032 = vmatprep.subr.bf16.mxu0 0
        %1033 = vmatpush1.bf16.msra.mxu0 0
        %1034 = vmatprep.subr.bf16.mxu0 0
        %1035 = vmatpush1.bf16.msra.mxu0 0
        %1036 = vmatprep.subr.bf16.mxu0 0
        %1037 = vmatpush1.bf16.msra.mxu0 0
        %1038 = vmatprep.subr.bf16.mxu0 0
        %1039 = vmatpush1.bf16.msra.mxu0 0
        %1040 = vmatprep.subr.bf16.mxu0 0
        %1041 = vmatpush1.bf16.msra.mxu0 0
        %1042 = vmatprep.mubr.bf16.mxu0 0
        %1043 = vmatmul.mubr.bf16.gmra.mrb[0].mxu0 %v993
        %v1044 = vpop.f32.mrb[0].mxu0
        %v1045 = vadd.f32 0.0, %v1044
        %v1046 = vpop.f32.mrb[0].mxu0
        %v1047 = vadd.f32 0.0, %v1046
        %v1048 = vpop.f32.mrb[0].mxu0
        %v1049 = vadd.f32 0.0, %v1048
        %v1050 = vpop.f32.mrb[0].mxu0
        %v1051 = vadd.f32 0.0, %v1050
        %1052 = vdwg.mxu0
        %1053 = vmatprep.subr.bf16.mxu0 %v1005
        %1054 = vmatpush1.bf16.msra.mxu0 %v1002
        %1055 = vmatprep.subr.bf16.mxu0 0
        %1056 = vmatpush1.bf16.msra.mxu0 0
        %1057 = vmatprep.subr.bf16.mxu0 0
        %1058 = vmatpush1.bf16.msra.mxu0 0
        %1059 = vmatprep.subr.bf16.mxu0 0
        %1060 = vmatpush1.bf16.msra.mxu0 0
        %1061 = vmatprep.subr.bf16.mxu0 0
        %1062 = vmatpush1.bf16.msra.mxu0 0
        %1063 = vmatprep.subr.bf16.mxu0 0
        %1064 = vmatpush1.bf16.msra.mxu0 0
        %1065 = vmatprep.subr.bf16.mxu0 0
        %1066 = vmatpush1.bf16.msra.mxu0 0
        %1067 = vmatprep.subr.bf16.mxu0 0
        %1068 = vmatpush1.bf16.msra.mxu0 0
        %1069 = vmatprep.subr.bf16.mxu0 0
        %1070 = vmatpush1.bf16.msra.mxu0 0
        %1071 = vmatprep.subr.bf16.mxu0 0
        %1072 = vmatpush1.bf16.msra.mxu0 0
        %1073 = vmatprep.subr.bf16.mxu0 0
        %1074 = vmatpush1.bf16.msra.mxu0 0
        %1075 = vmatprep.subr.bf16.mxu0 0
        %1076 = vmatpush1.bf16.msra.mxu0 0
        %1077 = vmatprep.subr.bf16.mxu0 0
        %1078 = vmatpush1.bf16.msra.mxu0 0
        %1079 = vmatprep.subr.bf16.mxu0 0
        %1080 = vmatpush1.bf16.msra.mxu0 0
        %1081 = vmatprep.subr.bf16.mxu0 0
        %1082 = vmatpush1.bf16.msra.mxu0 0
        %1083 = vmatprep.subr.bf16.mxu0 0
        %1084 = vmatpush1.bf16.msra.mxu0 0
        %1085 = vmatprep.mubr.bf16.mxu0 0
        %1086 = vmatmul.mubr.bf16.gmra.mrb[0].mxu0 %v993
        %v1087 = vpop.f32.mrb[0].mxu0
        %v1088 = vadd.f32 0.0, %v1087
        %v1089 = vpop.f32.mrb[0].mxu0
        %v1090 = vadd.f32 0.0, %v1089
        %v1091 = vpop.f32.mrb[0].mxu0
        %v1092 = vadd.f32 0.0, %v1091
        %v1093 = vpop.f32.mrb[0].mxu0
        %v1094 = vadd.f32 0.0, %v1093
        %1095 = vdwg.mxu0
        %1096 = vmatprep.subr.bf16.mxu0 0
        %1097 = vmatpush1.bf16.msra.mxu0 %v1008
        %1098 = vmatprep.subr.bf16.mxu0 0
        %1099 = vmatpush1.bf16.msra.mxu0 0
        %1100 = vmatprep.subr.bf16.mxu0 0
        %1101 = vmatpush1.bf16.msra.mxu0 0
        %1102 = vmatprep.subr.bf16.mxu0 0
        %1103 = vmatpush1.bf16.msra.mxu0 0
        %1104 = vmatprep.subr.bf16.mxu0 0
        %1105 = vmatpush1.bf16.msra.mxu0 0
        %1106 = vmatprep.subr.bf16.mxu0 0
        %1107 = vmatpush1.bf16.msra.mxu0 0
        %1108 = vmatprep.subr.bf16.mxu0 0
        %1109 = vmatpush1.bf16.msra.mxu0 0
        %1110 = vmatprep.subr.bf16.mxu0 0
        %1111 = vmatpush1.bf16.msra.mxu0 0
        %1112 = vmatprep.subr.bf16.mxu0 0
        %1113 = vmatpush1.bf16.msra.mxu0 0
        %1114 = vmatprep.subr.bf16.mxu0 0
        %1115 = vmatpush1.bf16.msra.mxu0 0
        %1116 = vmatprep.subr.bf16.mxu0 0
        %1117 = vmatpush1.bf16.msra.mxu0 0
        %1118 = vmatprep.subr.bf16.mxu0 0
        %1119 = vmatpush1.bf16.msra.mxu0 0
        %1120 = vmatprep.subr.bf16.mxu0 0
        %1121 = vmatpush1.bf16.msra.mxu0 0
        %1122 = vmatprep.subr.bf16.mxu0 0
        %1123 = vmatpush1.bf16.msra.mxu0 0
        %1124 = vmatprep.subr.bf16.mxu0 0
        %1125 = vmatpush1.bf16.msra.mxu0 0
        %1126 = vmatprep.subr.bf16.mxu0 0
        %1127 = vmatpush1.bf16.msra.mxu0 0
        %1128 = vmatprep.mubr.bf16.mxu0 0
        %1129 = vmatmul.mubr.bf16.gmra.mrb[0].mxu0 %v993
        %v1130 = vpop.f32.mrb[0].mxu0
        %v1131 = vadd.f32 0.0, %v1130
        %v1132 = vpop.f32.mrb[0].mxu0
        %v1133 = vpop.f32.mrb[0].mxu0
        %v1134 = vadd.f32 0.0, %v1133
        %v1135 = vpop.f32.mrb[0].mxu0
        %1136 = vdwg.mxu0
        %v1137 = vadd.f32 %v962, %v1045
        %v1138 = vadd.f32 %v963, %v1047
        %v1139 = vadd.f32 %v964, %v1088
        %v1140 = vadd.f32 %v965, %v1090
        %v1141 = vadd.f32 %v966, %v1131
        %v1142 = vadd.f32 %v967, %v1049
        %v1143 = vadd.f32 %v968, %v1051
        %v1144 = vadd.f32 %v969, %v1092
        %v1145 = vadd.f32 %v970, %v1094
        %v1146 = vadd.f32 %v971, %v1134
        %1147 = vrot.lane.b32.xlu0 %v281, 88
        %v1148 = vpop.permute.xlu0 %1147
        %1149 = vrot.lane.b32.xlu0 %v293, 106
        %v1150 = vpop.permute.xlu0 %1149
        %1151 = vrot.lane.b32.xlu0 %v294, 106
        %v1152 = vpop.permute.xlu0 %1151
        %1153 = vrot.lane.b32.xlu0 %v295, 106
        %v1154 = vpop.permute.xlu0 %1153
        %1155 = vrot.lane.b32.xlu0 %v296, 106
        %v1156 = vpop.permute.xlu0 %1155
        %1157 = vrot.lane.b32.xlu0 %v297, 106
        %v1158 = vpop.permute.xlu0 %1157
        %1159 = vrot.lane.b32.xlu0 %v298, 106
        %v1160 = vpop.permute.xlu0 %1159
        %vm1161 = vcmask 867328
        %v1162 = vsel %vm1161, %v1150, %v1152
        %v1163 = vsel %vm1161, %v1152, %v1154
        %v1164 = vsel %vm1161, %v1154, %v1156
        %v1165 = vsel %vm1161, %v1156, %v1158
        %v1166 = vsel %vm1161, %v1158, %v1160
        %v1168 = vsel %vm317, %v1148, 0
        %v1171 = vsel %vm321, %v1162, 0
        %v1174 = vsel %vm321, %v1163, 0
        %v1177 = vsel %vm321, %v1164, 0
        %v1180 = vsel %vm321, %v1165, 0
        %v1183 = vsel %vm321, %v1166, 0
        %1185 = vmatprep.subr.bf16.mxu0 %v1174
        %1186 = vmatpush1.bf16.msra.mxu0 %v1171
        %1187 = vmatprep.subr.bf16.mxu0 0
        %1188 = vmatpush1.bf16.msra.mxu0 0
        %1189 = vmatprep.subr.bf16.mxu0 0
        %1190 = vmatpush1.bf16.msra.mxu0 0
        %1191 = vmatprep.subr.bf16.mxu0 0
        %1192 = vmatpush1.bf16.msra.mxu0 0
        %1193 = vmatprep.subr.bf16.mxu0 0
        %1194 = vmatpush1.bf16.msra.mxu0 0
        %1195 = vmatprep.subr.bf16.mxu0 0
        %1196 = vmatpush1.bf16.msra.mxu0 0
        %1197 = vmatprep.subr.bf16.mxu0 0
        %1198 = vmatpush1.bf16.msra.mxu0 0
        %1199 = vmatprep.subr.bf16.mxu0 0
        %1200 = vmatpush1.bf16.msra.mxu0 0
        %1201 = vmatprep.subr.bf16.mxu0 0
        %1202 = vmatpush1.bf16.msra.mxu0 0
        %1203 = vmatprep.subr.bf16.mxu0 0
        %1204 = vmatpush1.bf16.msra.mxu0 0
        %1205 = vmatprep.subr.bf16.mxu0 0
        %1206 = vmatpush1.bf16.msra.mxu0 0
        %1207 = vmatprep.subr.bf16.mxu0 0
        %1208 = vmatpush1.bf16.msra.mxu0 0
        %1209 = vmatprep.subr.bf16.mxu0 0
        %1210 = vmatpush1.bf16.msra.mxu0 0
        %1211 = vmatprep.subr.bf16.mxu0 0
        %1212 = vmatpush1.bf16.msra.mxu0 0
        %1213 = vmatprep.subr.bf16.mxu0 0
        %1214 = vmatpush1.bf16.msra.mxu0 0
        %1215 = vmatprep.subr.bf16.mxu0 0
        %1216 = vmatpush1.bf16.msra.mxu0 0
        %1217 = vmatprep.mubr.bf16.mxu0 0
        %1218 = vmatmul.mubr.bf16.gmra.mrb[0].mxu0 %v1168
        %v1219 = vpop.f32.mrb[0].mxu0
        %v1220 = vadd.f32 0.0, %v1219
        %v1221 = vpop.f32.mrb[0].mxu0
        %v1222 = vadd.f32 0.0, %v1221
        %v1223 = vpop.f32.mrb[0].mxu0
        %v1224 = vadd.f32 0.0, %v1223
        %v1225 = vpop.f32.mrb[0].mxu0
        %v1226 = vadd.f32 0.0, %v1225
        %1227 = vdwg.mxu0
        %1228 = vmatprep.subr.bf16.mxu0 %v1180
        %1229 = vmatpush1.bf16.msra.mxu0 %v1177
        %1230 = vmatprep.subr.bf16.mxu0 0
        %1231 = vmatpush1.bf16.msra.mxu0 0
        %1232 = vmatprep.subr.bf16.mxu0 0
        %1233 = vmatpush1.bf16.msra.mxu0 0
        %1234 = vmatprep.subr.bf16.mxu0 0
        %1235 = vmatpush1.bf16.msra.mxu0 0
        %1236 = vmatprep.subr.bf16.mxu0 0
        %1237 = vmatpush1.bf16.msra.mxu0 0
        %1238 = vmatprep.subr.bf16.mxu0 0
        %1239 = vmatpush1.bf16.msra.mxu0 0
        %1240 = vmatprep.subr.bf16.mxu0 0
        %1241 = vmatpush1.bf16.msra.mxu0 0
        %1242 = vmatprep.subr.bf16.mxu0 0
        %1243 = vmatpush1.bf16.msra.mxu0 0
        %1244 = vmatprep.subr.bf16.mxu0 0
        %1245 = vmatpush1.bf16.msra.mxu0 0
        %1246 = vmatprep.subr.bf16.mxu0 0
        %1247 = vmatpush1.bf16.msra.mxu0 0
        %1248 = vmatprep.subr.bf16.mxu0 0
        %1249 = vmatpush1.bf16.msra.mxu0 0
        %1250 = vmatprep.subr.bf16.mxu0 0
        %1251 = vmatpush1.bf16.msra.mxu0 0
        %1252 = vmatprep.subr.bf16.mxu0 0
        %1253 = vmatpush1.bf16.msra.mxu0 0
        %1254 = vmatprep.subr.bf16.mxu0 0
        %1255 = vmatpush1.bf16.msra.mxu0 0
        %1256 = vmatprep.subr.bf16.mxu0 0
        %1257 = vmatpush1.bf16.msra.mxu0 0
        %1258 = vmatprep.subr.bf16.mxu0 0
        %1259 = vmatpush1.bf16.msra.mxu0 0
        %1260 = vmatprep.mubr.bf16.mxu0 0
        %1261 = vmatmul.mubr.bf16.gmra.mrb[0].mxu0 %v1168
        %v1262 = vpop.f32.mrb[0].mxu0
        %v1263 = vadd.f32 0.0, %v1262
        %v1264 = vpop.f32.mrb[0].mxu0
        %v1265 = vadd.f32 0.0, %v1264
        %v1266 = vpop.f32.mrb[0].mxu0
        %v1267 = vadd.f32 0.0, %v1266
        %v1268 = vpop.f32.mrb[0].mxu0
        %v1269 = vadd.f32 0.0, %v1268
        %1270 = vdwg.mxu0
        %1271 = vmatprep.subr.bf16.mxu0 0
        %1272 = vmatpush1.bf16.msra.mxu0 %v1183
        %1273 = vmatprep.subr.bf16.mxu0 0
        %1274 = vmatpush1.bf16.msra.mxu0 0
        %1275 = vmatprep.subr.bf16.mxu0 0
        %1276 = vmatpush1.bf16.msra.mxu0 0
        %1277 = vmatprep.subr.bf16.mxu0 0
        %1278 = vmatpush1.bf16.msra.mxu0 0
        %1279 = vmatprep.subr.bf16.mxu0 0
        %1280 = vmatpush1.bf16.msra.mxu0 0
        %1281 = vmatprep.subr.bf16.mxu0 0
        %1282 = vmatpush1.bf16.msra.mxu0 0
        %1283 = vmatprep.subr.bf16.mxu0 0
        %1284 = vmatpush1.bf16.msra.mxu0 0
        %1285 = vmatprep.subr.bf16.mxu0 0
        %1286 = vmatpush1.bf16.msra.mxu0 0
        %1287 = vmatprep.subr.bf16.mxu0 0
        %1288 = vmatpush1.bf16.msra.mxu0 0
        %1289 = vmatprep.subr.bf16.mxu0 0
        %1290 = vmatpush1.bf16.msra.mxu0 0
        %1291 = vmatprep.subr.bf16.mxu0 0
        %1292 = vmatpush1.bf16.msra.mxu0 0
        %1293 = vmatprep.subr.bf16.mxu0 0
        %1294 = vmatpush1.bf16.msra.mxu0 0
        %1295 = vmatprep.subr.bf16.mxu0 0
        %1296 = vmatpush1.bf16.msra.mxu0 0
        %1297 = vmatprep.subr.bf16.mxu0 0
        %1298 = vmatpush1.bf16.msra.mxu0 0
        %1299 = vmatprep.subr.bf16.mxu0 0
        %1300 = vmatpush1.bf16.msra.mxu0 0
        %1301 = vmatprep.subr.bf16.mxu0 0
        %1302 = vmatpush1.bf16.msra.mxu0 0
        %1303 = vmatprep.mubr.bf16.mxu0 0
        %1304 = vmatmul.mubr.bf16.gmra.mrb[0].mxu0 %v1168
        %v1305 = vpop.f32.mrb[0].mxu0
        %v1306 = vadd.f32 0.0, %v1305
        %v1307 = vpop.f32.mrb[0].mxu0
        %v1308 = vpop.f32.mrb[0].mxu0
        %v1309 = vadd.f32 0.0, %v1308
        %v1310 = vpop.f32.mrb[0].mxu0
        %1311 = vdwg.mxu0
        %v1312 = vadd.f32 %v1137, %v1220
        %v1313 = vadd.f32 %v1138, %v1222
        %v1314 = vadd.f32 %v1139, %v1263
        %v1315 = vadd.f32 %v1140, %v1265
        %v1316 = vadd.f32 %v1141, %v1306
        %v1317 = vadd.f32 %v1142, %v1224
        %v1318 = vadd.f32 %v1143, %v1226
        %v1319 = vadd.f32 %v1144, %v1267
        %v1320 = vadd.f32 %v1145, %v1269
        %v1321 = vadd.f32 %v1146, %v1309
        %1322 = vrot.lane.b32.xlu0 %v281, 80
        %v1323 = vpop.permute.xlu0 %1322
        %1324 = vrot.lane.b32.xlu0 %v293, 88
        %v1325 = vpop.permute.xlu0 %1324
        %1326 = vrot.lane.b32.xlu0 %v294, 88
        %v1327 = vpop.permute.xlu0 %1326
        %1328 = vrot.lane.b32.xlu0 %v295, 88
        %v1329 = vpop.permute.xlu0 %1328
        %1330 = vrot.lane.b32.xlu0 %v296, 88
        %v1331 = vpop.permute.xlu0 %1330
        %1332 = vrot.lane.b32.xlu0 %v297, 88
        %v1333 = vpop.permute.xlu0 %1332
        %1334 = vrot.lane.b32.xlu0 %v298, 88
        %v1335 = vpop.permute.xlu0 %1334
        %vm1336 = vcmask 719872
        %v1337 = vsel %vm1336, %v1325, %v1327
        %v1338 = vsel %vm1336, %v1327, %v1329
        %v1339 = vsel %vm1336, %v1329, %v1331
        %v1340 = vsel %vm1336, %v1331, %v1333
        %v1341 = vsel %vm1336, %v1333, %v1335
        %v1343 = vsel %vm317, %v1323, 0
        %v1346 = vsel %vm321, %v1337, 0
        %v1349 = vsel %vm321, %v1338, 0
        %v1352 = vsel %vm321, %v1339, 0
        %v1355 = vsel %vm321, %v1340, 0
        %v1358 = vsel %vm321, %v1341, 0
        %1360 = vmatprep.subr.bf16.mxu0 %v1349
        %1361 = vmatpush1.bf16.msra.mxu0 %v1346
        %1362 = vmatprep.subr.bf16.mxu0 0
        %1363 = vmatpush1.bf16.msra.mxu0 0
        %1364 = vmatprep.subr.bf16.mxu0 0
        %1365 = vmatpush1.bf16.msra.mxu0 0
        %1366 = vmatprep.subr.bf16.mxu0 0
        %1367 = vmatpush1.bf16.msra.mxu0 0
        %1368 = vmatprep.subr.bf16.mxu0 0
        %1369 = vmatpush1.bf16.msra.mxu0 0
        %1370 = vmatprep.subr.bf16.mxu0 0
        %1371 = vmatpush1.bf16.msra.mxu0 0
        %1372 = vmatprep.subr.bf16.mxu0 0
        %1373 = vmatpush1.bf16.msra.mxu0 0
        %1374 = vmatprep.subr.bf16.mxu0 0
        %1375 = vmatpush1.bf16.msra.mxu0 0
        %1376 = vmatprep.subr.bf16.mxu0 0
        %1377 = vmatpush1.bf16.msra.mxu0 0
        %1378 = vmatprep.subr.bf16.mxu0 0
        %1379 = vmatpush1.bf16.msra.mxu0 0
        %1380 = vmatprep.subr.bf16.mxu0 0
        %1381 = vmatpush1.bf16.msra.mxu0 0
        %1382 = vmatprep.subr.bf16.mxu0 0
        %1383 = vmatpush1.bf16.msra.mxu0 0
        %1384 = vmatprep.subr.bf16.mxu0 0
        %1385 = vmatpush1.bf16.msra.mxu0 0
        %1386 = vmatprep.subr.bf16.mxu0 0
        %1387 = vmatpush1.bf16.msra.mxu0 0
        %1388 = vmatprep.subr.bf16.mxu0 0
        %1389 = vmatpush1.bf16.msra.mxu0 0
        %1390 = vmatprep.subr.bf16.mxu0 0
        %1391 = vmatpush1.bf16.msra.mxu0 0
        %1392 = vmatprep.mubr.bf16.mxu0 0
        %1393 = vmatmul.mubr.bf16.gmra.mrb[0].mxu0 %v1343
        %v1394 = vpop.f32.mrb[0].mxu0
        %v1395 = vadd.f32 0.0, %v1394
        %v1396 = vpop.f32.mrb[0].mxu0
        %v1397 = vadd.f32 0.0, %v1396
        %v1398 = vpop.f32.mrb[0].mxu0
        %v1399 = vadd.f32 0.0, %v1398
        %v1400 = vpop.f32.mrb[0].mxu0
        %v1401 = vadd.f32 0.0, %v1400
        %1402 = vdwg.mxu0
        %1403 = vmatprep.subr.bf16.mxu0 %v1355
        %1404 = vmatpush1.bf16.msra.mxu0 %v1352
        %1405 = vmatprep.subr.bf16.mxu0 0
        %1406 = vmatpush1.bf16.msra.mxu0 0
        %1407 = vmatprep.subr.bf16.mxu0 0
        %1408 = vmatpush1.bf16.msra.mxu0 0
        %1409 = vmatprep.subr.bf16.mxu0 0
        %1410 = vmatpush1.bf16.msra.mxu0 0
        %1411 = vmatprep.subr.bf16.mxu0 0
        %1412 = vmatpush1.bf16.msra.mxu0 0
        %1413 = vmatprep.subr.bf16.mxu0 0
        %1414 = vmatpush1.bf16.msra.mxu0 0
        %1415 = vmatprep.subr.bf16.mxu0 0
        %1416 = vmatpush1.bf16.msra.mxu0 0
        %1417 = vmatprep.subr.bf16.mxu0 0
        %1418 = vmatpush1.bf16.msra.mxu0 0
        %1419 = vmatprep.subr.bf16.mxu0 0
        %1420 = vmatpush1.bf16.msra.mxu0 0
        %1421 = vmatprep.subr.bf16.mxu0 0
        %1422 = vmatpush1.bf16.msra.mxu0 0
        %1423 = vmatprep.subr.bf16.mxu0 0
        %1424 = vmatpush1.bf16.msra.mxu0 0
        %1425 = vmatprep.subr.bf16.mxu0 0
        %1426 = vmatpush1.bf16.msra.mxu0 0
        %1427 = vmatprep.subr.bf16.mxu0 0
        %1428 = vmatpush1.bf16.msra.mxu0 0
        %1429 = vmatprep.subr.bf16.mxu0 0
        %1430 = vmatpush1.bf16.msra.mxu0 0
        %1431 = vmatprep.subr.bf16.mxu0 0
        %1432 = vmatpush1.bf16.msra.mxu0 0
        %1433 = vmatprep.subr.bf16.mxu0 0
        %1434 = vmatpush1.bf16.msra.mxu0 0
        %1435 = vmatprep.mubr.bf16.mxu0 0
        %1436 = vmatmul.mubr.bf16.gmra.mrb[0].mxu0 %v1343
        %v1437 = vpop.f32.mrb[0].mxu0
        %v1438 = vadd.f32 0.0, %v1437
        %v1439 = vpop.f32.mrb[0].mxu0
        %v1440 = vadd.f32 0.0, %v1439
        %v1441 = vpop.f32.mrb[0].mxu0
        %v1442 = vadd.f32 0.0, %v1441
        %v1443 = vpop.f32.mrb[0].mxu0
        %v1444 = vadd.f32 0.0, %v1443
        %1445 = vdwg.mxu0
        %1446 = vmatprep.subr.bf16.mxu0 0
        %1447 = vmatpush1.bf16.msra.mxu0 %v1358
        %1448 = vmatprep.subr.bf16.mxu0 0
        %1449 = vmatpush1.bf16.msra.mxu0 0
        %1450 = vmatprep.subr.bf16.mxu0 0
        %1451 = vmatpush1.bf16.msra.mxu0 0
        %1452 = vmatprep.subr.bf16.mxu0 0
        %1453 = vmatpush1.bf16.msra.mxu0 0
        %1454 = vmatprep.subr.bf16.mxu0 0
        %1455 = vmatpush1.bf16.msra.mxu0 0
        %1456 = vmatprep.subr.bf16.mxu0 0
        %1457 = vmatpush1.bf16.msra.mxu0 0
        %1458 = vmatprep.subr.bf16.mxu0 0
        %1459 = vmatpush1.bf16.msra.mxu0 0
        %1460 = vmatprep.subr.bf16.mxu0 0
        %1461 = vmatpush1.bf16.msra.mxu0 0
        %1462 = vmatprep.subr.bf16.mxu0 0
        %1463 = vmatpush1.bf16.msra.mxu0 0
        %1464 = vmatprep.subr.bf16.mxu0 0
        %1465 = vmatpush1.bf16.msra.mxu0 0
        %1466 = vmatprep.subr.bf16.mxu0 0
        %1467 = vmatpush1.bf16.msra.mxu0 0
        %1468 = vmatprep.subr.bf16.mxu0 0
        %1469 = vmatpush1.bf16.msra.mxu0 0
        %1470 = vmatprep.subr.bf16.mxu0 0
        %1471 = vmatpush1.bf16.msra.mxu0 0
        %1472 = vmatprep.subr.bf16.mxu0 0
        %1473 = vmatpush1.bf16.msra.mxu0 0
        %1474 = vmatprep.subr.bf16.mxu0 0
        %1475 = vmatpush1.bf16.msra.mxu0 0
        %1476 = vmatprep.subr.bf16.mxu0 0
        %1477 = vmatpush1.bf16.msra.mxu0 0
        %1478 = vmatprep.mubr.bf16.mxu0 0
        %1479 = vmatmul.mubr.bf16.gmra.mrb[0].mxu0 %v1343
        %v1480 = vpop.f32.mrb[0].mxu0
        %v1481 = vadd.f32 0.0, %v1480
        %v1482 = vpop.f32.mrb[0].mxu0
        %v1483 = vpop.f32.mrb[0].mxu0
        %v1484 = vadd.f32 0.0, %v1483
        %v1485 = vpop.f32.mrb[0].mxu0
        %1486 = vdwg.mxu0
        %v1487 = vadd.f32 %v1312, %v1395
        %v1488 = vadd.f32 %v1313, %v1397
        %v1489 = vadd.f32 %v1314, %v1438
        %v1490 = vadd.f32 %v1315, %v1440
        %v1491 = vadd.f32 %v1316, %v1481
        %v1492 = vadd.f32 %v1317, %v1399
        %v1493 = vadd.f32 %v1318, %v1401
        %v1494 = vadd.f32 %v1319, %v1442
        %v1495 = vadd.f32 %v1320, %v1444
        %v1496 = vadd.f32 %v1321, %v1484
        %1497 = vrot.lane.b32.xlu0 %v281, 72
        %v1498 = vpop.permute.xlu0 %1497
        %1499 = vrot.lane.b32.xlu0 %v293, 87
        %v1500 = vpop.permute.xlu0 %1499
        %1501 = vrot.lane.b32.xlu0 %v294, 87
        %v1502 = vpop.permute.xlu0 %1501
        %1503 = vrot.lane.b32.xlu0 %v295, 87
        %v1504 = vpop.permute.xlu0 %1503
        %1505 = vrot.lane.b32.xlu0 %v296, 87
        %v1506 = vpop.permute.xlu0 %1505
        %1507 = vrot.lane.b32.xlu0 %v297, 87
        %v1508 = vpop.permute.xlu0 %1507
        %1509 = vrot.lane.b32.xlu0 %v298, 87
        %v1510 = vpop.permute.xlu0 %1509
        %vm1511 = vcmask 711680
        %v1512 = vsel %vm1511, %v1500, %v1502
        %v1513 = vsel %vm1511, %v1502, %v1504
        %v1514 = vsel %vm1511, %v1504, %v1506
        %v1515 = vsel %vm1511, %v1506, %v1508
        %v1516 = vsel %vm1511, %v1508, %v1510
        %v1518 = vsel %vm317, %v1498, 0
        %v1521 = vsel %vm321, %v1512, 0
        %v1524 = vsel %vm321, %v1513, 0
        %v1527 = vsel %vm321, %v1514, 0
        %v1530 = vsel %vm321, %v1515, 0
        %v1533 = vsel %vm321, %v1516, 0
        %1535 = vmatprep.subr.bf16.mxu0 %v1524
        %1536 = vmatpush1.bf16.msra.mxu0 %v1521
        %1537 = vmatprep.subr.bf16.mxu0 0
        %1538 = vmatpush1.bf16.msra.mxu0 0
        %1539 = vmatprep.subr.bf16.mxu0 0
        %1540 = vmatpush1.bf16.msra.mxu0 0
        %1541 = vmatprep.subr.bf16.mxu0 0
        %1542 = vmatpush1.bf16.msra.mxu0 0
        %1543 = vmatprep.subr.bf16.mxu0 0
        %1544 = vmatpush1.bf16.msra.mxu0 0
        %1545 = vmatprep.subr.bf16.mxu0 0
        %1546 = vmatpush1.bf16.msra.mxu0 0
        %1547 = vmatprep.subr.bf16.mxu0 0
        %1548 = vmatpush1.bf16.msra.mxu0 0
        %1549 = vmatprep.subr.bf16.mxu0 0
        %1550 = vmatpush1.bf16.msra.mxu0 0
        %1551 = vmatprep.subr.bf16.mxu0 0
        %1552 = vmatpush1.bf16.msra.mxu0 0
        %1553 = vmatprep.subr.bf16.mxu0 0
        %1554 = vmatpush1.bf16.msra.mxu0 0
        %1555 = vmatprep.subr.bf16.mxu0 0
        %1556 = vmatpush1.bf16.msra.mxu0 0
        %1557 = vmatprep.subr.bf16.mxu0 0
        %1558 = vmatpush1.bf16.msra.mxu0 0
        %1559 = vmatprep.subr.bf16.mxu0 0
        %1560 = vmatpush1.bf16.msra.mxu0 0
        %1561 = vmatprep.subr.bf16.mxu0 0
        %1562 = vmatpush1.bf16.msra.mxu0 0
        %1563 = vmatprep.subr.bf16.mxu0 0
        %1564 = vmatpush1.bf16.msra.mxu0 0
        %1565 = vmatprep.subr.bf16.mxu0 0
        %1566 = vmatpush1.bf16.msra.mxu0 0
        %1567 = vmatprep.mubr.bf16.mxu0 0
        %1568 = vmatmul.mubr.bf16.gmra.mrb[0].mxu0 %v1518
        %v1569 = vpop.f32.mrb[0].mxu0
        %v1570 = vadd.f32 0.0, %v1569
        %v1571 = vpop.f32.mrb[0].mxu0
        %v1572 = vadd.f32 0.0, %v1571
        %v1573 = vpop.f32.mrb[0].mxu0
        %v1574 = vadd.f32 0.0, %v1573
        %v1575 = vpop.f32.mrb[0].mxu0
        %v1576 = vadd.f32 0.0, %v1575
        %1577 = vdwg.mxu0
        %1578 = vmatprep.subr.bf16.mxu0 %v1530
        %1579 = vmatpush1.bf16.msra.mxu0 %v1527
        %1580 = vmatprep.subr.bf16.mxu0 0
        %1581 = vmatpush1.bf16.msra.mxu0 0
        %1582 = vmatprep.subr.bf16.mxu0 0
        %1583 = vmatpush1.bf16.msra.mxu0 0
        %1584 = vmatprep.subr.bf16.mxu0 0
        %1585 = vmatpush1.bf16.msra.mxu0 0
        %1586 = vmatprep.subr.bf16.mxu0 0
        %1587 = vmatpush1.bf16.msra.mxu0 0
        %1588 = vmatprep.subr.bf16.mxu0 0
        %1589 = vmatpush1.bf16.msra.mxu0 0
        %1590 = vmatprep.subr.bf16.mxu0 0
        %1591 = vmatpush1.bf16.msra.mxu0 0
        %1592 = vmatprep.subr.bf16.mxu0 0
        %1593 = vmatpush1.bf16.msra.mxu0 0
        %1594 = vmatprep.subr.bf16.mxu0 0
        %1595 = vmatpush1.bf16.msra.mxu0 0
        %1596 = vmatprep.subr.bf16.mxu0 0
        %1597 = vmatpush1.bf16.msra.mxu0 0
        %1598 = vmatprep.subr.bf16.mxu0 0
        %1599 = vmatpush1.bf16.msra.mxu0 0
        %1600 = vmatprep.subr.bf16.mxu0 0
        %1601 = vmatpush1.bf16.msra.mxu0 0
        %1602 = vmatprep.subr.bf16.mxu0 0
        %1603 = vmatpush1.bf16.msra.mxu0 0
        %1604 = vmatprep.subr.bf16.mxu0 0
        %1605 = vmatpush1.bf16.msra.mxu0 0
        %1606 = vmatprep.subr.bf16.mxu0 0
        %1607 = vmatpush1.bf16.msra.mxu0 0
        %1608 = vmatprep.subr.bf16.mxu0 0
        %1609 = vmatpush1.bf16.msra.mxu0 0
        %1610 = vmatprep.mubr.bf16.mxu0 0
        %1611 = vmatmul.mubr.bf16.gmra.mrb[0].mxu0 %v1518
        %v1612 = vpop.f32.mrb[0].mxu0
        %v1613 = vadd.f32 0.0, %v1612
        %v1614 = vpop.f32.mrb[0].mxu0
        %v1615 = vadd.f32 0.0, %v1614
        %v1616 = vpop.f32.mrb[0].mxu0
        %v1617 = vadd.f32 0.0, %v1616
        %v1618 = vpop.f32.mrb[0].mxu0
        %v1619 = vadd.f32 0.0, %v1618
        %1620 = vdwg.mxu0
        %1621 = vmatprep.subr.bf16.mxu0 0
        %1622 = vmatpush1.bf16.msra.mxu0 %v1533
        %1623 = vmatprep.subr.bf16.mxu0 0
        %1624 = vmatpush1.bf16.msra.mxu0 0
        %1625 = vmatprep.subr.bf16.mxu0 0
        %1626 = vmatpush1.bf16.msra.mxu0 0
        %1627 = vmatprep.subr.bf16.mxu0 0
        %1628 = vmatpush1.bf16.msra.mxu0 0
        %1629 = vmatprep.subr.bf16.mxu0 0
        %1630 = vmatpush1.bf16.msra.mxu0 0
        %1631 = vmatprep.subr.bf16.mxu0 0
        %1632 = vmatpush1.bf16.msra.mxu0 0
        %1633 = vmatprep.subr.bf16.mxu0 0
        %1634 = vmatpush1.bf16.msra.mxu0 0
        %1635 = vmatprep.subr.bf16.mxu0 0
        %1636 = vmatpush1.bf16.msra.mxu0 0
        %1637 = vmatprep.subr.bf16.mxu0 0
        %1638 = vmatpush1.bf16.msra.mxu0 0
        %1639 = vmatprep.subr.bf16.mxu0 0
        %1640 = vmatpush1.bf16.msra.mxu0 0
        %1641 = vmatprep.subr.bf16.mxu0 0
        %1642 = vmatpush1.bf16.msra.mxu0 0
        %1643 = vmatprep.subr.bf16.mxu0 0
        %1644 = vmatpush1.bf16.msra.mxu0 0
        %1645 = vmatprep.subr.bf16.mxu0 0
        %1646 = vmatpush1.bf16.msra.mxu0 0
        %1647 = vmatprep.subr.bf16.mxu0 0
        %1648 = vmatpush1.bf16.msra.mxu0 0
        %1649 = vmatprep.subr.bf16.mxu0 0
        %1650 = vmatpush1.bf16.msra.mxu0 0
        %1651 = vmatprep.subr.bf16.mxu0 0
        %1652 = vmatpush1.bf16.msra.mxu0 0
        %1653 = vmatprep.mubr.bf16.mxu0 0
        %1654 = vmatmul.mubr.bf16.gmra.mrb[0].mxu0 %v1518
        %v1655 = vpop.f32.mrb[0].mxu0
        %v1656 = vadd.f32 0.0, %v1655
        %v1657 = vpop.f32.mrb[0].mxu0
        %v1658 = vpop.f32.mrb[0].mxu0
        %v1659 = vadd.f32 0.0, %v1658
        %v1660 = vpop.f32.mrb[0].mxu0
        %1661 = vdwg.mxu0
        %v1662 = vadd.f32 %v1487, %v1570
        %v1663 = vadd.f32 %v1488, %v1572
        %v1664 = vadd.f32 %v1489, %v1613
        %v1665 = vadd.f32 %v1490, %v1615
        %v1666 = vadd.f32 %v1491, %v1656
        %v1667 = vadd.f32 %v1492, %v1574
        %v1668 = vadd.f32 %v1493, %v1576
        %v1669 = vadd.f32 %v1494, %v1617
        %v1670 = vadd.f32 %v1495, %v1619
        %v1671 = vadd.f32 %v1496, %v1659
        %1672 = vrot.lane.b32.xlu0 %v281, 64
        %v1673 = vpop.permute.xlu0 %1672
        %1674 = vrot.lane.b32.xlu0 %v293, 86
        %v1675 = vpop.permute.xlu0 %1674
        %1676 = vrot.lane.b32.xlu0 %v294, 86
        %v1677 = vpop.permute.xlu0 %1676
        %1678 = vrot.lane.b32.xlu0 %v295, 86
        %v1679 = vpop.permute.xlu0 %1678
        %1680 = vrot.lane.b32.xlu0 %v296, 86
        %v1681 = vpop.permute.xlu0 %1680
        %1682 = vrot.lane.b32.xlu0 %v297, 86
        %v1683 = vpop.permute.xlu0 %1682
        %1684 = vrot.lane.b32.xlu0 %v298, 86
        %v1685 = vpop.permute.xlu0 %1684
        %vm1686 = vcmask 703488
        %v1687 = vsel %vm1686, %v1675, %v1677
        %v1688 = vsel %vm1686, %v1677, %v1679
        %v1689 = vsel %vm1686, %v1679, %v1681
        %v1690 = vsel %vm1686, %v1681, %v1683
        %v1691 = vsel %vm1686, %v1683, %v1685
        %v1693 = vsel %vm317, %v1673, 0
        %v1696 = vsel %vm321, %v1687, 0
        %v1699 = vsel %vm321, %v1688, 0
        %v1702 = vsel %vm321, %v1689, 0
        %v1705 = vsel %vm321, %v1690, 0
        %v1708 = vsel %vm321, %v1691, 0
        %1710 = vmatprep.subr.bf16.mxu0 %v1699
        %1711 = vmatpush1.bf16.msra.mxu0 %v1696
        %1712 = vmatprep.subr.bf16.mxu0 0
        %1713 = vmatpush1.bf16.msra.mxu0 0
        %1714 = vmatprep.subr.bf16.mxu0 0
        %1715 = vmatpush1.bf16.msra.mxu0 0
        %1716 = vmatprep.subr.bf16.mxu0 0
        %1717 = vmatpush1.bf16.msra.mxu0 0
        %1718 = vmatprep.subr.bf16.mxu0 0
        %1719 = vmatpush1.bf16.msra.mxu0 0
        %1720 = vmatprep.subr.bf16.mxu0 0
        %1721 = vmatpush1.bf16.msra.mxu0 0
        %1722 = vmatprep.subr.bf16.mxu0 0
        %1723 = vmatpush1.bf16.msra.mxu0 0
        %1724 = vmatprep.subr.bf16.mxu0 0
        %1725 = vmatpush1.bf16.msra.mxu0 0
        %1726 = vmatprep.subr.bf16.mxu0 0
        %1727 = vmatpush1.bf16.msra.mxu0 0
        %1728 = vmatprep.subr.bf16.mxu0 0
        %1729 = vmatpush1.bf16.msra.mxu0 0
        %1730 = vmatprep.subr.bf16.mxu0 0
        %1731 = vmatpush1.bf16.msra.mxu0 0
        %1732 = vmatprep.subr.bf16.mxu0 0
        %1733 = vmatpush1.bf16.msra.mxu0 0
        %1734 = vmatprep.subr.bf16.mxu0 0
        %1735 = vmatpush1.bf16.msra.mxu0 0
        %1736 = vmatprep.subr.bf16.mxu0 0
        %1737 = vmatpush1.bf16.msra.mxu0 0
        %1738 = vmatprep.subr.bf16.mxu0 0
        %1739 = vmatpush1.bf16.msra.mxu0 0
        %1740 = vmatprep.subr.bf16.mxu0 0
        %1741 = vmatpush1.bf16.msra.mxu0 0
        %1742 = vmatprep.mubr.bf16.mxu0 0
        %1743 = vmatmul.mubr.bf16.gmra.mrb[0].mxu0 %v1693
        %v1744 = vpop.f32.mrb[0].mxu0
        %v1745 = vadd.f32 0.0, %v1744
        %v1746 = vpop.f32.mrb[0].mxu0
        %v1747 = vadd.f32 0.0, %v1746
        %v1748 = vpop.f32.mrb[0].mxu0
        %v1749 = vadd.f32 0.0, %v1748
        %v1750 = vpop.f32.mrb[0].mxu0
        %v1751 = vadd.f32 0.0, %v1750
        %1752 = vdwg.mxu0
        %1753 = vmatprep.subr.bf16.mxu0 %v1705
        %1754 = vmatpush1.bf16.msra.mxu0 %v1702
        %1755 = vmatprep.subr.bf16.mxu0 0
        %1756 = vmatpush1.bf16.msra.mxu0 0
        %1757 = vmatprep.subr.bf16.mxu0 0
        %1758 = vmatpush1.bf16.msra.mxu0 0
        %1759 = vmatprep.subr.bf16.mxu0 0
        %1760 = vmatpush1.bf16.msra.mxu0 0
        %1761 = vmatprep.subr.bf16.mxu0 0
        %1762 = vmatpush1.bf16.msra.mxu0 0
        %1763 = vmatprep.subr.bf16.mxu0 0
        %1764 = vmatpush1.bf16.msra.mxu0 0
        %1765 = vmatprep.subr.bf16.mxu0 0
        %1766 = vmatpush1.bf16.msra.mxu0 0
        %1767 = vmatprep.subr.bf16.mxu0 0
        %1768 = vmatpush1.bf16.msra.mxu0 0
        %1769 = vmatprep.subr.bf16.mxu0 0
        %1770 = vmatpush1.bf16.msra.mxu0 0
        %1771 = vmatprep.subr.bf16.mxu0 0
        %1772 = vmatpush1.bf16.msra.mxu0 0
        %1773 = vmatprep.subr.bf16.mxu0 0
        %1774 = vmatpush1.bf16.msra.mxu0 0
        %1775 = vmatprep.subr.bf16.mxu0 0
        %1776 = vmatpush1.bf16.msra.mxu0 0
        %1777 = vmatprep.subr.bf16.mxu0 0
        %1778 = vmatpush1.bf16.msra.mxu0 0
        %1779 = vmatprep.subr.bf16.mxu0 0
        %1780 = vmatpush1.bf16.msra.mxu0 0
        %1781 = vmatprep.subr.bf16.mxu0 0
        %1782 = vmatpush1.bf16.msra.mxu0 0
        %1783 = vmatprep.subr.bf16.mxu0 0
        %1784 = vmatpush1.bf16.msra.mxu0 0
        %1785 = vmatprep.mubr.bf16.mxu0 0
        %1786 = vmatmul.mubr.bf16.gmra.mrb[0].mxu0 %v1693
        %v1787 = vpop.f32.mrb[0].mxu0
        %v1788 = vadd.f32 0.0, %v1787
        %v1789 = vpop.f32.mrb[0].mxu0
        %v1790 = vadd.f32 0.0, %v1789
        %v1791 = vpop.f32.mrb[0].mxu0
        %v1792 = vadd.f32 0.0, %v1791
        %v1793 = vpop.f32.mrb[0].mxu0
        %v1794 = vadd.f32 0.0, %v1793
        %1795 = vdwg.mxu0
        %1796 = vmatprep.subr.bf16.mxu0 0
        %1797 = vmatpush1.bf16.msra.mxu0 %v1708
        %1798 = vmatprep.subr.bf16.mxu0 0
        %1799 = vmatpush1.bf16.msra.mxu0 0
        %1800 = vmatprep.subr.bf16.mxu0 0
        %1801 = vmatpush1.bf16.msra.mxu0 0
        %1802 = vmatprep.subr.bf16.mxu0 0
        %1803 = vmatpush1.bf16.msra.mxu0 0
        %1804 = vmatprep.subr.bf16.mxu0 0
        %1805 = vmatpush1.bf16.msra.mxu0 0
        %1806 = vmatprep.subr.bf16.mxu0 0
        %1807 = vmatpush1.bf16.msra.mxu0 0
        %1808 = vmatprep.subr.bf16.mxu0 0
        %1809 = vmatpush1.bf16.msra.mxu0 0
        %1810 = vmatprep.subr.bf16.mxu0 0
        %1811 = vmatpush1.bf16.msra.mxu0 0
        %1812 = vmatprep.subr.bf16.mxu0 0
        %1813 = vmatpush1.bf16.msra.mxu0 0
        %1814 = vmatprep.subr.bf16.mxu0 0
        %1815 = vmatpush1.bf16.msra.mxu0 0
        %1816 = vmatprep.subr.bf16.mxu0 0
        %1817 = vmatpush1.bf16.msra.mxu0 0
        %1818 = vmatprep.subr.bf16.mxu0 0
        %1819 = vmatpush1.bf16.msra.mxu0 0
        %1820 = vmatprep.subr.bf16.mxu0 0
        %1821 = vmatpush1.bf16.msra.mxu0 0
        %1822 = vmatprep.subr.bf16.mxu0 0
        %1823 = vmatpush1.bf16.msra.mxu0 0
        %1824 = vmatprep.subr.bf16.mxu0 0
        %1825 = vmatpush1.bf16.msra.mxu0 0
        %1826 = vmatprep.subr.bf16.mxu0 0
        %1827 = vmatpush1.bf16.msra.mxu0 0
        %1828 = vmatprep.mubr.bf16.mxu0 0
        %1829 = vmatmul.mubr.bf16.gmra.mrb[0].mxu0 %v1693
        %v1830 = vpop.f32.mrb[0].mxu0
        %v1831 = vadd.f32 0.0, %v1830
        %v1832 = vpop.f32.mrb[0].mxu0
        %v1833 = vpop.f32.mrb[0].mxu0
        %v1834 = vadd.f32 0.0, %v1833
        %v1835 = vpop.f32.mrb[0].mxu0
        %1836 = vdwg.mxu0
        %v1837 = vadd.f32 %v1662, %v1745
        %v1838 = vadd.f32 %v1663, %v1747
        %v1839 = vadd.f32 %v1664, %v1788
        %v1840 = vadd.f32 %v1665, %v1790
        %v1841 = vadd.f32 %v1666, %v1831
        %v1842 = vadd.f32 %v1667, %v1749
        %v1843 = vadd.f32 %v1668, %v1751
        %v1844 = vadd.f32 %v1669, %v1792
        %v1845 = vadd.f32 %v1670, %v1794
        %v1846 = vadd.f32 %v1671, %v1834
        %v1847 = vld [vmem:[%s5] sm:$0x1f]
        %v1848 = vunpack.c.l.bf16 %v1847
        %v1849 = vunpack.c.h.bf16 %v1847
        %v1850 = vld [vmem:[%s2] sm:$0xff]
        %v1851 = vld [vmem:[%s2 + $0x8] sm:$0xff]
        %1853 = vset.pattern.permute.xlu0 0
        %1854 = vperm.xlu0 %1853, %v1850
        %v1855 = vpop.permute.xlu0 %1854
        %1858 = vset.pattern.permute.xlu0 0
        %1859 = vperm.xlu0 %1858, %v1851
        %v1860 = vpop.permute.xlu0 %1859
        %v1862 = vadd.f32 %v1837, %v1855
        %v1863 = vadd.f32 %v1838, %v1855
        %v1864 = vadd.f32 %v1839, %v1855
        %v1865 = vadd.f32 %v1840, %v1855
        %v1866 = vadd.f32 %v1841, %v1855
        %v1867 = vadd.f32 %v1842, %v1860
        %v1868 = vadd.f32 %v1843, %v1860
        %v1869 = vadd.f32 %v1844, %v1860
        %v1870 = vadd.f32 %v1845, %v1860
        %v1871 = vadd.f32 %v1846, %v1860
        %v1872 = vmax.f32 %v1862, 0.0
        %v1873 = vmax.f32 %v1863, 0.0
        %v1874 = vmax.f32 %v1864, 0.0
        %v1875 = vmax.f32 %v1865, 0.0
        %v1876 = vmax.f32 %v1866, 0.0
        %v1877 = vmax.f32 %v1867, 0.0
        %v1878 = vmax.f32 %v1868, 0.0
        %v1879 = vmax.f32 %v1869, 0.0
        %v1880 = vmax.f32 %v1870, 0.0
        %v1881 = vmax.f32 %v1871, 0.0
        %v1884 = vlaneseq
        %v1885 = vshrl.u32 %v1884, 7
        %v1886 = vsub.s32 0, %v1885
        %v1887 = vrot.slane %v1848, %v1886
        %v1888 = vlaneseq
        %v1889 = vshrl.u32 %v1888, 7
        %v1890 = vsub.s32 2, %v1889
        %v1891 = vrot.slane %v1848, %v1890
        %v1892 = vlaneseq
        %v1893 = vshrl.u32 %v1892, 7
        %v1894 = vsub.s32 4, %v1893
        %v1895 = vrot.slane %v1848, %v1894
        %v1896 = vlaneseq
        %v1897 = vshrl.u32 %v1896, 7
        %v1898 = vsub.s32 6, %v1897
        %v1899 = vrot.slane %v1848, %v1898
        %v1900 = vlaneseq
        %v1901 = vshrl.u32 %v1900, 7
        %v1902 = vsub.s32 0, %v1901
        %v1903 = vrot.slane %v1849, %v1902
        %v1909 = vlaneseq
        %v1910 = vshrl.u32 %v1909, 7
        %v1911 = vsub.s32 0, %v1910
        %v1912 = vrot.slane %v1887, %v1911
        %v1913 = vlaneseq
        %v1914 = vshrl.u32 %v1913, 7
        %v1915 = vsub.s32 0, %v1914
        %v1916 = vrot.slane %v1891, %v1915
        %v1917 = vlaneseq
        %v1918 = vshrl.u32 %v1917, 7
        %v1919 = vsub.s32 0, %v1918
        %v1920 = vrot.slane %v1895, %v1919
        %v1921 = vlaneseq
        %v1922 = vshrl.u32 %v1921, 7
        %v1923 = vsub.s32 0, %v1922
        %v1924 = vrot.slane %v1899, %v1923
        %v1925 = vlaneseq
        %v1926 = vshrl.u32 %v1925, 7
        %v1927 = vsub.s32 0, %v1926
        %v1928 = vrot.slane %v1903, %v1927
        %v1929 = vmul.f32 %v1872, %v1912
        %v1930 = vmul.f32 %v1873, %v1916
        %v1931 = vmul.f32 %v1874, %v1920
        %v1932 = vmul.f32 %v1875, %v1924
        %v1933 = vmul.f32 %v1876, %v1928
        %v1934 = vmul.f32 %v1877, %v1912
        %v1935 = vmul.f32 %v1878, %v1916
        %v1936 = vmul.f32 %v1879, %v1920
        %v1937 = vmul.f32 %v1880, %v1924
        %v1938 = vmul.f32 %v1881, %v1928
        %v1939 = vpack.c.bf16 %v1934, %v1929
        %v1940 = vpack.c.bf16 %v1935, %v1930
        %v1941 = vpack.c.bf16 %v1936, %v1931
        %v1942 = vpack.c.bf16 %v1937, %v1932
        %v1943 = vpack.c.bf16 %v1938, %v1933
        %1944 = vst [vmem:[#allocation2] sm:$0xff] %v1939
        %1945 = vst [vmem:[#allocation2 + $0x8] sm:$0xff] %v1940
        %1946 = vst [vmem:[#allocation2 + $0x10] sm:$0xff] %v1941
        %1947 = vst [vmem:[#allocation2 + $0x18] sm:$0xff] %v1942
        %1948 = vst [vmem:[#allocation2 + $0x20] sm:$0xff] %v1943
        %v1949 = vld [vmem:[%s3] sm:$0x3]
        %v1950 = vld [vmem:[#allocation2] sm:$0xff]
        %v1951 = vld [vmem:[#allocation2 + $0x8] sm:$0xff]
        %v1952 = vld [vmem:[#allocation2 + $0x10] sm:$0xff]
        %v1953 = vld [vmem:[#allocation2 + $0x18] sm:$0xff]
        %v1954 = vld [vmem:[#allocation2] sm:$0xff]
        %v1955 = vld [vmem:[#allocation2 + $0x8] sm:$0xff]
        %v1956 = vld [vmem:[#allocation2 + $0x10] sm:$0xff]
        %v1957 = vld [vmem:[#allocation2 + $0x18] sm:$0xff]
        %v1958 = vld [vmem:[#allocation2 + $0x20] sm:$0xff]
        %v1961 = vunpack.c.l.s4 1983009808
        %v1962 = vunpack.c.0.s8 %v1961
        %v1963 = vlaneseq
        %v1964 = vshrl.u32 %v1963, 7
        %v1965 = vsub.s32 %v1962, %v1964
        %v1966 = vrot.slane %v1949, %v1965
        %1967 = vrot.lane.b32.xlu0 %v1966, 112
        %v1968 = vpop.permute.xlu0 %1967
        %1974 = vrot.lane.b32.xlu0 %v1954, 127
        %v1975 = vpop.permute.xlu0 %1974
        %1976 = vrot.lane.b32.xlu0 %v1955, 127
        %v1977 = vpop.permute.xlu0 %1976
        %1978 = vrot.lane.b32.xlu0 %v1956, 127
        %v1979 = vpop.permute.xlu0 %1978
        %1980 = vrot.lane.b32.xlu0 %v1957, 127
        %v1981 = vpop.permute.xlu0 %1980
        %1982 = vrot.lane.b32.xlu0 %v1958, 127
        %v1983 = vpop.permute.xlu0 %1982
        %v1984 = vsel %vm311, %v1975, %v1977
        %v1985 = vsel %vm311, %v1977, %v1979
        %v1986 = vsel %vm311, %v1979, %v1981
        %v1987 = vsel %vm311, %v1981, %v1983
        %vm1992 = vcmask 130048
        %v1994 = vsel %vm1992, %v1968, 0
        %1996 = vmatprep.subr.bf16.mxu0 %v1985
        %1997 = vmatpush1.bf16.msra.mxu0 %v1984
        %1998 = vmatprep.subr.bf16.mxu0 0
        %1999 = vmatpush1.bf16.msra.mxu0 0
        %2000 = vmatprep.subr.bf16.mxu0 0
        %2001 = vmatpush1.bf16.msra.mxu0 0
        %2002 = vmatprep.subr.bf16.mxu0 0
        %2003 = vmatpush1.bf16.msra.mxu0 0
        %2004 = vmatprep.subr.bf16.mxu0 0
        %2005 = vmatpush1.bf16.msra.mxu0 0
        %2006 = vmatprep.subr.bf16.mxu0 0
        %2007 = vmatpush1.bf16.msra.mxu0 0
        %2008 = vmatprep.subr.bf16.mxu0 0
        %2009 = vmatpush1.bf16.msra.mxu0 0
        %2010 = vmatprep.subr.bf16.mxu0 0
        %2011 = vmatpush1.bf16.msra.mxu0 0
        %2012 = vmatprep.subr.bf16.mxu0 0
        %2013 = vmatpush1.bf16.msra.mxu0 0
        %2014 = vmatprep.subr.bf16.mxu0 0
        %2015 = vmatpush1.bf16.msra.mxu0 0
        %2016 = vmatprep.subr.bf16.mxu0 0
        %2017 = vmatpush1.bf16.msra.mxu0 0
        %2018 = vmatprep.subr.bf16.mxu0 0
        %2019 = vmatpush1.bf16.msra.mxu0 0
        %2020 = vmatprep.subr.bf16.mxu0 0
        %2021 = vmatpush1.bf16.msra.mxu0 0
        %2022 = vmatprep.subr.bf16.mxu0 0
        %2023 = vmatpush1.bf16.msra.mxu0 0
        %2024 = vmatprep.subr.bf16.mxu0 0
        %2025 = vmatpush1.bf16.msra.mxu0 0
        %2026 = vmatprep.subr.bf16.mxu0 0
        %2027 = vmatpush1.bf16.msra.mxu0 0
        %2028 = vmatprep.mubr.bf16.mxu0 0
        %2029 = vmatmul.mubr.bf16.gmra.mrb[0].mxu0 %v1994
        %v2030 = vpop.f32.mrb[0].mxu0
        %v2031 = vadd.f32 0.0, %v2030
        %v2032 = vpop.f32.mrb[0].mxu0
        %v2033 = vadd.f32 0.0, %v2032
        %v2034 = vpop.f32.mrb[0].mxu0
        %v2035 = vpop.f32.mrb[0].mxu0
        %2036 = vdwg.mxu0
        %2037 = vmatprep.subr.bf16.mxu0 %v1987
        %2038 = vmatpush1.bf16.msra.mxu0 %v1986
        %2039 = vmatprep.subr.bf16.mxu0 0
        %2040 = vmatpush1.bf16.msra.mxu0 0
        %2041 = vmatprep.subr.bf16.mxu0 0
        %2042 = vmatpush1.bf16.msra.mxu0 0
        %2043 = vmatprep.subr.bf16.mxu0 0
        %2044 = vmatpush1.bf16.msra.mxu0 0
        %2045 = vmatprep.subr.bf16.mxu0 0
        %2046 = vmatpush1.bf16.msra.mxu0 0
        %2047 = vmatprep.subr.bf16.mxu0 0
        %2048 = vmatpush1.bf16.msra.mxu0 0
        %2049 = vmatprep.subr.bf16.mxu0 0
        %2050 = vmatpush1.bf16.msra.mxu0 0
        %2051 = vmatprep.subr.bf16.mxu0 0
        %2052 = vmatpush1.bf16.msra.mxu0 0
        %2053 = vmatprep.subr.bf16.mxu0 0
        %2054 = vmatpush1.bf16.msra.mxu0 0
        %2055 = vmatprep.subr.bf16.mxu0 0
        %2056 = vmatpush1.bf16.msra.mxu0 0
        %2057 = vmatprep.subr.bf16.mxu0 0
        %2058 = vmatpush1.bf16.msra.mxu0 0
        %2059 = vmatprep.subr.bf16.mxu0 0
        %2060 = vmatpush1.bf16.msra.mxu0 0
        %2061 = vmatprep.subr.bf16.mxu0 0
        %2062 = vmatpush1.bf16.msra.mxu0 0
        %2063 = vmatprep.subr.bf16.mxu0 0
        %2064 = vmatpush1.bf16.msra.mxu0 0
        %2065 = vmatprep.subr.bf16.mxu0 0
        %2066 = vmatpush1.bf16.msra.mxu0 0
        %2067 = vmatprep.subr.bf16.mxu0 0
        %2068 = vmatpush1.bf16.msra.mxu0 0
        %2069 = vmatprep.mubr.bf16.mxu0 0
        %2070 = vmatmul.mubr.bf16.gmra.mrb[0].mxu0 %v1994
        %v2071 = vpop.f32.mrb[0].mxu0
        %v2072 = vadd.f32 0.0, %v2071
        %v2073 = vpop.f32.mrb[0].mxu0
        %v2074 = vadd.f32 0.0, %v2073
        %v2075 = vpop.f32.mrb[0].mxu0
        %v2076 = vpop.f32.mrb[0].mxu0
        %2077 = vdwg.mxu0
        %v2079 = vsel %vm1992, %v1949, 0
        %2081 = vmatprep.subr.bf16.mxu0 %v1951
        %2082 = vmatpush1.bf16.msra.mxu0 %v1950
        %2083 = vmatprep.subr.bf16.mxu0 0
        %2084 = vmatpush1.bf16.msra.mxu0 0
        %2085 = vmatprep.subr.bf16.mxu0 0
        %2086 = vmatpush1.bf16.msra.mxu0 0
        %2087 = vmatprep.subr.bf16.mxu0 0
        %2088 = vmatpush1.bf16.msra.mxu0 0
        %2089 = vmatprep.subr.bf16.mxu0 0
        %2090 = vmatpush1.bf16.msra.mxu0 0
        %2091 = vmatprep.subr.bf16.mxu0 0
        %2092 = vmatpush1.bf16.msra.mxu0 0
        %2093 = vmatprep.subr.bf16.mxu0 0
        %2094 = vmatpush1.bf16.msra.mxu0 0
        %2095 = vmatprep.subr.bf16.mxu0 0
        %2096 = vmatpush1.bf16.msra.mxu0 0
        %2097 = vmatprep.subr.bf16.mxu0 0
        %2098 = vmatpush1.bf16.msra.mxu0 0
        %2099 = vmatprep.subr.bf16.mxu0 0
        %2100 = vmatpush1.bf16.msra.mxu0 0
        %2101 = vmatprep.subr.bf16.mxu0 0
        %2102 = vmatpush1.bf16.msra.mxu0 0
        %2103 = vmatprep.subr.bf16.mxu0 0
        %2104 = vmatpush1.bf16.msra.mxu0 0
        %2105 = vmatprep.subr.bf16.mxu0 0
        %2106 = vmatpush1.bf16.msra.mxu0 0
        %2107 = vmatprep.subr.bf16.mxu0 0
        %2108 = vmatpush1.bf16.msra.mxu0 0
        %2109 = vmatprep.subr.bf16.mxu0 0
        %2110 = vmatpush1.bf16.msra.mxu0 0
        %2111 = vmatprep.subr.bf16.mxu0 0
        %2112 = vmatpush1.bf16.msra.mxu0 0
        %2113 = vmatprep.mubr.bf16.mxu0 0
        %2114 = vmatmul.mubr.bf16.gmra.mrb[0].mxu0 %v2079
        %v2115 = vpop.f32.mrb[0].mxu0
        %v2116 = vadd.f32 %v2031, %v2115
        %v2117 = vpop.f32.mrb[0].mxu0
        %v2118 = vadd.f32 %v2033, %v2117
        %v2119 = vpop.f32.mrb[0].mxu0
        %v2120 = vpop.f32.mrb[0].mxu0
        %2121 = vdwg.mxu0
        %2122 = vmatprep.subr.bf16.mxu0 %v1953
        %2123 = vmatpush1.bf16.msra.mxu0 %v1952
        %2124 = vmatprep.subr.bf16.mxu0 0
        %2125 = vmatpush1.bf16.msra.mxu0 0
        %2126 = vmatprep.subr.bf16.mxu0 0
        %2127 = vmatpush1.bf16.msra.mxu0 0
        %2128 = vmatprep.subr.bf16.mxu0 0
        %2129 = vmatpush1.bf16.msra.mxu0 0
        %2130 = vmatprep.subr.bf16.mxu0 0
        %2131 = vmatpush1.bf16.msra.mxu0 0
        %2132 = vmatprep.subr.bf16.mxu0 0
        %2133 = vmatpush1.bf16.msra.mxu0 0
        %2134 = vmatprep.subr.bf16.mxu0 0
        %2135 = vmatpush1.bf16.msra.mxu0 0
        %2136 = vmatprep.subr.bf16.mxu0 0
        %2137 = vmatpush1.bf16.msra.mxu0 0
        %2138 = vmatprep.subr.bf16.mxu0 0
        %2139 = vmatpush1.bf16.msra.mxu0 0
        %2140 = vmatprep.subr.bf16.mxu0 0
        %2141 = vmatpush1.bf16.msra.mxu0 0
        %2142 = vmatprep.subr.bf16.mxu0 0
        %2143 = vmatpush1.bf16.msra.mxu0 0
        %2144 = vmatprep.subr.bf16.mxu0 0
        %2145 = vmatpush1.bf16.msra.mxu0 0
        %2146 = vmatprep.subr.bf16.mxu0 0
        %2147 = vmatpush1.bf16.msra.mxu0 0
        %2148 = vmatprep.subr.bf16.mxu0 0
        %2149 = vmatpush1.bf16.msra.mxu0 0
        %2150 = vmatprep.subr.bf16.mxu0 0
        %2151 = vmatpush1.bf16.msra.mxu0 0
        %2152 = vmatprep.subr.bf16.mxu0 0
        %2153 = vmatpush1.bf16.msra.mxu0 0
        %2154 = vmatprep.mubr.bf16.mxu0 0
        %2155 = vmatmul.mubr.bf16.gmra.mrb[0].mxu0 %v2079
        %v2156 = vpop.f32.mrb[0].mxu0
        %v2157 = vadd.f32 %v2072, %v2156
        %v2158 = vpop.f32.mrb[0].mxu0
        %v2159 = vadd.f32 %v2074, %v2158
        %v2160 = vpop.f32.mrb[0].mxu0
        %v2161 = vpop.f32.mrb[0].mxu0
        %2162 = vdwg.mxu0
        %v2163 = vld [vmem:[%s3] sm:$0x3]
        %v2164 = vld [vmem:[#allocation2] sm:$0xff]
        %v2165 = vld [vmem:[#allocation2 + $0x8] sm:$0xff]
        %v2166 = vld [vmem:[#allocation2 + $0x10] sm:$0xff]
        %v2167 = vld [vmem:[#allocation2 + $0x18] sm:$0xff]
        %v2168 = vld [vmem:[#allocation2 + $0x20] sm:$0xff]
        %v2171 = vunpack.c.l.s4 1983009808
        %v2172 = vunpack.c.0.s8 %v2171
        %v2173 = vlaneseq
        %v2174 = vshrl.u32 %v2173, 7
        %v2175 = vsub.s32 %v2172, %v2174
        %v2176 = vrot.slane %v2163, %v2175
        %2177 = vrot.lane.b32.xlu0 %v2176, 96
        %v2178 = vpop.permute.xlu0 %2177
        %2184 = vrot.lane.b32.xlu0 %v2164, 126
        %v2185 = vpop.permute.xlu0 %2184
        %2186 = vrot.lane.b32.xlu0 %v2165, 126
        %v2187 = vpop.permute.xlu0 %2186
        %2188 = vrot.lane.b32.xlu0 %v2166, 126
        %v2189 = vpop.permute.xlu0 %2188
        %2190 = vrot.lane.b32.xlu0 %v2167, 126
        %v2191 = vpop.permute.xlu0 %2190
        %2192 = vrot.lane.b32.xlu0 %v2168, 126
        %v2193 = vpop.permute.xlu0 %2192
        %v2194 = vsel %vm636, %v2185, %v2187
        %v2195 = vsel %vm636, %v2187, %v2189
        %v2196 = vsel %vm636, %v2189, %v2191
        %v2197 = vsel %vm636, %v2191, %v2193
        %v2203 = vsel %vm1992, %v2178, 0
        %2205 = vmatprep.subr.bf16.mxu0 %v2195
        %2206 = vmatpush1.bf16.msra.mxu0 %v2194
        %2207 = vmatprep.subr.bf16.mxu0 0
        %2208 = vmatpush1.bf16.msra.mxu0 0
        %2209 = vmatprep.subr.bf16.mxu0 0
        %2210 = vmatpush1.bf16.msra.mxu0 0
        %2211 = vmatprep.subr.bf16.mxu0 0
        %2212 = vmatpush1.bf16.msra.mxu0 0
        %2213 = vmatprep.subr.bf16.mxu0 0
        %2214 = vmatpush1.bf16.msra.mxu0 0
        %2215 = vmatprep.subr.bf16.mxu0 0
        %2216 = vmatpush1.bf16.msra.mxu0 0
        %2217 = vmatprep.subr.bf16.mxu0 0
        %2218 = vmatpush1.bf16.msra.mxu0 0
        %2219 = vmatprep.subr.bf16.mxu0 0
        %2220 = vmatpush1.bf16.msra.mxu0 0
        %2221 = vmatprep.subr.bf16.mxu0 0
        %2222 = vmatpush1.bf16.msra.mxu0 0
        %2223 = vmatprep.subr.bf16.mxu0 0
        %2224 = vmatpush1.bf16.msra.mxu0 0
        %2225 = vmatprep.subr.bf16.mxu0 0
        %2226 = vmatpush1.bf16.msra.mxu0 0
        %2227 = vmatprep.subr.bf16.mxu0 0
        %2228 = vmatpush1.bf16.msra.mxu0 0
        %2229 = vmatprep.subr.bf16.mxu0 0
        %2230 = vmatpush1.bf16.msra.mxu0 0
        %2231 = vmatprep.subr.bf16.mxu0 0
        %2232 = vmatpush1.bf16.msra.mxu0 0
        %2233 = vmatprep.subr.bf16.mxu0 0
        %2234 = vmatpush1.bf16.msra.mxu0 0
        %2235 = vmatprep.subr.bf16.mxu0 0
        %2236 = vmatpush1.bf16.msra.mxu0 0
        %2237 = vmatprep.mubr.bf16.mxu0 0
        %2238 = vmatmul.mubr.bf16.gmra.mrb[0].mxu0 %v2203
        %v2239 = vpop.f32.mrb[0].mxu0
        %v2240 = vadd.f32 0.0, %v2239
        %v2241 = vpop.f32.mrb[0].mxu0
        %v2242 = vadd.f32 0.0, %v2241
        %v2243 = vpop.f32.mrb[0].mxu0
        %v2244 = vpop.f32.mrb[0].mxu0
        %2245 = vdwg.mxu0
        %2246 = vmatprep.subr.bf16.mxu0 %v2197
        %2247 = vmatpush1.bf16.msra.mxu0 %v2196
        %2248 = vmatprep.subr.bf16.mxu0 0
        %2249 = vmatpush1.bf16.msra.mxu0 0
        %2250 = vmatprep.subr.bf16.mxu0 0
        %2251 = vmatpush1.bf16.msra.mxu0 0
        %2252 = vmatprep.subr.bf16.mxu0 0
        %2253 = vmatpush1.bf16.msra.mxu0 0
        %2254 = vmatprep.subr.bf16.mxu0 0
        %2255 = vmatpush1.bf16.msra.mxu0 0
        %2256 = vmatprep.subr.bf16.mxu0 0
        %2257 = vmatpush1.bf16.msra.mxu0 0
        %2258 = vmatprep.subr.bf16.mxu0 0
        %2259 = vmatpush1.bf16.msra.mxu0 0
        %2260 = vmatprep.subr.bf16.mxu0 0
        %2261 = vmatpush1.bf16.msra.mxu0 0
        %2262 = vmatprep.subr.bf16.mxu0 0
        %2263 = vmatpush1.bf16.msra.mxu0 0
        %2264 = vmatprep.subr.bf16.mxu0 0
        %2265 = vmatpush1.bf16.msra.mxu0 0
        %2266 = vmatprep.subr.bf16.mxu0 0
        %2267 = vmatpush1.bf16.msra.mxu0 0
        %2268 = vmatprep.subr.bf16.mxu0 0
        %2269 = vmatpush1.bf16.msra.mxu0 0
        %2270 = vmatprep.subr.bf16.mxu0 0
        %2271 = vmatpush1.bf16.msra.mxu0 0
        %2272 = vmatprep.subr.bf16.mxu0 0
        %2273 = vmatpush1.bf16.msra.mxu0 0
        %2274 = vmatprep.subr.bf16.mxu0 0
        %2275 = vmatpush1.bf16.msra.mxu0 0
        %2276 = vmatprep.subr.bf16.mxu0 0
        %2277 = vmatpush1.bf16.msra.mxu0 0
        %2278 = vmatprep.mubr.bf16.mxu0 0
        %2279 = vmatmul.mubr.bf16.gmra.mrb[0].mxu0 %v2203
        %v2280 = vpop.f32.mrb[0].mxu0
        %v2281 = vadd.f32 0.0, %v2280
        %v2282 = vpop.f32.mrb[0].mxu0
        %v2283 = vadd.f32 0.0, %v2282
        %v2284 = vpop.f32.mrb[0].mxu0
        %v2285 = vpop.f32.mrb[0].mxu0
        %2286 = vdwg.mxu0
        %v2287 = vadd.f32 %v2116, %v2240
        %v2288 = vadd.f32 %v2118, %v2242
        %v2289 = vadd.f32 %v2157, %v2281
        %v2290 = vadd.f32 %v2159, %v2283
        %v2291 = vld [vmem:[%s3] sm:$0x3]
        %v2292 = vld [vmem:[#allocation2] sm:$0xff]
        %v2293 = vld [vmem:[#allocation2 + $0x8] sm:$0xff]
        %v2294 = vld [vmem:[#allocation2 + $0x10] sm:$0xff]
        %v2295 = vld [vmem:[#allocation2 + $0x18] sm:$0xff]
        %v2296 = vld [vmem:[#allocation2 + $0x20] sm:$0xff]
        %v2299 = vunpack.c.l.s4 1983009808
        %v2300 = vunpack.c.0.s8 %v2299
        %v2301 = vlaneseq
        %v2302 = vshrl.u32 %v2301, 7
        %v2303 = vsub.s32 %v2300, %v2302
        %v2304 = vrot.slane %v2291, %v2303
        %2305 = vrot.lane.b32.xlu0 %v2304, 80
        %v2306 = vpop.permute.xlu0 %2305
        %2312 = vrot.lane.b32.xlu0 %v2292, 108
        %v2313 = vpop.permute.xlu0 %2312
        %2314 = vrot.lane.b32.xlu0 %v2293, 108
        %v2315 = vpop.permute.xlu0 %2314
        %2316 = vrot.lane.b32.xlu0 %v2294, 108
        %v2317 = vpop.permute.xlu0 %2316
        %2318 = vrot.lane.b32.xlu0 %v2295, 108
        %v2319 = vpop.permute.xlu0 %2318
        %2320 = vrot.lane.b32.xlu0 %v2296, 108
        %v2321 = vpop.permute.xlu0 %2320
        %v2322 = vsel %vm811, %v2313, %v2315
        %v2323 = vsel %vm811, %v2315, %v2317
        %v2324 = vsel %vm811, %v2317, %v2319
        %v2325 = vsel %vm811, %v2319, %v2321
        %v2331 = vsel %vm1992, %v2306, 0
        %2333 = vmatprep.subr.bf16.mxu0 %v2323
        %2334 = vmatpush1.bf16.msra.mxu0 %v2322
        %2335 = vmatprep.subr.bf16.mxu0 0
        %2336 = vmatpush1.bf16.msra.mxu0 0
        %2337 = vmatprep.subr.bf16.mxu0 0
        %2338 = vmatpush1.bf16.msra.mxu0 0
        %2339 = vmatprep.subr.bf16.mxu0 0
        %2340 = vmatpush1.bf16.msra.mxu0 0
        %2341 = vmatprep.subr.bf16.mxu0 0
        %2342 = vmatpush1.bf16.msra.mxu0 0
        %2343 = vmatprep.subr.bf16.mxu0 0
        %2344 = vmatpush1.bf16.msra.mxu0 0
        %2345 = vmatprep.subr.bf16.mxu0 0
        %2346 = vmatpush1.bf16.msra.mxu0 0
        %2347 = vmatprep.subr.bf16.mxu0 0
        %2348 = vmatpush1.bf16.msra.mxu0 0
        %2349 = vmatprep.subr.bf16.mxu0 0
        %2350 = vmatpush1.bf16.msra.mxu0 0
        %2351 = vmatprep.subr.bf16.mxu0 0
        %2352 = vmatpush1.bf16.msra.mxu0 0
        %2353 = vmatprep.subr.bf16.mxu0 0
        %2354 = vmatpush1.bf16.msra.mxu0 0
        %2355 = vmatprep.subr.bf16.mxu0 0
        %2356 = vmatpush1.bf16.msra.mxu0 0
        %2357 = vmatprep.subr.bf16.mxu0 0
        %2358 = vmatpush1.bf16.msra.mxu0 0
        %2359 = vmatprep.subr.bf16.mxu0 0
        %2360 = vmatpush1.bf16.msra.mxu0 0
        %2361 = vmatprep.subr.bf16.mxu0 0
        %2362 = vmatpush1.bf16.msra.mxu0 0
        %2363 = vmatprep.subr.bf16.mxu0 0
        %2364 = vmatpush1.bf16.msra.mxu0 0
        %2365 = vmatprep.mubr.bf16.mxu0 0
        %2366 = vmatmul.mubr.bf16.gmra.mrb[0].mxu0 %v2331
        %v2367 = vpop.f32.mrb[0].mxu0
        %v2368 = vadd.f32 0.0, %v2367
        %v2369 = vpop.f32.mrb[0].mxu0
        %v2370 = vadd.f32 0.0, %v2369
        %v2371 = vpop.f32.mrb[0].mxu0
        %v2372 = vpop.f32.mrb[0].mxu0
        %2373 = vdwg.mxu0
        %2374 = vmatprep.subr.bf16.mxu0 %v2325
        %2375 = vmatpush1.bf16.msra.mxu0 %v2324
        %2376 = vmatprep.subr.bf16.mxu0 0
        %2377 = vmatpush1.bf16.msra.mxu0 0
        %2378 = vmatprep.subr.bf16.mxu0 0
        %2379 = vmatpush1.bf16.msra.mxu0 0
        %2380 = vmatprep.subr.bf16.mxu0 0
        %2381 = vmatpush1.bf16.msra.mxu0 0
        %2382 = vmatprep.subr.bf16.mxu0 0
        %2383 = vmatpush1.bf16.msra.mxu0 0
        %2384 = vmatprep.subr.bf16.mxu0 0
        %2385 = vmatpush1.bf16.msra.mxu0 0
        %2386 = vmatprep.subr.bf16.mxu0 0
        %2387 = vmatpush1.bf16.msra.mxu0 0
        %2388 = vmatprep.subr.bf16.mxu0 0
        %2389 = vmatpush1.bf16.msra.mxu0 0
        %2390 = vmatprep.subr.bf16.mxu0 0
        %2391 = vmatpush1.bf16.msra.mxu0 0
        %2392 = vmatprep.subr.bf16.mxu0 0
        %2393 = vmatpush1.bf16.msra.mxu0 0
        %2394 = vmatprep.subr.bf16.mxu0 0
        %2395 = vmatpush1.bf16.msra.mxu0 0
        %2396 = vmatprep.subr.bf16.mxu0 0
        %2397 = vmatpush1.bf16.msra.mxu0 0
        %2398 = vmatprep.subr.bf16.mxu0 0
        %2399 = vmatpush1.bf16.msra.mxu0 0
        %2400 = vmatprep.subr.bf16.mxu0 0
        %2401 = vmatpush1.bf16.msra.mxu0 0
        %2402 = vmatprep.subr.bf16.mxu0 0
        %2403 = vmatpush1.bf16.msra.mxu0 0
        %2404 = vmatprep.subr.bf16.mxu0 0
        %2405 = vmatpush1.bf16.msra.mxu0 0
        %2406 = vmatprep.mubr.bf16.mxu0 0
        %2407 = vmatmul.mubr.bf16.gmra.mrb[0].mxu0 %v2331
        %v2408 = vpop.f32.mrb[0].mxu0
        %v2409 = vadd.f32 0.0, %v2408
        %v2410 = vpop.f32.mrb[0].mxu0
        %v2411 = vadd.f32 0.0, %v2410
        %v2412 = vpop.f32.mrb[0].mxu0
        %v2413 = vpop.f32.mrb[0].mxu0
        %2414 = vdwg.mxu0
        %v2415 = vadd.f32 %v2287, %v2368
        %v2416 = vadd.f32 %v2288, %v2370
        %v2417 = vadd.f32 %v2289, %v2409
        %v2418 = vadd.f32 %v2290, %v2411
        %v2419 = vld [vmem:[%s3] sm:$0x3]
        %v2420 = vld [vmem:[#allocation2] sm:$0xff]
        %v2421 = vld [vmem:[#allocation2 + $0x8] sm:$0xff]
        %v2422 = vld [vmem:[#allocation2 + $0x10] sm:$0xff]
        %v2423 = vld [vmem:[#allocation2 + $0x18] sm:$0xff]
        %v2424 = vld [vmem:[#allocation2 + $0x20] sm:$0xff]
        %v2427 = vunpack.c.l.s4 1983009808
        %v2428 = vunpack.c.0.s8 %v2427
        %v2429 = vlaneseq
        %v2430 = vshrl.u32 %v2429, 7
        %v2431 = vsub.s32 %v2428, %v2430
        %v2432 = vrot.slane %v2419, %v2431
        %2433 = vrot.lane.b32.xlu0 %v2432, 64
        %v2434 = vpop.permute.xlu0 %2433
        %2440 = vrot.lane.b32.xlu0 %v2420, 107
        %v2441 = vpop.permute.xlu0 %2440
        %2442 = vrot.lane.b32.xlu0 %v2421, 107
        %v2443 = vpop.permute.xlu0 %2442
        %2444 = vrot.lane.b32.xlu0 %v2422, 107
        %v2445 = vpop.permute.xlu0 %2444
        %2446 = vrot.lane.b32.xlu0 %v2423, 107
        %v2447 = vpop.permute.xlu0 %2446
        %2448 = vrot.lane.b32.xlu0 %v2424, 107
        %v2449 = vpop.permute.xlu0 %2448
        %v2450 = vsel %vm986, %v2441, %v2443
        %v2451 = vsel %vm986, %v2443, %v2445
        %v2452 = vsel %vm986, %v2445, %v2447
        %v2453 = vsel %vm986, %v2447, %v2449
        %v2459 = vsel %vm1992, %v2434, 0
        %2461 = vmatprep.subr.bf16.mxu0 %v2451
        %2462 = vmatpush1.bf16.msra.mxu0 %v2450
        %2463 = vmatprep.subr.bf16.mxu0 0
        %2464 = vmatpush1.bf16.msra.mxu0 0
        %2465 = vmatprep.subr.bf16.mxu0 0
        %2466 = vmatpush1.bf16.msra.mxu0 0
        %2467 = vmatprep.subr.bf16.mxu0 0
        %2468 = vmatpush1.bf16.msra.mxu0 0
        %2469 = vmatprep.subr.bf16.mxu0 0
        %2470 = vmatpush1.bf16.msra.mxu0 0
        %2471 = vmatprep.subr.bf16.mxu0 0
        %2472 = vmatpush1.bf16.msra.mxu0 0
        %2473 = vmatprep.subr.bf16.mxu0 0
        %2474 = vmatpush1.bf16.msra.mxu0 0
        %2475 = vmatprep.subr.bf16.mxu0 0
        %2476 = vmatpush1.bf16.msra.mxu0 0
        %2477 = vmatprep.subr.bf16.mxu0 0
        %2478 = vmatpush1.bf16.msra.mxu0 0
        %2479 = vmatprep.subr.bf16.mxu0 0
        %2480 = vmatpush1.bf16.msra.mxu0 0
        %2481 = vmatprep.subr.bf16.mxu0 0
        %2482 = vmatpush1.bf16.msra.mxu0 0
        %2483 = vmatprep.subr.bf16.mxu0 0
        %2484 = vmatpush1.bf16.msra.mxu0 0
        %2485 = vmatprep.subr.bf16.mxu0 0
        %2486 = vmatpush1.bf16.msra.mxu0 0
        %2487 = vmatprep.subr.bf16.mxu0 0
        %2488 = vmatpush1.bf16.msra.mxu0 0
        %2489 = vmatprep.subr.bf16.mxu0 0
        %2490 = vmatpush1.bf16.msra.mxu0 0
        %2491 = vmatprep.subr.bf16.mxu0 0
        %2492 = vmatpush1.bf16.msra.mxu0 0
        %2493 = vmatprep.mubr.bf16.mxu0 0
        %2494 = vmatmul.mubr.bf16.gmra.mrb[0].mxu0 %v2459
        %v2495 = vpop.f32.mrb[0].mxu0
        %v2496 = vadd.f32 0.0, %v2495
        %v2497 = vpop.f32.mrb[0].mxu0
        %v2498 = vadd.f32 0.0, %v2497
        %v2499 = vpop.f32.mrb[0].mxu0
        %v2500 = vpop.f32.mrb[0].mxu0
        %2501 = vdwg.mxu0
        %2502 = vmatprep.subr.bf16.mxu0 %v2453
        %2503 = vmatpush1.bf16.msra.mxu0 %v2452
        %2504 = vmatprep.subr.bf16.mxu0 0
        %2505 = vmatpush1.bf16.msra.mxu0 0
        %2506 = vmatprep.subr.bf16.mxu0 0
        %2507 = vmatpush1.bf16.msra.mxu0 0
        %2508 = vmatprep.subr.bf16.mxu0 0
        %2509 = vmatpush1.bf16.msra.mxu0 0
        %2510 = vmatprep.subr.bf16.mxu0 0
        %2511 = vmatpush1.bf16.msra.mxu0 0
        %2512 = vmatprep.subr.bf16.mxu0 0
        %2513 = vmatpush1.bf16.msra.mxu0 0
        %2514 = vmatprep.subr.bf16.mxu0 0
        %2515 = vmatpush1.bf16.msra.mxu0 0
        %2516 = vmatprep.subr.bf16.mxu0 0
        %2517 = vmatpush1.bf16.msra.mxu0 0
        %2518 = vmatprep.subr.bf16.mxu0 0
        %2519 = vmatpush1.bf16.msra.mxu0 0
        %2520 = vmatprep.subr.bf16.mxu0 0
        %2521 = vmatpush1.bf16.msra.mxu0 0
        %2522 = vmatprep.subr.bf16.mxu0 0
        %2523 = vmatpush1.bf16.msra.mxu0 0
        %2524 = vmatprep.subr.bf16.mxu0 0
        %2525 = vmatpush1.bf16.msra.mxu0 0
        %2526 = vmatprep.subr.bf16.mxu0 0
        %2527 = vmatpush1.bf16.msra.mxu0 0
        %2528 = vmatprep.subr.bf16.mxu0 0
        %2529 = vmatpush1.bf16.msra.mxu0 0
        %2530 = vmatprep.subr.bf16.mxu0 0
        %2531 = vmatpush1.bf16.msra.mxu0 0
        %2532 = vmatprep.subr.bf16.mxu0 0
        %2533 = vmatpush1.bf16.msra.mxu0 0
        %2534 = vmatprep.mubr.bf16.mxu0 0
        %2535 = vmatmul.mubr.bf16.gmra.mrb[0].mxu0 %v2459
        %v2536 = vpop.f32.mrb[0].mxu0
        %v2537 = vadd.f32 0.0, %v2536
        %v2538 = vpop.f32.mrb[0].mxu0
        %v2539 = vadd.f32 0.0, %v2538
        %v2540 = vpop.f32.mrb[0].mxu0
        %v2541 = vpop.f32.mrb[0].mxu0
        %2542 = vdwg.mxu0
        %v2543 = vadd.f32 %v2415, %v2496
        %v2544 = vadd.f32 %v2416, %v2498
        %v2545 = vadd.f32 %v2417, %v2537
        %v2546 = vadd.f32 %v2418, %v2539
        %v2547 = vld [vmem:[%s3] sm:$0x3]
        %v2548 = vld [vmem:[#allocation2] sm:$0xff]
        %v2549 = vld [vmem:[#allocation2 + $0x8] sm:$0xff]
        %v2550 = vld [vmem:[#allocation2 + $0x10] sm:$0xff]
        %v2551 = vld [vmem:[#allocation2 + $0x18] sm:$0xff]
        %v2552 = vld [vmem:[#allocation2 + $0x20] sm:$0xff]
        %v2555 = vunpack.c.l.s4 1983009808
        %v2556 = vunpack.c.0.s8 %v2555
        %v2557 = vlaneseq
        %v2558 = vshrl.u32 %v2557, 7
        %v2559 = vsub.s32 %v2556, %v2558
        %v2560 = vrot.slane %v2547, %v2559
        %2561 = vrot.lane.b32.xlu0 %v2560, 48
        %v2562 = vpop.permute.xlu0 %2561
        %2568 = vrot.lane.b32.xlu0 %v2548, 106
        %v2569 = vpop.permute.xlu0 %2568
        %2570 = vrot.lane.b32.xlu0 %v2549, 106
        %v2571 = vpop.permute.xlu0 %2570
        %2572 = vrot.lane.b32.xlu0 %v2550, 106
        %v2573 = vpop.permute.xlu0 %2572
        %2574 = vrot.lane.b32.xlu0 %v2551, 106
        %v2575 = vpop.permute.xlu0 %2574
        %2576 = vrot.lane.b32.xlu0 %v2552, 106
        %v2577 = vpop.permute.xlu0 %2576
        %v2578 = vsel %vm1161, %v2569, %v2571
        %v2579 = vsel %vm1161, %v2571, %v2573
        %v2580 = vsel %vm1161, %v2573, %v2575
        %v2581 = vsel %vm1161, %v2575, %v2577
        %v2587 = vsel %vm1992, %v2562, 0
        %2589 = vmatprep.subr.bf16.mxu0 %v2579
        %2590 = vmatpush1.bf16.msra.mxu0 %v2578
        %2591 = vmatprep.subr.bf16.mxu0 0
        %2592 = vmatpush1.bf16.msra.mxu0 0
        %2593 = vmatprep.subr.bf16.mxu0 0
        %2594 = vmatpush1.bf16.msra.mxu0 0
        %2595 = vmatprep.subr.bf16.mxu0 0
        %2596 = vmatpush1.bf16.msra.mxu0 0
        %2597 = vmatprep.subr.bf16.mxu0 0
        %2598 = vmatpush1.bf16.msra.mxu0 0
        %2599 = vmatprep.subr.bf16.mxu0 0
        %2600 = vmatpush1.bf16.msra.mxu0 0
        %2601 = vmatprep.subr.bf16.mxu0 0
        %2602 = vmatpush1.bf16.msra.mxu0 0
        %2603 = vmatprep.subr.bf16.mxu0 0
        %2604 = vmatpush1.bf16.msra.mxu0 0
        %2605 = vmatprep.subr.bf16.mxu0 0
        %2606 = vmatpush1.bf16.msra.mxu0 0
        %2607 = vmatprep.subr.bf16.mxu0 0
        %2608 = vmatpush1.bf16.msra.mxu0 0
        %2609 = vmatprep.subr.bf16.mxu0 0
        %2610 = vmatpush1.bf16.msra.mxu0 0
        %2611 = vmatprep.subr.bf16.mxu0 0
        %2612 = vmatpush1.bf16.msra.mxu0 0
        %2613 = vmatprep.subr.bf16.mxu0 0
        %2614 = vmatpush1.bf16.msra.mxu0 0
        %2615 = vmatprep.subr.bf16.mxu0 0
        %2616 = vmatpush1.bf16.msra.mxu0 0
        %2617 = vmatprep.subr.bf16.mxu0 0
        %2618 = vmatpush1.bf16.msra.mxu0 0
        %2619 = vmatprep.subr.bf16.mxu0 0
        %2620 = vmatpush1.bf16.msra.mxu0 0
        %2621 = vmatprep.mubr.bf16.mxu0 0
        %2622 = vmatmul.mubr.bf16.gmra.mrb[0].mxu0 %v2587
        %v2623 = vpop.f32.mrb[0].mxu0
        %v2624 = vadd.f32 0.0, %v2623
        %v2625 = vpop.f32.mrb[0].mxu0
        %v2626 = vadd.f32 0.0, %v2625
        %v2627 = vpop.f32.mrb[0].mxu0
        %v2628 = vpop.f32.mrb[0].mxu0
        %2629 = vdwg.mxu0
        %2630 = vmatprep.subr.bf16.mxu0 %v2581
        %2631 = vmatpush1.bf16.msra.mxu0 %v2580
        %2632 = vmatprep.subr.bf16.mxu0 0
        %2633 = vmatpush1.bf16.msra.mxu0 0
        %2634 = vmatprep.subr.bf16.mxu0 0
        %2635 = vmatpush1.bf16.msra.mxu0 0
        %2636 = vmatprep.subr.bf16.mxu0 0
        %2637 = vmatpush1.bf16.msra.mxu0 0
        %2638 = vmatprep.subr.bf16.mxu0 0
        %2639 = vmatpush1.bf16.msra.mxu0 0
        %2640 = vmatprep.subr.bf16.mxu0 0
        %2641 = vmatpush1.bf16.msra.mxu0 0
        %2642 = vmatprep.subr.bf16.mxu0 0
        %2643 = vmatpush1.bf16.msra.mxu0 0
        %2644 = vmatprep.subr.bf16.mxu0 0
        %2645 = vmatpush1.bf16.msra.mxu0 0
        %2646 = vmatprep.subr.bf16.mxu0 0
        %2647 = vmatpush1.bf16.msra.mxu0 0
        %2648 = vmatprep.subr.bf16.mxu0 0
        %2649 = vmatpush1.bf16.msra.mxu0 0
        %2650 = vmatprep.subr.bf16.mxu0 0
        %2651 = vmatpush1.bf16.msra.mxu0 0
        %2652 = vmatprep.subr.bf16.mxu0 0
        %2653 = vmatpush1.bf16.msra.mxu0 0
        %2654 = vmatprep.subr.bf16.mxu0 0
        %2655 = vmatpush1.bf16.msra.mxu0 0
        %2656 = vmatprep.subr.bf16.mxu0 0
        %2657 = vmatpush1.bf16.msra.mxu0 0
        %2658 = vmatprep.subr.bf16.mxu0 0
        %2659 = vmatpush1.bf16.msra.mxu0 0
        %2660 = vmatprep.subr.bf16.mxu0 0
        %2661 = vmatpush1.bf16.msra.mxu0 0
        %2662 = vmatprep.mubr.bf16.mxu0 0
        %2663 = vmatmul.mubr.bf16.gmra.mrb[0].mxu0 %v2587
        %v2664 = vpop.f32.mrb[0].mxu0
        %v2665 = vadd.f32 0.0, %v2664
        %v2666 = vpop.f32.mrb[0].mxu0
        %v2667 = vadd.f32 0.0, %v2666
        %v2668 = vpop.f32.mrb[0].mxu0
        %v2669 = vpop.f32.mrb[0].mxu0
        %2670 = vdwg.mxu0
        %v2671 = vadd.f32 %v2543, %v2624
        %v2672 = vadd.f32 %v2544, %v2626
        %v2673 = vadd.f32 %v2545, %v2665
        %v2674 = vadd.f32 %v2546, %v2667
        %v2675 = vld [vmem:[%s3] sm:$0x3]
        %v2676 = vld [vmem:[#allocation2] sm:$0xff]
        %v2677 = vld [vmem:[#allocation2 + $0x8] sm:$0xff]
        %v2678 = vld [vmem:[#allocation2 + $0x10] sm:$0xff]
        %v2679 = vld [vmem:[#allocation2 + $0x18] sm:$0xff]
        %v2680 = vld [vmem:[#allocation2 + $0x20] sm:$0xff]
        %v2683 = vunpack.c.l.s4 1983009808
        %v2684 = vunpack.c.0.s8 %v2683
        %v2685 = vlaneseq
        %v2686 = vshrl.u32 %v2685, 7
        %v2687 = vsub.s32 %v2684, %v2686
        %v2688 = vrot.slane %v2675, %v2687
        %2689 = vrot.lane.b32.xlu0 %v2688, 32
        %v2690 = vpop.permute.xlu0 %2689
        %2696 = vrot.lane.b32.xlu0 %v2676, 88
        %v2697 = vpop.permute.xlu0 %2696
        %2698 = vrot.lane.b32.xlu0 %v2677, 88
        %v2699 = vpop.permute.xlu0 %2698
        %2700 = vrot.lane.b32.xlu0 %v2678, 88
        %v2701 = vpop.permute.xlu0 %2700
        %2702 = vrot.lane.b32.xlu0 %v2679, 88
        %v2703 = vpop.permute.xlu0 %2702
        %2704 = vrot.lane.b32.xlu0 %v2680, 88
        %v2705 = vpop.permute.xlu0 %2704
        %v2706 = vsel %vm1336, %v2697, %v2699
        %v2707 = vsel %vm1336, %v2699, %v2701
        %v2708 = vsel %vm1336, %v2701, %v2703
        %v2709 = vsel %vm1336, %v2703, %v2705
        %v2715 = vsel %vm1992, %v2690, 0
        %2717 = vmatprep.subr.bf16.mxu0 %v2707
        %2718 = vmatpush1.bf16.msra.mxu0 %v2706
        %2719 = vmatprep.subr.bf16.mxu0 0
        %2720 = vmatpush1.bf16.msra.mxu0 0
        %2721 = vmatprep.subr.bf16.mxu0 0
        %2722 = vmatpush1.bf16.msra.mxu0 0
        %2723 = vmatprep.subr.bf16.mxu0 0
        %2724 = vmatpush1.bf16.msra.mxu0 0
        %2725 = vmatprep.subr.bf16.mxu0 0
        %2726 = vmatpush1.bf16.msra.mxu0 0
        %2727 = vmatprep.subr.bf16.mxu0 0
        %2728 = vmatpush1.bf16.msra.mxu0 0
        %2729 = vmatprep.subr.bf16.mxu0 0
        %2730 = vmatpush1.bf16.msra.mxu0 0
        %2731 = vmatprep.subr.bf16.mxu0 0
        %2732 = vmatpush1.bf16.msra.mxu0 0
        %2733 = vmatprep.subr.bf16.mxu0 0
        %2734 = vmatpush1.bf16.msra.mxu0 0
        %2735 = vmatprep.subr.bf16.mxu0 0
        %2736 = vmatpush1.bf16.msra.mxu0 0
        %2737 = vmatprep.subr.bf16.mxu0 0
        %2738 = vmatpush1.bf16.msra.mxu0 0
        %2739 = vmatprep.subr.bf16.mxu0 0
        %2740 = vmatpush1.bf16.msra.mxu0 0
        %2741 = vmatprep.subr.bf16.mxu0 0
        %2742 = vmatpush1.bf16.msra.mxu0 0
        %2743 = vmatprep.subr.bf16.mxu0 0
        %2744 = vmatpush1.bf16.msra.mxu0 0
        %2745 = vmatprep.subr.bf16.mxu0 0
        %2746 = vmatpush1.bf16.msra.mxu0 0
        %2747 = vmatprep.subr.bf16.mxu0 0
        %2748 = vmatpush1.bf16.msra.mxu0 0
        %2749 = vmatprep.mubr.bf16.mxu0 0
        %2750 = vmatmul.mubr.bf16.gmra.mrb[0].mxu0 %v2715
        %v2751 = vpop.f32.mrb[0].mxu0
        %v2752 = vadd.f32 0.0, %v2751
        %v2753 = vpop.f32.mrb[0].mxu0
        %v2754 = vadd.f32 0.0, %v2753
        %v2755 = vpop.f32.mrb[0].mxu0
        %v2756 = vpop.f32.mrb[0].mxu0
        %2757 = vdwg.mxu0
        %2758 = vmatprep.subr.bf16.mxu0 %v2709
        %2759 = vmatpush1.bf16.msra.mxu0 %v2708
        %2760 = vmatprep.subr.bf16.mxu0 0
        %2761 = vmatpush1.bf16.msra.mxu0 0
        %2762 = vmatprep.subr.bf16.mxu0 0
        %2763 = vmatpush1.bf16.msra.mxu0 0
        %2764 = vmatprep.subr.bf16.mxu0 0
        %2765 = vmatpush1.bf16.msra.mxu0 0
        %2766 = vmatprep.subr.bf16.mxu0 0
        %2767 = vmatpush1.bf16.msra.mxu0 0
        %2768 = vmatprep.subr.bf16.mxu0 0
        %2769 = vmatpush1.bf16.msra.mxu0 0
        %2770 = vmatprep.subr.bf16.mxu0 0
        %2771 = vmatpush1.bf16.msra.mxu0 0
        %2772 = vmatprep.subr.bf16.mxu0 0
        %2773 = vmatpush1.bf16.msra.mxu0 0
        %2774 = vmatprep.subr.bf16.mxu0 0
        %2775 = vmatpush1.bf16.msra.mxu0 0
        %2776 = vmatprep.subr.bf16.mxu0 0
        %2777 = vmatpush1.bf16.msra.mxu0 0
        %2778 = vmatprep.subr.bf16.mxu0 0
        %2779 = vmatpush1.bf16.msra.mxu0 0
        %2780 = vmatprep.subr.bf16.mxu0 0
        %2781 = vmatpush1.bf16.msra.mxu0 0
        %2782 = vmatprep.subr.bf16.mxu0 0
        %2783 = vmatpush1.bf16.msra.mxu0 0
        %2784 = vmatprep.subr.bf16.mxu0 0
        %2785 = vmatpush1.bf16.msra.mxu0 0
        %2786 = vmatprep.subr.bf16.mxu0 0
        %2787 = vmatpush1.bf16.msra.mxu0 0
        %2788 = vmatprep.subr.bf16.mxu0 0
        %2789 = vmatpush1.bf16.msra.mxu0 0
        %2790 = vmatprep.mubr.bf16.mxu0 0
        %2791 = vmatmul.mubr.bf16.gmra.mrb[0].mxu0 %v2715
        %v2792 = vpop.f32.mrb[0].mxu0
        %v2793 = vadd.f32 0.0, %v2792
        %v2794 = vpop.f32.mrb[0].mxu0
        %v2795 = vadd.f32 0.0, %v2794
        %v2796 = vpop.f32.mrb[0].mxu0
        %v2797 = vpop.f32.mrb[0].mxu0
        %2798 = vdwg.mxu0
        %v2799 = vadd.f32 %v2671, %v2752
        %v2800 = vadd.f32 %v2672, %v2754
        %v2801 = vadd.f32 %v2673, %v2793
        %v2802 = vadd.f32 %v2674, %v2795
        %v2803 = vld [vmem:[%s3] sm:$0x3]
        %v2804 = vld [vmem:[#allocation2] sm:$0xff]
        %v2805 = vld [vmem:[#allocation2 + $0x8] sm:$0xff]
        %v2806 = vld [vmem:[#allocation2 + $0x10] sm:$0xff]
        %v2807 = vld [vmem:[#allocation2 + $0x18] sm:$0xff]
        %v2808 = vld [vmem:[#allocation2 + $0x20] sm:$0xff]
        %v2811 = vunpack.c.l.s4 1983009808
        %v2812 = vunpack.c.0.s8 %v2811
        %v2813 = vlaneseq
        %v2814 = vshrl.u32 %v2813, 7
        %v2815 = vsub.s32 %v2812, %v2814
        %v2816 = vrot.slane %v2803, %v2815
        %2817 = vrot.lane.b32.xlu0 %v2816, 16
        %v2818 = vpop.permute.xlu0 %2817
        %2824 = vrot.lane.b32.xlu0 %v2804, 87
        %v2825 = vpop.permute.xlu0 %2824
        %2826 = vrot.lane.b32.xlu0 %v2805, 87
        %v2827 = vpop.permute.xlu0 %2826
        %2828 = vrot.lane.b32.xlu0 %v2806, 87
        %v2829 = vpop.permute.xlu0 %2828
        %2830 = vrot.lane.b32.xlu0 %v2807, 87
        %v2831 = vpop.permute.xlu0 %2830
        %2832 = vrot.lane.b32.xlu0 %v2808, 87
        %v2833 = vpop.permute.xlu0 %2832
        %v2834 = vsel %vm1511, %v2825, %v2827
        %v2835 = vsel %vm1511, %v2827, %v2829
        %v2836 = vsel %vm1511, %v2829, %v2831
        %v2837 = vsel %vm1511, %v2831, %v2833
        %v2843 = vsel %vm1992, %v2818, 0
        %2845 = vmatprep.subr.bf16.mxu0 %v2835
        %2846 = vmatpush1.bf16.msra.mxu0 %v2834
        %2847 = vmatprep.subr.bf16.mxu0 0
        %2848 = vmatpush1.bf16.msra.mxu0 0
        %2849 = vmatprep.subr.bf16.mxu0 0
        %2850 = vmatpush1.bf16.msra.mxu0 0
        %2851 = vmatprep.subr.bf16.mxu0 0
        %2852 = vmatpush1.bf16.msra.mxu0 0
        %2853 = vmatprep.subr.bf16.mxu0 0
        %2854 = vmatpush1.bf16.msra.mxu0 0
        %2855 = vmatprep.subr.bf16.mxu0 0
        %2856 = vmatpush1.bf16.msra.mxu0 0
        %2857 = vmatprep.subr.bf16.mxu0 0
        %2858 = vmatpush1.bf16.msra.mxu0 0
        %2859 = vmatprep.subr.bf16.mxu0 0
        %2860 = vmatpush1.bf16.msra.mxu0 0
        %2861 = vmatprep.subr.bf16.mxu0 0
        %2862 = vmatpush1.bf16.msra.mxu0 0
        %2863 = vmatprep.subr.bf16.mxu0 0
        %2864 = vmatpush1.bf16.msra.mxu0 0
        %2865 = vmatprep.subr.bf16.mxu0 0
        %2866 = vmatpush1.bf16.msra.mxu0 0
        %2867 = vmatprep.subr.bf16.mxu0 0
        %2868 = vmatpush1.bf16.msra.mxu0 0
        %2869 = vmatprep.subr.bf16.mxu0 0
        %2870 = vmatpush1.bf16.msra.mxu0 0
        %2871 = vmatprep.subr.bf16.mxu0 0
        %2872 = vmatpush1.bf16.msra.mxu0 0
        %2873 = vmatprep.subr.bf16.mxu0 0
        %2874 = vmatpush1.bf16.msra.mxu0 0
        %2875 = vmatprep.subr.bf16.mxu0 0
        %2876 = vmatpush1.bf16.msra.mxu0 0
        %2877 = vmatprep.mubr.bf16.mxu0 0
        %2878 = vmatmul.mubr.bf16.gmra.mrb[0].mxu0 %v2843
        %v2879 = vpop.f32.mrb[0].mxu0
        %v2880 = vadd.f32 0.0, %v2879
        %v2881 = vpop.f32.mrb[0].mxu0
        %v2882 = vadd.f32 0.0, %v2881
        %v2883 = vpop.f32.mrb[0].mxu0
        %v2884 = vpop.f32.mrb[0].mxu0
        %2885 = vdwg.mxu0
        %2886 = vmatprep.subr.bf16.mxu0 %v2837
        %2887 = vmatpush1.bf16.msra.mxu0 %v2836
        %2888 = vmatprep.subr.bf16.mxu0 0
        %2889 = vmatpush1.bf16.msra.mxu0 0
        %2890 = vmatprep.subr.bf16.mxu0 0
        %2891 = vmatpush1.bf16.msra.mxu0 0
        %2892 = vmatprep.subr.bf16.mxu0 0
        %2893 = vmatpush1.bf16.msra.mxu0 0
        %2894 = vmatprep.subr.bf16.mxu0 0
        %2895 = vmatpush1.bf16.msra.mxu0 0
        %2896 = vmatprep.subr.bf16.mxu0 0
        %2897 = vmatpush1.bf16.msra.mxu0 0
        %2898 = vmatprep.subr.bf16.mxu0 0
        %2899 = vmatpush1.bf16.msra.mxu0 0
        %2900 = vmatprep.subr.bf16.mxu0 0
        %2901 = vmatpush1.bf16.msra.mxu0 0
        %2902 = vmatprep.subr.bf16.mxu0 0
        %2903 = vmatpush1.bf16.msra.mxu0 0
        %2904 = vmatprep.subr.bf16.mxu0 0
        %2905 = vmatpush1.bf16.msra.mxu0 0
        %2906 = vmatprep.subr.bf16.mxu0 0
        %2907 = vmatpush1.bf16.msra.mxu0 0
        %2908 = vmatprep.subr.bf16.mxu0 0
        %2909 = vmatpush1.bf16.msra.mxu0 0
        %2910 = vmatprep.subr.bf16.mxu0 0
        %2911 = vmatpush1.bf16.msra.mxu0 0
        %2912 = vmatprep.subr.bf16.mxu0 0
        %2913 = vmatpush1.bf16.msra.mxu0 0
        %2914 = vmatprep.subr.bf16.mxu0 0
        %2915 = vmatpush1.bf16.msra.mxu0 0
        %2916 = vmatprep.subr.bf16.mxu0 0
        %2917 = vmatpush1.bf16.msra.mxu0 0
        %2918 = vmatprep.mubr.bf16.mxu0 0
        %2919 = vmatmul.mubr.bf16.gmra.mrb[0].mxu0 %v2843
        %v2920 = vpop.f32.mrb[0].mxu0
        %v2921 = vadd.f32 0.0, %v2920
        %v2922 = vpop.f32.mrb[0].mxu0
        %v2923 = vadd.f32 0.0, %v2922
        %v2924 = vpop.f32.mrb[0].mxu0
        %v2925 = vpop.f32.mrb[0].mxu0
        %2926 = vdwg.mxu0
        %v2927 = vadd.f32 %v2799, %v2880
        %v2928 = vadd.f32 %v2800, %v2882
        %v2929 = vadd.f32 %v2801, %v2921
        %v2930 = vadd.f32 %v2802, %v2923
        %v2931 = vld [vmem:[%s3 + $0x2] sm:$0x3]
        %v2932 = vld [vmem:[#allocation2] sm:$0xff]
        %v2933 = vld [vmem:[#allocation2 + $0x8] sm:$0xff]
        %v2934 = vld [vmem:[#allocation2 + $0x10] sm:$0xff]
        %v2935 = vld [vmem:[#allocation2 + $0x18] sm:$0xff]
        %v2936 = vld [vmem:[#allocation2 + $0x20] sm:$0xff]
        %2942 = vrot.lane.b32.xlu0 %v2932, 86
        %v2943 = vpop.permute.xlu0 %2942
        %2944 = vrot.lane.b32.xlu0 %v2933, 86
        %v2945 = vpop.permute.xlu0 %2944
        %2946 = vrot.lane.b32.xlu0 %v2934, 86
        %v2947 = vpop.permute.xlu0 %2946
        %2948 = vrot.lane.b32.xlu0 %v2935, 86
        %v2949 = vpop.permute.xlu0 %2948
        %2950 = vrot.lane.b32.xlu0 %v2936, 86
        %v2951 = vpop.permute.xlu0 %2950
        %v2952 = vsel %vm1686, %v2943, %v2945
        %v2953 = vsel %vm1686, %v2945, %v2947
        %v2954 = vsel %vm1686, %v2947, %v2949
        %v2955 = vsel %vm1686, %v2949, %v2951
        %v2961 = vsel %vm1992, %v2931, 0
        %2963 = vmatprep.subr.bf16.mxu0 %v2953
        %2964 = vmatpush1.bf16.msra.mxu0 %v2952
        %2965 = vmatprep.subr.bf16.mxu0 0
        %2966 = vmatpush1.bf16.msra.mxu0 0
        %2967 = vmatprep.subr.bf16.mxu0 0
        %2968 = vmatpush1.bf16.msra.mxu0 0
        %2969 = vmatprep.subr.bf16.mxu0 0
        %2970 = vmatpush1.bf16.msra.mxu0 0
        %2971 = vmatprep.subr.bf16.mxu0 0
        %2972 = vmatpush1.bf16.msra.mxu0 0
        %2973 = vmatprep.subr.bf16.mxu0 0
        %2974 = vmatpush1.bf16.msra.mxu0 0
        %2975 = vmatprep.subr.bf16.mxu0 0
        %2976 = vmatpush1.bf16.msra.mxu0 0
        %2977 = vmatprep.subr.bf16.mxu0 0
        %2978 = vmatpush1.bf16.msra.mxu0 0
        %2979 = vmatprep.subr.bf16.mxu0 0
        %2980 = vmatpush1.bf16.msra.mxu0 0
        %2981 = vmatprep.subr.bf16.mxu0 0
        %2982 = vmatpush1.bf16.msra.mxu0 0
        %2983 = vmatprep.subr.bf16.mxu0 0
        %2984 = vmatpush1.bf16.msra.mxu0 0
        %2985 = vmatprep.subr.bf16.mxu0 0
        %2986 = vmatpush1.bf16.msra.mxu0 0
        %2987 = vmatprep.subr.bf16.mxu0 0
        %2988 = vmatpush1.bf16.msra.mxu0 0
        %2989 = vmatprep.subr.bf16.mxu0 0
        %2990 = vmatpush1.bf16.msra.mxu0 0
        %2991 = vmatprep.subr.bf16.mxu0 0
        %2992 = vmatpush1.bf16.msra.mxu0 0
        %2993 = vmatprep.subr.bf16.mxu0 0
        %2994 = vmatpush1.bf16.msra.mxu0 0
        %2995 = vmatprep.mubr.bf16.mxu0 0
        %2996 = vmatmul.mubr.bf16.gmra.mrb[0].mxu0 %v2961
        %v2997 = vpop.f32.mrb[0].mxu0
        %v2998 = vadd.f32 0.0, %v2997
        %v2999 = vpop.f32.mrb[0].mxu0
        %v3000 = vadd.f32 0.0, %v2999
        %v3001 = vpop.f32.mrb[0].mxu0
        %v3002 = vpop.f32.mrb[0].mxu0
        %3003 = vdwg.mxu0
        %3004 = vmatprep.subr.bf16.mxu0 %v2955
        %3005 = vmatpush1.bf16.msra.mxu0 %v2954
        %3006 = vmatprep.subr.bf16.mxu0 0
        %3007 = vmatpush1.bf16.msra.mxu0 0
        %3008 = vmatprep.subr.bf16.mxu0 0
        %3009 = vmatpush1.bf16.msra.mxu0 0
        %3010 = vmatprep.subr.bf16.mxu0 0
        %3011 = vmatpush1.bf16.msra.mxu0 0
        %3012 = vmatprep.subr.bf16.mxu0 0
        %3013 = vmatpush1.bf16.msra.mxu0 0
        %3014 = vmatprep.subr.bf16.mxu0 0
        %3015 = vmatpush1.bf16.msra.mxu0 0
        %3016 = vmatprep.subr.bf16.mxu0 0
        %3017 = vmatpush1.bf16.msra.mxu0 0
        %3018 = vmatprep.subr.bf16.mxu0 0
        %3019 = vmatpush1.bf16.msra.mxu0 0
        %3020 = vmatprep.subr.bf16.mxu0 0
        %3021 = vmatpush1.bf16.msra.mxu0 0
        %3022 = vmatprep.subr.bf16.mxu0 0
        %3023 = vmatpush1.bf16.msra.mxu0 0
        %3024 = vmatprep.subr.bf16.mxu0 0
        %3025 = vmatpush1.bf16.msra.mxu0 0
        %3026 = vmatprep.subr.bf16.mxu0 0
        %3027 = vmatpush1.bf16.msra.mxu0 0
        %3028 = vmatprep.subr.bf16.mxu0 0
        %3029 = vmatpush1.bf16.msra.mxu0 0
        %3030 = vmatprep.subr.bf16.mxu0 0
        %3031 = vmatpush1.bf16.msra.mxu0 0
        %3032 = vmatprep.subr.bf16.mxu0 0
        %3033 = vmatpush1.bf16.msra.mxu0 0
        %3034 = vmatprep.subr.bf16.mxu0 0
        %3035 = vmatpush1.bf16.msra.mxu0 0
        %3036 = vmatprep.mubr.bf16.mxu0 0
        %3037 = vmatmul.mubr.bf16.gmra.mrb[0].mxu0 %v2961
        %v3038 = vpop.f32.mrb[0].mxu0
        %v3039 = vadd.f32 0.0, %v3038
        %v3040 = vpop.f32.mrb[0].mxu0
        %v3041 = vadd.f32 0.0, %v3040
        %v3042 = vpop.f32.mrb[0].mxu0
        %v3043 = vpop.f32.mrb[0].mxu0
        %3044 = vdwg.mxu0
        %v3045 = vadd.f32 %v2927, %v2998
        %v3046 = vadd.f32 %v2928, %v3000
        %v3047 = vadd.f32 %v2929, %v3039
        %v3048 = vadd.f32 %v2930, %v3041
        %v3049 = vld [vmem:[%s4] sm:$0xf]
        %3051 = vset.pattern.permute.xlu0 0
        %3052 = vperm.xlu0 %3051, %v3049
        %v3053 = vpop.permute.xlu0 %3052
        %v3055 = vadd.f32 %v3045, %v3053
        %v3056 = vadd.f32 %v3046, %v3053
        %v3057 = vadd.f32 %v3047, %v3053
        %v3058 = vadd.f32 %v3048, %v3053
        %v3059 = vmax.f32 %v3055, 0.0
        %v3060 = vmax.f32 %v3056, 0.0
        %v3061 = vmax.f32 %v3057, 0.0
        %v3062 = vmax.f32 %v3058, 0.0
        %v3067 = vcombine.low %v3059, %v3060
        %v3068 = vcombine.low %v3061, %v3062
        %3071 = vst [vmem:[%s267] sm:$0xff] %v3067
        %3072 = vst [vmem:[%s267 + $0x8] sm:$0xff] %v3068
        %s3073 = sand.u32 %s162, 1
        %s3074 = scalar_lea.sflag [#allocation5], %s3073
        %s3075 = sand.u32 %s162, 1
        %s3076 = smul.addr %s3075, 16
        %s3077 = scalar_lea.vmem [#allocation6], %s3076
        // Predicated region
        $region49: #{tpu_custom_call.1} parent=43 // pred_check
          %p3078 = pneg %p172
        $region50: #{tpu_custom_call.1} parent=43 // pred_check_branch
          %3080 = sbr.rel (%p3078) target = $region52
        $region51: #{tpu_custom_call.1} parent=43 // pred_region
          %s3082 = ssub.s32 256, 256
          %3083 = vsyncadd %s3074, %s3082
          %s3084 = smul.addr %s23, 4
          %s3085 = smul.addr %s3084, 64
          %s3086 = scalar_lea.hbm %s6, %s3085
          %s3088 = sshll.u32 %s3077, 4
          %s3089 = int_to_ptr.vmem [resolvable:$true] %s3088
          %3091 = dma.vmem_to_hbm [thread:$0]  %s3089, 256, %s3086, %s3074
        $region52: #{tpu_custom_call.1} parent=43 // pred_fallthru
          _
      $region44: #{tpu_custom_call.1} parent=5 // pred_fallthru
        _
      %p3092 = scmp.le.s32.totalorder 2, %s18
      // Predicated region
      $region53: #{tpu_custom_call.1} parent=5 // pred_check
        %p3093 = pneg %p3092
      $region54: #{tpu_custom_call.1} parent=5 // pred_check_branch
        %3095 = sbr.rel (%p3093) target = $region56
      $region55: #{tpu_custom_call.1} parent=5 // pred_region
        %s3096 = ssub.s32 %s18, 2
        // Predicated region
        $region57: #{tpu_custom_call.1} parent=55 // pred_check
          %p3097 = pneg %p178
        $region58: #{tpu_custom_call.1} parent=55 // pred_check_branch
          %3099 = sbr.rel (%p3097) target = $region60
        $region59: #{tpu_custom_call.1} parent=55 // pred_region
          %s3100 = sand.u32 %s163, 1
          %s3101 = scalar_lea.sflag [#allocation5], %s3100
          %s3102 = sand.u32 %s163, 1
          %s3103 = smul.addr %s3102, 16
          %s3104 = scalar_lea.vmem [#allocation6], %s3103
          %3105 = dma.done %s3101, 256
        $region60: #{tpu_custom_call.1} parent=55 // pred_fallthru
          _
      $region56: #{tpu_custom_call.1} parent=5 // pred_fallthru
        _
    $region6: #{tpu_custom_call.1} parent=1 // loop_footer
      %s22 = sadd.s32 1, %s18
    $region7: #{tpu_custom_call.1} parent=1 // loop_footer_branch
      %17 = sbr.rel target = $region3
    $region8: #{tpu_custom_call.1} parent=1 // loop_exit
      _
    %3106 = vsyncpa [#allocation4], 1
    %s3107 = scalar_lea.sflag [#allocation4], 1
    %3108 = vsyncpa %s3107, 1
    %3109 = vsyncpa [#allocation5], 1
    %s3110 = scalar_lea.sflag [#allocation5], 1
    %3111 = vsyncpa %s3110, 1

</llo_original>
